<compile_context>
chip_gen: v5e
topology: v5e:2x2
jax: 0.10.0
libtpu: 0.0.40
codegen_flags: <defaults>
</compile_context>

<pallas_src>
import functools

import jax
import jax.numpy as jnp
from jax.experimental import pallas as pl
from jax.experimental.pallas import tpu as pltpu  # noqa: F401  (TPU backend)


# ---------------------------------------------------------------------------
# Fused kernel: L stacked LSTM layers + final Linear, single invocation.
# ---------------------------------------------------------------------------
def _lstm_model_kernel(*refs, num_layers, seq_len, hidden_size, batch):
    """refs = [x, (w_ih, w_hh, b) * L, w_fc, b_fc, out].

    x      : (S*Bp, I)   time-major, batch-padded, pre-flattened, bf16
    w_ih   : (I_l, 4H)   pre-transposed input weights of layer l, bf16
    w_hh   : (H, 4H)     pre-transposed hidden weights of layer l, bf16
    b      : (1, 4H)     b_ih + b_hh of layer l, f32
    w_fc   : (H, O)      pre-transposed fc weight, bf16
    b_fc   : (1, O)      f32
    out    : (Bp, O)     f32
    """
    S, H, L, Bp = seq_len, hidden_size, num_layers, batch
    x_ref = refs[0]
    layer_refs = [refs[1 + 3 * l: 4 + 3 * l] for l in range(L)]
    w_fc_ref = refs[1 + 3 * L]
    b_fc_ref = refs[2 + 3 * L]
    out_ref = refs[3 + 3 * L]

    def fsig(v):
        # sigmoid(x) == 0.5*tanh(0.5*x) + 0.5 : one EUP op + one VPU FMA.
        return 0.5 * jnp.tanh(0.5 * v) + 0.5

    def cell(gates, c):
        # H == 128 -> each gate slice is a full, lane-aligned 128-wide vreg.
        i_g = fsig(gates[:, 0 * H:1 * H])
        f_g = fsig(gates[:, 1 * H:2 * H])
        g_g = jnp.tanh(gates[:, 2 * H:3 * H])
        o_g = fsig(gates[:, 3 * H:4 * H])
        c = f_g * c + i_g * g_g
        return o_g * jnp.tanh(c), c

    # Layer-0 input projection for every timestep at once (one MXU matmul,
    # off the recurrent critical path), fused bias add.
    w_ih0_ref, w_hh0_ref, b0_ref = layer_refs[0]
    xg0 = (jnp.dot(x_ref[...], w_ih0_ref[...],
                   preferred_element_type=jnp.float32)
           + b0_ref[...])                                    # (S*Bp, 4H) f32

    # VMEM-resident bf16 weights / f32 biases for every layer.
    w_hh = [layer_refs[l][1][...] for l in range(L)]          # (H, 4H) bf16
    w_ih = [None] + [layer_refs[l][0][...] for l in range(1, L)]
    b_l = [None] + [layer_refs[l][2][...] for l in range(1, L)]

    h = [jnp.zeros((Bp, H), jnp.float32) for _ in range(L)]
    c = [jnp.zeros((Bp, H), jnp.float32) for _ in range(L)]

    # Wavefront schedule: step t of layer l depends only on step t of layer
    # l-1 and step t-1 of layer l.  Fully unrolled (S, L small & static).
    for t in range(S):
        for l in range(L):
            if l == 0:
                xg = xg0[t * Bp:(t + 1) * Bp, :]              # static, aligned
            else:
                xg = (jnp.dot(h[l - 1].astype(jnp.bfloat16), w_ih[l],
                              preferred_element_type=jnp.float32)
                      + b_l[l])
            gates = xg + jnp.dot(h[l].astype(jnp.bfloat16), w_hh[l],
                                 preferred_element_type=jnp.float32)
            h[l], c[l] = cell(gates, c[l])

    # NOTE: nn.LSTM inter-layer dropout is train-mode only -> no-op here.

    # Final Linear on the last timestep's hidden state of the top layer.
    out_ref[...] = (jnp.dot(h[L - 1].astype(jnp.bfloat16), w_fc_ref[...],
                            preferred_element_type=jnp.float32)
                    + b_fc_ref[...])


# ---------------------------------------------------------------------------
# Wrappers
# ---------------------------------------------------------------------------
def prepare_params(lstm_params, w_fc, b_fc):
    """One-time prep: transpose weights, cast to bf16, fuse the LSTM biases."""
    prepped = []
    for (w_ih, w_hh, b_ih, b_hh) in lstm_params:
        prepped.append(jnp.transpose(w_ih).astype(jnp.bfloat16))   # (in, 4H)
        prepped.append(jnp.transpose(w_hh).astype(jnp.bfloat16))   # (H, 4H)
        prepped.append((b_ih + b_hh).reshape(1, -1).astype(jnp.float32))
    prepped.append(jnp.transpose(w_fc).astype(jnp.bfloat16))       # (H, O)
    prepped.append(b_fc.reshape(1, -1).astype(jnp.float32))        # (1, O)
    return tuple(prepped)


@functools.partial(jax.jit, static_argnames=("hidden_size",))
def lstm_model_forward(x, params, hidden_size):
    """x: (B, S, I) batch-first, exactly like the PyTorch module."""
    B, S, I = x.shape
    L = (len(params) - 2) // 3
    O = params[-1].shape[-1]

    # Pad batch to one full f32 sublane tile (free compute-wise at B=2),
    # go time-major and pre-flatten so the kernel never reshapes.
    Bp = max(8, ((B + 7) // 8) * 8)
    x_p = jnp.pad(x, ((0, Bp - B), (0, 0), (0, 0)))
    x_flat = (jnp.transpose(x_p, (1, 0, 2))                 # (S, Bp, I)
              .reshape(S * Bp, I)
              .astype(jnp.bfloat16))                        # bf16 MXU LHS

    kernel = functools.partial(_lstm_model_kernel,
                               num_layers=L, seq_len=S,
                               hidden_size=hidden_size, batch=Bp)
    # No grid: inputs, weights and intermediates all fit VMEM (<1 MiB); one
    # kernel invocation does both LSTM layers and the fc.
    out_p = pl.pallas_call(
        kernel,
        out_shape=jax.ShapeDtypeStruct((Bp, O), jnp.float32),
    )(x_flat, *params)
    return out_p[:B]


# ---------------------------------------------------------------------------
# Pure-JAX reference (f32, exact sigmoid) for sanity check
# ---------------------------------------------------------------------------
def lstm_model_ref(x, lstm_params, w_fc, b_fc):
    h_seq = x
    for (w_ih, w_hh, b_ih, b_hh) in lstm_params:
        B = h_seq.shape[0]
        H = w_hh.shape[1]

        def step(carry, x_t):
            h, c = carry
            g = x_t @ w_ih.T + h @ w_hh.T + b_ih + b_hh
            i, f, gg, o = jnp.split(g, 4, axis=-1)
            c = jax.nn.sigmoid(f) * c + jax.nn.sigmoid(i) * jnp.tanh(gg)
            h = jax.nn.sigmoid(o) * jnp.tanh(c)
            return (h, c), h

        h0 = jnp.zeros((B, H), jnp.float32)
        c0 = jnp.zeros((B, H), jnp.float32)
        _, hs = jax.lax.scan(step, (h0, c0), jnp.swapaxes(h_seq, 0, 1))
        h_seq = jnp.swapaxes(hs, 0, 1)
    return h_seq[:, -1, :] @ w_fc.T + b_fc


# ---------------------------------------------------------------------------
# Main
# ---------------------------------------------------------------------------
if __name__ == "__main__":
    # batch, seq, input, hidden, output, layers (hidden=128 per the module spec)
    B, S, I, H, O, L = 2, 8, 16, 128, 4, 2
    key = jax.random.PRNGKey(0)
    bound = 1.0 / jnp.sqrt(jnp.float32(H))  # PyTorch default LSTM/Linear init

    keys = jax.random.split(key, 4 * L + 3)
    lstm_params = []
    k_idx = 0
    for layer in range(L):
        in_dim = I if layer == 0 else H
        w_ih = jax.random.uniform(keys[k_idx + 0], (4 * H, in_dim),
                                  jnp.float32, -bound, bound)
        w_hh = jax.random.uniform(keys[k_idx + 1], (4 * H, H),
                                  jnp.float32, -bound, bound)
        b_ih = jax.random.uniform(keys[k_idx + 2], (4 * H,),
                                  jnp.float32, -bound, bound)
        b_hh = jax.random.uniform(keys[k_idx + 3], (4 * H,),
                                  jnp.float32, -bound, bound)
        lstm_params.append((w_ih, w_hh, b_ih, b_hh))
        k_idx += 4

    w_fc = jax.random.uniform(keys[k_idx + 0], (O, H), jnp.float32, -bound, bound)
    b_fc = jax.random.uniform(keys[k_idx + 1], (O,), jnp.float32, -bound, bound)
    x = jax.random.normal(keys[k_idx + 2], (B, S, I), jnp.float32)

    params = prepare_params(lstm_params, w_fc, b_fc)      # one-time prep
    out = lstm_model_forward(x, params, H)
    out = jax.block_until_ready(out)

    ref = lstm_model_ref(x, lstm_params, w_fc, b_fc)
    assert out.shape == (B, O)
    assert jnp.allclose(out, ref, rtol=1e-2, atol=1e-2), "mismatch vs JAX reference"

    print("KERNEL_OK")
</pallas_src>

<mosaic_0001>
module attributes {stable_mosaic.version = 11 : i64} {
  func.func @_lstm_model_kernel(%arg0: memref<64x16xbf16, #tpu.memory_space<vmem>>, %arg1: memref<16x512xbf16, #tpu.memory_space<vmem>>, %arg2: memref<128x512xbf16, #tpu.memory_space<vmem>>, %arg3: memref<1x512xf32, #tpu.memory_space<vmem>>, %arg4: memref<128x512xbf16, #tpu.memory_space<vmem>>, %arg5: memref<128x512xbf16, #tpu.memory_space<vmem>>, %arg6: memref<1x512xf32, #tpu.memory_space<vmem>>, %arg7: memref<128x4xbf16, #tpu.memory_space<vmem>>, %arg8: memref<1x4xf32, #tpu.memory_space<vmem>>, %arg9: memref<8x4xf32, #tpu.memory_space<vmem>>) attributes {dimension_semantics = [], scalar_prefetch = 0 : i64, scratch_operands = 0 : i64, tpu.core_type = #tpu.core_type<tc>} {
    %c0 = arith.constant 0 : index
    %c0_0 = arith.constant 0 : index
    %0 = vector.load %arg0[%c0, %c0_0] : memref<64x16xbf16, #tpu.memory_space<vmem>>, vector<64x16xbf16>
    %c0_1 = arith.constant 0 : index
    %c0_2 = arith.constant 0 : index
    %1 = vector.load %arg1[%c0_1, %c0_2] : memref<16x512xbf16, #tpu.memory_space<vmem>>, vector<16x512xbf16>
    %cst = arith.constant dense<0.000000e+00> : vector<64x512xf32>
    %2 = tpu.matmul %0, %1, %cst {dimension_numbers = #tpu.dot_dimension_numbers<[1], [0], [0], [1], [0, 0, 1, 1], [], []>} : vector<64x16xbf16>, vector<16x512xbf16>, vector<64x512xf32> -> vector<64x512xf32>
    %c0_3 = arith.constant 0 : index
    %c0_4 = arith.constant 0 : index
    %3 = vector.load %arg3[%c0_3, %c0_4] : memref<1x512xf32, #tpu.memory_space<vmem>>, vector<1x512xf32>
    %4 = vector.broadcast %3 : vector<1x512xf32> to vector<64x512xf32>
    %5 = arith.addf %2, %4 : vector<64x512xf32>
    %c0_5 = arith.constant 0 : index
    %c0_6 = arith.constant 0 : index
    %6 = vector.load %arg2[%c0_5, %c0_6] : memref<128x512xbf16, #tpu.memory_space<vmem>>, vector<128x512xbf16>
    %c0_7 = arith.constant 0 : index
    %c0_8 = arith.constant 0 : index
    %7 = vector.load %arg5[%c0_7, %c0_8] : memref<128x512xbf16, #tpu.memory_space<vmem>>, vector<128x512xbf16>
    %c0_9 = arith.constant 0 : index
    %c0_10 = arith.constant 0 : index
    %8 = vector.load %arg4[%c0_9, %c0_10] : memref<128x512xbf16, #tpu.memory_space<vmem>>, vector<128x512xbf16>
    %c0_11 = arith.constant 0 : index
    %c0_12 = arith.constant 0 : index
    %9 = vector.load %arg6[%c0_11, %c0_12] : memref<1x512xf32, #tpu.memory_space<vmem>>, vector<1x512xf32>
    %cst_13 = arith.constant 0.000000e+00 : f32
    %10 = vector.broadcast %cst_13 : f32 to vector<8x128xf32>
    %cst_14 = arith.constant 0.000000e+00 : f32
    %11 = vector.broadcast %cst_14 : f32 to vector<8x128xf32>
    %cst_15 = arith.constant 0.000000e+00 : f32
    %12 = vector.broadcast %cst_15 : f32 to vector<8x128xf32>
    %cst_16 = arith.constant 0.000000e+00 : f32
    %13 = vector.broadcast %cst_16 : f32 to vector<8x128xf32>
    %14 = vector.extract_strided_slice %5 {offsets = [0, 0], sizes = [8, 512], strides = [1, 1]} : vector<64x512xf32> to vector<8x512xf32>
    %15 = arith.truncf %10 : vector<8x128xf32> to vector<8x128xbf16>
    %cst_17 = arith.constant dense<0.000000e+00> : vector<8x512xf32>
    %16 = tpu.matmul %15, %6, %cst_17 {dimension_numbers = #tpu.dot_dimension_numbers<[1], [0], [0], [1], [0, 0, 1, 1], [], []>} : vector<8x128xbf16>, vector<128x512xbf16>, vector<8x512xf32> -> vector<8x512xf32>
    %17 = arith.addf %14, %16 : vector<8x512xf32>
    %18 = vector.extract_strided_slice %17 {offsets = [0, 0], sizes = [8, 128], strides = [1, 1]} : vector<8x512xf32> to vector<8x128xf32>
    %cst_18 = arith.constant 5.000000e-01 : f32
    %19 = vector.broadcast %cst_18 : f32 to vector<8x128xf32>
    %20 = arith.mulf %19, %18 : vector<8x128xf32>
    %21 = math.tanh %20 : vector<8x128xf32>
    %cst_19 = arith.constant 5.000000e-01 : f32
    %22 = vector.broadcast %cst_19 : f32 to vector<8x128xf32>
    %23 = arith.mulf %22, %21 : vector<8x128xf32>
    %cst_20 = arith.constant 5.000000e-01 : f32
    %24 = vector.broadcast %cst_20 : f32 to vector<8x128xf32>
    %25 = arith.addf %23, %24 : vector<8x128xf32>
    %26 = vector.extract_strided_slice %17 {offsets = [0, 128], sizes = [8, 128], strides = [1, 1]} : vector<8x512xf32> to vector<8x128xf32>
    %cst_21 = arith.constant 5.000000e-01 : f32
    %27 = vector.broadcast %cst_21 : f32 to vector<8x128xf32>
    %28 = arith.mulf %27, %26 : vector<8x128xf32>
    %29 = math.tanh %28 : vector<8x128xf32>
    %cst_22 = arith.constant 5.000000e-01 : f32
    %30 = vector.broadcast %cst_22 : f32 to vector<8x128xf32>
    %31 = arith.mulf %30, %29 : vector<8x128xf32>
    %cst_23 = arith.constant 5.000000e-01 : f32
    %32 = vector.broadcast %cst_23 : f32 to vector<8x128xf32>
    %33 = arith.addf %31, %32 : vector<8x128xf32>
    %34 = vector.extract_strided_slice %17 {offsets = [0, 256], sizes = [8, 128], strides = [1, 1]} : vector<8x512xf32> to vector<8x128xf32>
    %35 = math.tanh %34 : vector<8x128xf32>
    %36 = vector.extract_strided_slice %17 {offsets = [0, 384], sizes = [8, 128], strides = [1, 1]} : vector<8x512xf32> to vector<8x128xf32>
    %cst_24 = arith.constant 5.000000e-01 : f32
    %37 = vector.broadcast %cst_24 : f32 to vector<8x128xf32>
    %38 = arith.mulf %37, %36 : vector<8x128xf32>
    %39 = math.tanh %38 : vector<8x128xf32>
    %cst_25 = arith.constant 5.000000e-01 : f32
    %40 = vector.broadcast %cst_25 : f32 to vector<8x128xf32>
    %41 = arith.mulf %40, %39 : vector<8x128xf32>
    %cst_26 = arith.constant 5.000000e-01 : f32
    %42 = vector.broadcast %cst_26 : f32 to vector<8x128xf32>
    %43 = arith.addf %41, %42 : vector<8x128xf32>
    %44 = arith.mulf %33, %12 : vector<8x128xf32>
    %45 = arith.mulf %25, %35 : vector<8x128xf32>
    %46 = arith.addf %44, %45 : vector<8x128xf32>
    %47 = math.tanh %46 : vector<8x128xf32>
    %48 = arith.mulf %43, %47 : vector<8x128xf32>
    %49 = arith.truncf %48 : vector<8x128xf32> to vector<8x128xbf16>
    %cst_27 = arith.constant dense<0.000000e+00> : vector<8x512xf32>
    %50 = tpu.matmul %49, %8, %cst_27 {dimension_numbers = #tpu.dot_dimension_numbers<[1], [0], [0], [1], [0, 0, 1, 1], [], []>} : vector<8x128xbf16>, vector<128x512xbf16>, vector<8x512xf32> -> vector<8x512xf32>
    %51 = vector.broadcast %9 : vector<1x512xf32> to vector<8x512xf32>
    %52 = arith.addf %50, %51 : vector<8x512xf32>
    %53 = arith.truncf %11 : vector<8x128xf32> to vector<8x128xbf16>
    %cst_28 = arith.constant dense<0.000000e+00> : vector<8x512xf32>
    %54 = tpu.matmul %53, %7, %cst_28 {dimension_numbers = #tpu.dot_dimension_numbers<[1], [0], [0], [1], [0, 0, 1, 1], [], []>} : vector<8x128xbf16>, vector<128x512xbf16>, vector<8x512xf32> -> vector<8x512xf32>
    %55 = arith.addf %52, %54 : vector<8x512xf32>
    %56 = vector.extract_strided_slice %55 {offsets = [0, 0], sizes = [8, 128], strides = [1, 1]} : vector<8x512xf32> to vector<8x128xf32>
    %cst_29 = arith.constant 5.000000e-01 : f32
    %57 = vector.broadcast %cst_29 : f32 to vector<8x128xf32>
    %58 = arith.mulf %57, %56 : vector<8x128xf32>
    %59 = math.tanh %58 : vector<8x128xf32>
    %cst_30 = arith.constant 5.000000e-01 : f32
    %60 = vector.broadcast %cst_30 : f32 to vector<8x128xf32>
    %61 = arith.mulf %60, %59 : vector<8x128xf32>
    %cst_31 = arith.constant 5.000000e-01 : f32
    %62 = vector.broadcast %cst_31 : f32 to vector<8x128xf32>
    %63 = arith.addf %61, %62 : vector<8x128xf32>
    %64 = vector.extract_strided_slice %55 {offsets = [0, 128], sizes = [8, 128], strides = [1, 1]} : vector<8x512xf32> to vector<8x128xf32>
    %cst_32 = arith.constant 5.000000e-01 : f32
    %65 = vector.broadcast %cst_32 : f32 to vector<8x128xf32>
    %66 = arith.mulf %65, %64 : vector<8x128xf32>
    %67 = math.tanh %66 : vector<8x128xf32>
    %cst_33 = arith.constant 5.000000e-01 : f32
    %68 = vector.broadcast %cst_33 : f32 to vector<8x128xf32>
    %69 = arith.mulf %68, %67 : vector<8x128xf32>
    %cst_34 = arith.constant 5.000000e-01 : f32
    %70 = vector.broadcast %cst_34 : f32 to vector<8x128xf32>
    %71 = arith.addf %69, %70 : vector<8x128xf32>
    %72 = vector.extract_strided_slice %55 {offsets = [0, 256], sizes = [8, 128], strides = [1, 1]} : vector<8x512xf32> to vector<8x128xf32>
    %73 = math.tanh %72 : vector<8x128xf32>
    %74 = vector.extract_strided_slice %55 {offsets = [0, 384], sizes = [8, 128], strides = [1, 1]} : vector<8x512xf32> to vector<8x128xf32>
    %cst_35 = arith.constant 5.000000e-01 : f32
    %75 = vector.broadcast %cst_35 : f32 to vector<8x128xf32>
    %76 = arith.mulf %75, %74 : vector<8x128xf32>
    %77 = math.tanh %76 : vector<8x128xf32>
    %cst_36 = arith.constant 5.000000e-01 : f32
    %78 = vector.broadcast %cst_36 : f32 to vector<8x128xf32>
    %79 = arith.mulf %78, %77 : vector<8x128xf32>
    %cst_37 = arith.constant 5.000000e-01 : f32
    %80 = vector.broadcast %cst_37 : f32 to vector<8x128xf32>
    %81 = arith.addf %79, %80 : vector<8x128xf32>
    %82 = arith.mulf %71, %13 : vector<8x128xf32>
    %83 = arith.mulf %63, %73 : vector<8x128xf32>
    %84 = arith.addf %82, %83 : vector<8x128xf32>
    %85 = math.tanh %84 : vector<8x128xf32>
    %86 = arith.mulf %81, %85 : vector<8x128xf32>
    %87 = vector.extract_strided_slice %5 {offsets = [8, 0], sizes = [8, 512], strides = [1, 1]} : vector<64x512xf32> to vector<8x512xf32>
    %88 = arith.truncf %48 : vector<8x128xf32> to vector<8x128xbf16>
    %cst_38 = arith.constant dense<0.000000e+00> : vector<8x512xf32>
    %89 = tpu.matmul %88, %6, %cst_38 {dimension_numbers = #tpu.dot_dimension_numbers<[1], [0], [0], [1], [0, 0, 1, 1], [], []>} : vector<8x128xbf16>, vector<128x512xbf16>, vector<8x512xf32> -> vector<8x512xf32>
    %90 = arith.addf %87, %89 : vector<8x512xf32>
    %91 = vector.extract_strided_slice %90 {offsets = [0, 0], sizes = [8, 128], strides = [1, 1]} : vector<8x512xf32> to vector<8x128xf32>
    %cst_39 = arith.constant 5.000000e-01 : f32
    %92 = vector.broadcast %cst_39 : f32 to vector<8x128xf32>
    %93 = arith.mulf %92, %91 : vector<8x128xf32>
    %94 = math.tanh %93 : vector<8x128xf32>
    %cst_40 = arith.constant 5.000000e-01 : f32
    %95 = vector.broadcast %cst_40 : f32 to vector<8x128xf32>
    %96 = arith.mulf %95, %94 : vector<8x128xf32>
    %cst_41 = arith.constant 5.000000e-01 : f32
    %97 = vector.broadcast %cst_41 : f32 to vector<8x128xf32>
    %98 = arith.addf %96, %97 : vector<8x128xf32>
    %99 = vector.extract_strided_slice %90 {offsets = [0, 128], sizes = [8, 128], strides = [1, 1]} : vector<8x512xf32> to vector<8x128xf32>
    %cst_42 = arith.constant 5.000000e-01 : f32
    %100 = vector.broadcast %cst_42 : f32 to vector<8x128xf32>
    %101 = arith.mulf %100, %99 : vector<8x128xf32>
    %102 = math.tanh %101 : vector<8x128xf32>
    %cst_43 = arith.constant 5.000000e-01 : f32
    %103 = vector.broadcast %cst_43 : f32 to vector<8x128xf32>
    %104 = arith.mulf %103, %102 : vector<8x128xf32>
    %cst_44 = arith.constant 5.000000e-01 : f32
    %105 = vector.broadcast %cst_44 : f32 to vector<8x128xf32>
    %106 = arith.addf %104, %105 : vector<8x128xf32>
    %107 = vector.extract_strided_slice %90 {offsets = [0, 256], sizes = [8, 128], strides = [1, 1]} : vector<8x512xf32> to vector<8x128xf32>
    %108 = math.tanh %107 : vector<8x128xf32>
    %109 = vector.extract_strided_slice %90 {offsets = [0, 384], sizes = [8, 128], strides = [1, 1]} : vector<8x512xf32> to vector<8x128xf32>
    %cst_45 = arith.constant 5.000000e-01 : f32
    %110 = vector.broadcast %cst_45 : f32 to vector<8x128xf32>
    %111 = arith.mulf %110, %109 : vector<8x128xf32>
    %112 = math.tanh %111 : vector<8x128xf32>
    %cst_46 = arith.constant 5.000000e-01 : f32
    %113 = vector.broadcast %cst_46 : f32 to vector<8x128xf32>
    %114 = arith.mulf %113, %112 : vector<8x128xf32>
    %cst_47 = arith.constant 5.000000e-01 : f32
    %115 = vector.broadcast %cst_47 : f32 to vector<8x128xf32>
    %116 = arith.addf %114, %115 : vector<8x128xf32>
    %117 = arith.mulf %106, %46 : vector<8x128xf32>
    %118 = arith.mulf %98, %108 : vector<8x128xf32>
    %119 = arith.addf %117, %118 : vector<8x128xf32>
    %120 = math.tanh %119 : vector<8x128xf32>
    %121 = arith.mulf %116, %120 : vector<8x128xf32>
    %122 = arith.truncf %121 : vector<8x128xf32> to vector<8x128xbf16>
    %cst_48 = arith.constant dense<0.000000e+00> : vector<8x512xf32>
    %123 = tpu.matmul %122, %8, %cst_48 {dimension_numbers = #tpu.dot_dimension_numbers<[1], [0], [0], [1], [0, 0, 1, 1], [], []>} : vector<8x128xbf16>, vector<128x512xbf16>, vector<8x512xf32> -> vector<8x512xf32>
    %124 = vector.broadcast %9 : vector<1x512xf32> to vector<8x512xf32>
    %125 = arith.addf %123, %124 : vector<8x512xf32>
    %126 = arith.truncf %86 : vector<8x128xf32> to vector<8x128xbf16>
    %cst_49 = arith.constant dense<0.000000e+00> : vector<8x512xf32>
    %127 = tpu.matmul %126, %7, %cst_49 {dimension_numbers = #tpu.dot_dimension_numbers<[1], [0], [0], [1], [0, 0, 1, 1], [], []>} : vector<8x128xbf16>, vector<128x512xbf16>, vector<8x512xf32> -> vector<8x512xf32>
    %128 = arith.addf %125, %127 : vector<8x512xf32>
    %129 = vector.extract_strided_slice %128 {offsets = [0, 0], sizes = [8, 128], strides = [1, 1]} : vector<8x512xf32> to vector<8x128xf32>
    %cst_50 = arith.constant 5.000000e-01 : f32
    %130 = vector.broadcast %cst_50 : f32 to vector<8x128xf32>
    %131 = arith.mulf %130, %129 : vector<8x128xf32>
    %132 = math.tanh %131 : vector<8x128xf32>
    %cst_51 = arith.constant 5.000000e-01 : f32
    %133 = vector.broadcast %cst_51 : f32 to vector<8x128xf32>
    %134 = arith.mulf %133, %132 : vector<8x128xf32>
    %cst_52 = arith.constant 5.000000e-01 : f32
    %135 = vector.broadcast %cst_52 : f32 to vector<8x128xf32>
    %136 = arith.addf %134, %135 : vector<8x128xf32>
    %137 = vector.extract_strided_slice %128 {offsets = [0, 128], sizes = [8, 128], strides = [1, 1]} : vector<8x512xf32> to vector<8x128xf32>
    %cst_53 = arith.constant 5.000000e-01 : f32
    %138 = vector.broadcast %cst_53 : f32 to vector<8x128xf32>
    %139 = arith.mulf %138, %137 : vector<8x128xf32>
    %140 = math.tanh %139 : vector<8x128xf32>
    %cst_54 = arith.constant 5.000000e-01 : f32
    %141 = vector.broadcast %cst_54 : f32 to vector<8x128xf32>
    %142 = arith.mulf %141, %140 : vector<8x128xf32>
    %cst_55 = arith.constant 5.000000e-01 : f32
    %143 = vector.broadcast %cst_55 : f32 to vector<8x128xf32>
    %144 = arith.addf %142, %143 : vector<8x128xf32>
    %145 = vector.extract_strided_slice %128 {offsets = [0, 256], sizes = [8, 128], strides = [1, 1]} : vector<8x512xf32> to vector<8x128xf32>
    %146 = math.tanh %145 : vector<8x128xf32>
    %147 = vector.extract_strided_slice %128 {offsets = [0, 384], sizes = [8, 128], strides = [1, 1]} : vector<8x512xf32> to vector<8x128xf32>
    %cst_56 = arith.constant 5.000000e-01 : f32
    %148 = vector.broadcast %cst_56 : f32 to vector<8x128xf32>
    %149 = arith.mulf %148, %147 : vector<8x128xf32>
    %150 = math.tanh %149 : vector<8x128xf32>
    %cst_57 = arith.constant 5.000000e-01 : f32
    %151 = vector.broadcast %cst_57 : f32 to vector<8x128xf32>
    %152 = arith.mulf %151, %150 : vector<8x128xf32>
    %cst_58 = arith.constant 5.000000e-01 : f32
    %153 = vector.broadcast %cst_58 : f32 to vector<8x128xf32>
    %154 = arith.addf %152, %153 : vector<8x128xf32>
    %155 = arith.mulf %144, %84 : vector<8x128xf32>
    %156 = arith.mulf %136, %146 : vector<8x128xf32>
    %157 = arith.addf %155, %156 : vector<8x128xf32>
    %158 = math.tanh %157 : vector<8x128xf32>
    %159 = arith.mulf %154, %158 : vector<8x128xf32>
    %160 = vector.extract_strided_slice %5 {offsets = [16, 0], sizes = [8, 512], strides = [1, 1]} : vector<64x512xf32> to vector<8x512xf32>
    %161 = arith.truncf %121 : vector<8x128xf32> to vector<8x128xbf16>
    %cst_59 = arith.constant dense<0.000000e+00> : vector<8x512xf32>
    %162 = tpu.matmul %161, %6, %cst_59 {dimension_numbers = #tpu.dot_dimension_numbers<[1], [0], [0], [1], [0, 0, 1, 1], [], []>} : vector<8x128xbf16>, vector<128x512xbf16>, vector<8x512xf32> -> vector<8x512xf32>
    %163 = arith.addf %160, %162 : vector<8x512xf32>
    %164 = vector.extract_strided_slice %163 {offsets = [0, 0], sizes = [8, 128], strides = [1, 1]} : vector<8x512xf32> to vector<8x128xf32>
    %cst_60 = arith.constant 5.000000e-01 : f32
    %165 = vector.broadcast %cst_60 : f32 to vector<8x128xf32>
    %166 = arith.mulf %165, %164 : vector<8x128xf32>
    %167 = math.tanh %166 : vector<8x128xf32>
    %cst_61 = arith.constant 5.000000e-01 : f32
    %168 = vector.broadcast %cst_61 : f32 to vector<8x128xf32>
    %169 = arith.mulf %168, %167 : vector<8x128xf32>
    %cst_62 = arith.constant 5.000000e-01 : f32
    %170 = vector.broadcast %cst_62 : f32 to vector<8x128xf32>
    %171 = arith.addf %169, %170 : vector<8x128xf32>
    %172 = vector.extract_strided_slice %163 {offsets = [0, 128], sizes = [8, 128], strides = [1, 1]} : vector<8x512xf32> to vector<8x128xf32>
    %cst_63 = arith.constant 5.000000e-01 : f32
    %173 = vector.broadcast %cst_63 : f32 to vector<8x128xf32>
    %174 = arith.mulf %173, %172 : vector<8x128xf32>
    %175 = math.tanh %174 : vector<8x128xf32>
    %cst_64 = arith.constant 5.000000e-01 : f32
    %176 = vector.broadcast %cst_64 : f32 to vector<8x128xf32>
    %177 = arith.mulf %176, %175 : vector<8x128xf32>
    %cst_65 = arith.constant 5.000000e-01 : f32
    %178 = vector.broadcast %cst_65 : f32 to vector<8x128xf32>
    %179 = arith.addf %177, %178 : vector<8x128xf32>
    %180 = vector.extract_strided_slice %163 {offsets = [0, 256], sizes = [8, 128], strides = [1, 1]} : vector<8x512xf32> to vector<8x128xf32>
    %181 = math.tanh %180 : vector<8x128xf32>
    %182 = vector.extract_strided_slice %163 {offsets = [0, 384], sizes = [8, 128], strides = [1, 1]} : vector<8x512xf32> to vector<8x128xf32>
    %cst_66 = arith.constant 5.000000e-01 : f32
    %183 = vector.broadcast %cst_66 : f32 to vector<8x128xf32>
    %184 = arith.mulf %183, %182 : vector<8x128xf32>
    %185 = math.tanh %184 : vector<8x128xf32>
    %cst_67 = arith.constant 5.000000e-01 : f32
    %186 = vector.broadcast %cst_67 : f32 to vector<8x128xf32>
    %187 = arith.mulf %186, %185 : vector<8x128xf32>
    %cst_68 = arith.constant 5.000000e-01 : f32
    %188 = vector.broadcast %cst_68 : f32 to vector<8x128xf32>
    %189 = arith.addf %187, %188 : vector<8x128xf32>
    %190 = arith.mulf %179, %119 : vector<8x128xf32>
    %191 = arith.mulf %171, %181 : vector<8x128xf32>
    %192 = arith.addf %190, %191 : vector<8x128xf32>
    %193 = math.tanh %192 : vector<8x128xf32>
    %194 = arith.mulf %189, %193 : vector<8x128xf32>
    %195 = arith.truncf %194 : vector<8x128xf32> to vector<8x128xbf16>
    %cst_69 = arith.constant dense<0.000000e+00> : vector<8x512xf32>
    %196 = tpu.matmul %195, %8, %cst_69 {dimension_numbers = #tpu.dot_dimension_numbers<[1], [0], [0], [1], [0, 0, 1, 1], [], []>} : vector<8x128xbf16>, vector<128x512xbf16>, vector<8x512xf32> -> vector<8x512xf32>
    %197 = vector.broadcast %9 : vector<1x512xf32> to vector<8x512xf32>
    %198 = arith.addf %196, %197 : vector<8x512xf32>
    %199 = arith.truncf %159 : vector<8x128xf32> to vector<8x128xbf16>
    %cst_70 = arith.constant dense<0.000000e+00> : vector<8x512xf32>
    %200 = tpu.matmul %199, %7, %cst_70 {dimension_numbers = #tpu.dot_dimension_numbers<[1], [0], [0], [1], [0, 0, 1, 1], [], []>} : vector<8x128xbf16>, vector<128x512xbf16>, vector<8x512xf32> -> vector<8x512xf32>
    %201 = arith.addf %198, %200 : vector<8x512xf32>
    %202 = vector.extract_strided_slice %201 {offsets = [0, 0], sizes = [8, 128], strides = [1, 1]} : vector<8x512xf32> to vector<8x128xf32>
    %cst_71 = arith.constant 5.000000e-01 : f32
    %203 = vector.broadcast %cst_71 : f32 to vector<8x128xf32>
    %204 = arith.mulf %203, %202 : vector<8x128xf32>
    %205 = math.tanh %204 : vector<8x128xf32>
    %cst_72 = arith.constant 5.000000e-01 : f32
    %206 = vector.broadcast %cst_72 : f32 to vector<8x128xf32>
    %207 = arith.mulf %206, %205 : vector<8x128xf32>
    %cst_73 = arith.constant 5.000000e-01 : f32
    %208 = vector.broadcast %cst_73 : f32 to vector<8x128xf32>
    %209 = arith.addf %207, %208 : vector<8x128xf32>
    %210 = vector.extract_strided_slice %201 {offsets = [0, 128], sizes = [8, 128], strides = [1, 1]} : vector<8x512xf32> to vector<8x128xf32>
    %cst_74 = arith.constant 5.000000e-01 : f32
    %211 = vector.broadcast %cst_74 : f32 to vector<8x128xf32>
    %212 = arith.mulf %211, %210 : vector<8x128xf32>
    %213 = math.tanh %212 : vector<8x128xf32>
    %cst_75 = arith.constant 5.000000e-01 : f32
    %214 = vector.broadcast %cst_75 : f32 to vector<8x128xf32>
    %215 = arith.mulf %214, %213 : vector<8x128xf32>
    %cst_76 = arith.constant 5.000000e-01 : f32
    %216 = vector.broadcast %cst_76 : f32 to vector<8x128xf32>
    %217 = arith.addf %215, %216 : vector<8x128xf32>
    %218 = vector.extract_strided_slice %201 {offsets = [0, 256], sizes = [8, 128], strides = [1, 1]} : vector<8x512xf32> to vector<8x128xf32>
    %219 = math.tanh %218 : vector<8x128xf32>
    %220 = vector.extract_strided_slice %201 {offsets = [0, 384], sizes = [8, 128], strides = [1, 1]} : vector<8x512xf32> to vector<8x128xf32>
    %cst_77 = arith.constant 5.000000e-01 : f32
    %221 = vector.broadcast %cst_77 : f32 to vector<8x128xf32>
    %222 = arith.mulf %221, %220 : vector<8x128xf32>
    %223 = math.tanh %222 : vector<8x128xf32>
    %cst_78 = arith.constant 5.000000e-01 : f32
    %224 = vector.broadcast %cst_78 : f32 to vector<8x128xf32>
    %225 = arith.mulf %224, %223 : vector<8x128xf32>
    %cst_79 = arith.constant 5.000000e-01 : f32
    %226 = vector.broadcast %cst_79 : f32 to vector<8x128xf32>
    %227 = arith.addf %225, %226 : vector<8x128xf32>
    %228 = arith.mulf %217, %157 : vector<8x128xf32>
    %229 = arith.mulf %209, %219 : vector<8x128xf32>
    %230 = arith.addf %228, %229 : vector<8x128xf32>
    %231 = math.tanh %230 : vector<8x128xf32>
    %232 = arith.mulf %227, %231 : vector<8x128xf32>
    %233 = vector.extract_strided_slice %5 {offsets = [24, 0], sizes = [8, 512], strides = [1, 1]} : vector<64x512xf32> to vector<8x512xf32>
    %234 = arith.truncf %194 : vector<8x128xf32> to vector<8x128xbf16>
    %cst_80 = arith.constant dense<0.000000e+00> : vector<8x512xf32>
    %235 = tpu.matmul %234, %6, %cst_80 {dimension_numbers = #tpu.dot_dimension_numbers<[1], [0], [0], [1], [0, 0, 1, 1], [], []>} : vector<8x128xbf16>, vector<128x512xbf16>, vector<8x512xf32> -> vector<8x512xf32>
    %236 = arith.addf %233, %235 : vector<8x512xf32>
    %237 = vector.extract_strided_slice %236 {offsets = [0, 0], sizes = [8, 128], strides = [1, 1]} : vector<8x512xf32> to vector<8x128xf32>
    %cst_81 = arith.constant 5.000000e-01 : f32
    %238 = vector.broadcast %cst_81 : f32 to vector<8x128xf32>
    %239 = arith.mulf %238, %237 : vector<8x128xf32>
    %240 = math.tanh %239 : vector<8x128xf32>
    %cst_82 = arith.constant 5.000000e-01 : f32
    %241 = vector.broadcast %cst_82 : f32 to vector<8x128xf32>
    %242 = arith.mulf %241, %240 : vector<8x128xf32>
    %cst_83 = arith.constant 5.000000e-01 : f32
    %243 = vector.broadcast %cst_83 : f32 to vector<8x128xf32>
    %244 = arith.addf %242, %243 : vector<8x128xf32>
    %245 = vector.extract_strided_slice %236 {offsets = [0, 128], sizes = [8, 128], strides = [1, 1]} : vector<8x512xf32> to vector<8x128xf32>
    %cst_84 = arith.constant 5.000000e-01 : f32
    %246 = vector.broadcast %cst_84 : f32 to vector<8x128xf32>
    %247 = arith.mulf %246, %245 : vector<8x128xf32>
    %248 = math.tanh %247 : vector<8x128xf32>
    %cst_85 = arith.constant 5.000000e-01 : f32
    %249 = vector.broadcast %cst_85 : f32 to vector<8x128xf32>
    %250 = arith.mulf %249, %248 : vector<8x128xf32>
    %cst_86 = arith.constant 5.000000e-01 : f32
    %251 = vector.broadcast %cst_86 : f32 to vector<8x128xf32>
    %252 = arith.addf %250, %251 : vector<8x128xf32>
    %253 = vector.extract_strided_slice %236 {offsets = [0, 256], sizes = [8, 128], strides = [1, 1]} : vector<8x512xf32> to vector<8x128xf32>
    %254 = math.tanh %253 : vector<8x128xf32>
    %255 = vector.extract_strided_slice %236 {offsets = [0, 384], sizes = [8, 128], strides = [1, 1]} : vector<8x512xf32> to vector<8x128xf32>
    %cst_87 = arith.constant 5.000000e-01 : f32
    %256 = vector.broadcast %cst_87 : f32 to vector<8x128xf32>
    %257 = arith.mulf %256, %255 : vector<8x128xf32>
    %258 = math.tanh %257 : vector<8x128xf32>
    %cst_88 = arith.constant 5.000000e-01 : f32
    %259 = vector.broadcast %cst_88 : f32 to vector<8x128xf32>
    %260 = arith.mulf %259, %258 : vector<8x128xf32>
    %cst_89 = arith.constant 5.000000e-01 : f32
    %261 = vector.broadcast %cst_89 : f32 to vector<8x128xf32>
    %262 = arith.addf %260, %261 : vector<8x128xf32>
    %263 = arith.mulf %252, %192 : vector<8x128xf32>
    %264 = arith.mulf %244, %254 : vector<8x128xf32>
    %265 = arith.addf %263, %264 : vector<8x128xf32>
    %266 = math.tanh %265 : vector<8x128xf32>
    %267 = arith.mulf %262, %266 : vector<8x128xf32>
    %268 = arith.truncf %267 : vector<8x128xf32> to vector<8x128xbf16>
    %cst_90 = arith.constant dense<0.000000e+00> : vector<8x512xf32>
    %269 = tpu.matmul %268, %8, %cst_90 {dimension_numbers = #tpu.dot_dimension_numbers<[1], [0], [0], [1], [0, 0, 1, 1], [], []>} : vector<8x128xbf16>, vector<128x512xbf16>, vector<8x512xf32> -> vector<8x512xf32>
    %270 = vector.broadcast %9 : vector<1x512xf32> to vector<8x512xf32>
    %271 = arith.addf %269, %270 : vector<8x512xf32>
    %272 = arith.truncf %232 : vector<8x128xf32> to vector<8x128xbf16>
    %cst_91 = arith.constant dense<0.000000e+00> : vector<8x512xf32>
    %273 = tpu.matmul %272, %7, %cst_91 {dimension_numbers = #tpu.dot_dimension_numbers<[1], [0], [0], [1], [0, 0, 1, 1], [], []>} : vector<8x128xbf16>, vector<128x512xbf16>, vector<8x512xf32> -> vector<8x512xf32>
    %274 = arith.addf %271, %273 : vector<8x512xf32>
    %275 = vector.extract_strided_slice %274 {offsets = [0, 0], sizes = [8, 128], strides = [1, 1]} : vector<8x512xf32> to vector<8x128xf32>
    %cst_92 = arith.constant 5.000000e-01 : f32
    %276 = vector.broadcast %cst_92 : f32 to vector<8x128xf32>
    %277 = arith.mulf %276, %275 : vector<8x128xf32>
    %278 = math.tanh %277 : vector<8x128xf32>
    %cst_93 = arith.constant 5.000000e-01 : f32
    %279 = vector.broadcast %cst_93 : f32 to vector<8x128xf32>
    %280 = arith.mulf %279, %278 : vector<8x128xf32>
    %cst_94 = arith.constant 5.000000e-01 : f32
    %281 = vector.broadcast %cst_94 : f32 to vector<8x128xf32>
    %282 = arith.addf %280, %281 : vector<8x128xf32>
    %283 = vector.extract_strided_slice %274 {offsets = [0, 128], sizes = [8, 128], strides = [1, 1]} : vector<8x512xf32> to vector<8x128xf32>
    %cst_95 = arith.constant 5.000000e-01 : f32
    %284 = vector.broadcast %cst_95 : f32 to vector<8x128xf32>
    %285 = arith.mulf %284, %283 : vector<8x128xf32>
    %286 = math.tanh %285 : vector<8x128xf32>
    %cst_96 = arith.constant 5.000000e-01 : f32
    %287 = vector.broadcast %cst_96 : f32 to vector<8x128xf32>
    %288 = arith.mulf %287, %286 : vector<8x128xf32>
    %cst_97 = arith.constant 5.000000e-01 : f32
    %289 = vector.broadcast %cst_97 : f32 to vector<8x128xf32>
    %290 = arith.addf %288, %289 : vector<8x128xf32>
    %291 = vector.extract_strided_slice %274 {offsets = [0, 256], sizes = [8, 128], strides = [1, 1]} : vector<8x512xf32> to vector<8x128xf32>
    %292 = math.tanh %291 : vector<8x128xf32>
    %293 = vector.extract_strided_slice %274 {offsets = [0, 384], sizes = [8, 128], strides = [1, 1]} : vector<8x512xf32> to vector<8x128xf32>
    %cst_98 = arith.constant 5.000000e-01 : f32
    %294 = vector.broadcast %cst_98 : f32 to vector<8x128xf32>
    %295 = arith.mulf %294, %293 : vector<8x128xf32>
    %296 = math.tanh %295 : vector<8x128xf32>
    %cst_99 = arith.constant 5.000000e-01 : f32
    %297 = vector.broadcast %cst_99 : f32 to vector<8x128xf32>
    %298 = arith.mulf %297, %296 : vector<8x128xf32>
    %cst_100 = arith.constant 5.000000e-01 : f32
    %299 = vector.broadcast %cst_100 : f32 to vector<8x128xf32>
    %300 = arith.addf %298, %299 : vector<8x128xf32>
    %301 = arith.mulf %290, %230 : vector<8x128xf32>
    %302 = arith.mulf %282, %292 : vector<8x128xf32>
    %303 = arith.addf %301, %302 : vector<8x128xf32>
    %304 = math.tanh %303 : vector<8x128xf32>
    %305 = arith.mulf %300, %304 : vector<8x128xf32>
    %306 = vector.extract_strided_slice %5 {offsets = [32, 0], sizes = [8, 512], strides = [1, 1]} : vector<64x512xf32> to vector<8x512xf32>
    %307 = arith.truncf %267 : vector<8x128xf32> to vector<8x128xbf16>
    %cst_101 = arith.constant dense<0.000000e+00> : vector<8x512xf32>
    %308 = tpu.matmul %307, %6, %cst_101 {dimension_numbers = #tpu.dot_dimension_numbers<[1], [0], [0], [1], [0, 0, 1, 1], [], []>} : vector<8x128xbf16>, vector<128x512xbf16>, vector<8x512xf32> -> vector<8x512xf32>
    %309 = arith.addf %306, %308 : vector<8x512xf32>
    %310 = vector.extract_strided_slice %309 {offsets = [0, 0], sizes = [8, 128], strides = [1, 1]} : vector<8x512xf32> to vector<8x128xf32>
    %cst_102 = arith.constant 5.000000e-01 : f32
    %311 = vector.broadcast %cst_102 : f32 to vector<8x128xf32>
    %312 = arith.mulf %311, %310 : vector<8x128xf32>
    %313 = math.tanh %312 : vector<8x128xf32>
    %cst_103 = arith.constant 5.000000e-01 : f32
    %314 = vector.broadcast %cst_103 : f32 to vector<8x128xf32>
    %315 = arith.mulf %314, %313 : vector<8x128xf32>
    %cst_104 = arith.constant 5.000000e-01 : f32
    %316 = vector.broadcast %cst_104 : f32 to vector<8x128xf32>
    %317 = arith.addf %315, %316 : vector<8x128xf32>
    %318 = vector.extract_strided_slice %309 {offsets = [0, 128], sizes = [8, 128], strides = [1, 1]} : vector<8x512xf32> to vector<8x128xf32>
    %cst_105 = arith.constant 5.000000e-01 : f32
    %319 = vector.broadcast %cst_105 : f32 to vector<8x128xf32>
    %320 = arith.mulf %319, %318 : vector<8x128xf32>
    %321 = math.tanh %320 : vector<8x128xf32>
    %cst_106 = arith.constant 5.000000e-01 : f32
    %322 = vector.broadcast %cst_106 : f32 to vector<8x128xf32>
    %323 = arith.mulf %322, %321 : vector<8x128xf32>
    %cst_107 = arith.constant 5.000000e-01 : f32
    %324 = vector.broadcast %cst_107 : f32 to vector<8x128xf32>
    %325 = arith.addf %323, %324 : vector<8x128xf32>
    %326 = vector.extract_strided_slice %309 {offsets = [0, 256], sizes = [8, 128], strides = [1, 1]} : vector<8x512xf32> to vector<8x128xf32>
    %327 = math.tanh %326 : vector<8x128xf32>
    %328 = vector.extract_strided_slice %309 {offsets = [0, 384], sizes = [8, 128], strides = [1, 1]} : vector<8x512xf32> to vector<8x128xf32>
    %cst_108 = arith.constant 5.000000e-01 : f32
    %329 = vector.broadcast %cst_108 : f32 to vector<8x128xf32>
    %330 = arith.mulf %329, %328 : vector<8x128xf32>
    %331 = math.tanh %330 : vector<8x128xf32>
    %cst_109 = arith.constant 5.000000e-01 : f32
    %332 = vector.broadcast %cst_109 : f32 to vector<8x128xf32>
    %333 = arith.mulf %332, %331 : vector<8x128xf32>
    %cst_110 = arith.constant 5.000000e-01 : f32
    %334 = vector.broadcast %cst_110 : f32 to vector<8x128xf32>
    %335 = arith.addf %333, %334 : vector<8x128xf32>
    %336 = arith.mulf %325, %265 : vector<8x128xf32>
    %337 = arith.mulf %317, %327 : vector<8x128xf32>
    %338 = arith.addf %336, %337 : vector<8x128xf32>
    %339 = math.tanh %338 : vector<8x128xf32>
    %340 = arith.mulf %335, %339 : vector<8x128xf32>
    %341 = arith.truncf %340 : vector<8x128xf32> to vector<8x128xbf16>
    %cst_111 = arith.constant dense<0.000000e+00> : vector<8x512xf32>
    %342 = tpu.matmul %341, %8, %cst_111 {dimension_numbers = #tpu.dot_dimension_numbers<[1], [0], [0], [1], [0, 0, 1, 1], [], []>} : vector<8x128xbf16>, vector<128x512xbf16>, vector<8x512xf32> -> vector<8x512xf32>
    %343 = vector.broadcast %9 : vector<1x512xf32> to vector<8x512xf32>
    %344 = arith.addf %342, %343 : vector<8x512xf32>
    %345 = arith.truncf %305 : vector<8x128xf32> to vector<8x128xbf16>
    %cst_112 = arith.constant dense<0.000000e+00> : vector<8x512xf32>
    %346 = tpu.matmul %345, %7, %cst_112 {dimension_numbers = #tpu.dot_dimension_numbers<[1], [0], [0], [1], [0, 0, 1, 1], [], []>} : vector<8x128xbf16>, vector<128x512xbf16>, vector<8x512xf32> -> vector<8x512xf32>
    %347 = arith.addf %344, %346 : vector<8x512xf32>
    %348 = vector.extract_strided_slice %347 {offsets = [0, 0], sizes = [8, 128], strides = [1, 1]} : vector<8x512xf32> to vector<8x128xf32>
    %cst_113 = arith.constant 5.000000e-01 : f32
    %349 = vector.broadcast %cst_113 : f32 to vector<8x128xf32>
    %350 = arith.mulf %349, %348 : vector<8x128xf32>
    %351 = math.tanh %350 : vector<8x128xf32>
    %cst_114 = arith.constant 5.000000e-01 : f32
    %352 = vector.broadcast %cst_114 : f32 to vector<8x128xf32>
    %353 = arith.mulf %352, %351 : vector<8x128xf32>
    %cst_115 = arith.constant 5.000000e-01 : f32
    %354 = vector.broadcast %cst_115 : f32 to vector<8x128xf32>
    %355 = arith.addf %353, %354 : vector<8x128xf32>
    %356 = vector.extract_strided_slice %347 {offsets = [0, 128], sizes = [8, 128], strides = [1, 1]} : vector<8x512xf32> to vector<8x128xf32>
    %cst_116 = arith.constant 5.000000e-01 : f32
    %357 = vector.broadcast %cst_116 : f32 to vector<8x128xf32>
    %358 = arith.mulf %357, %356 : vector<8x128xf32>
    %359 = math.tanh %358 : vector<8x128xf32>
    %cst_117 = arith.constant 5.000000e-01 : f32
    %360 = vector.broadcast %cst_117 : f32 to vector<8x128xf32>
    %361 = arith.mulf %360, %359 : vector<8x128xf32>
    %cst_118 = arith.constant 5.000000e-01 : f32
    %362 = vector.broadcast %cst_118 : f32 to vector<8x128xf32>
    %363 = arith.addf %361, %362 : vector<8x128xf32>
    %364 = vector.extract_strided_slice %347 {offsets = [0, 256], sizes = [8, 128], strides = [1, 1]} : vector<8x512xf32> to vector<8x128xf32>
    %365 = math.tanh %364 : vector<8x128xf32>
    %366 = vector.extract_strided_slice %347 {offsets = [0, 384], sizes = [8, 128], strides = [1, 1]} : vector<8x512xf32> to vector<8x128xf32>
    %cst_119 = arith.constant 5.000000e-01 : f32
    %367 = vector.broadcast %cst_119 : f32 to vector<8x128xf32>
    %368 = arith.mulf %367, %366 : vector<8x128xf32>
    %369 = math.tanh %368 : vector<8x128xf32>
    %cst_120 = arith.constant 5.000000e-01 : f32
    %370 = vector.broadcast %cst_120 : f32 to vector<8x128xf32>
    %371 = arith.mulf %370, %369 : vector<8x128xf32>
    %cst_121 = arith.constant 5.000000e-01 : f32
    %372 = vector.broadcast %cst_121 : f32 to vector<8x128xf32>
    %373 = arith.addf %371, %372 : vector<8x128xf32>
    %374 = arith.mulf %363, %303 : vector<8x128xf32>
    %375 = arith.mulf %355, %365 : vector<8x128xf32>
    %376 = arith.addf %374, %375 : vector<8x128xf32>
    %377 = math.tanh %376 : vector<8x128xf32>
    %378 = arith.mulf %373, %377 : vector<8x128xf32>
    %379 = vector.extract_strided_slice %5 {offsets = [40, 0], sizes = [8, 512], strides = [1, 1]} : vector<64x512xf32> to vector<8x512xf32>
    %380 = arith.truncf %340 : vector<8x128xf32> to vector<8x128xbf16>
    %cst_122 = arith.constant dense<0.000000e+00> : vector<8x512xf32>
    %381 = tpu.matmul %380, %6, %cst_122 {dimension_numbers = #tpu.dot_dimension_numbers<[1], [0], [0], [1], [0, 0, 1, 1], [], []>} : vector<8x128xbf16>, vector<128x512xbf16>, vector<8x512xf32> -> vector<8x512xf32>
    %382 = arith.addf %379, %381 : vector<8x512xf32>
    %383 = vector.extract_strided_slice %382 {offsets = [0, 0], sizes = [8, 128], strides = [1, 1]} : vector<8x512xf32> to vector<8x128xf32>
    %cst_123 = arith.constant 5.000000e-01 : f32
    %384 = vector.broadcast %cst_123 : f32 to vector<8x128xf32>
    %385 = arith.mulf %384, %383 : vector<8x128xf32>
    %386 = math.tanh %385 : vector<8x128xf32>
    %cst_124 = arith.constant 5.000000e-01 : f32
    %387 = vector.broadcast %cst_124 : f32 to vector<8x128xf32>
    %388 = arith.mulf %387, %386 : vector<8x128xf32>
    %cst_125 = arith.constant 5.000000e-01 : f32
    %389 = vector.broadcast %cst_125 : f32 to vector<8x128xf32>
    %390 = arith.addf %388, %389 : vector<8x128xf32>
    %391 = vector.extract_strided_slice %382 {offsets = [0, 128], sizes = [8, 128], strides = [1, 1]} : vector<8x512xf32> to vector<8x128xf32>
    %cst_126 = arith.constant 5.000000e-01 : f32
    %392 = vector.broadcast %cst_126 : f32 to vector<8x128xf32>
    %393 = arith.mulf %392, %391 : vector<8x128xf32>
    %394 = math.tanh %393 : vector<8x128xf32>
    %cst_127 = arith.constant 5.000000e-01 : f32
    %395 = vector.broadcast %cst_127 : f32 to vector<8x128xf32>
    %396 = arith.mulf %395, %394 : vector<8x128xf32>
    %cst_128 = arith.constant 5.000000e-01 : f32
    %397 = vector.broadcast %cst_128 : f32 to vector<8x128xf32>
    %398 = arith.addf %396, %397 : vector<8x128xf32>
    %399 = vector.extract_strided_slice %382 {offsets = [0, 256], sizes = [8, 128], strides = [1, 1]} : vector<8x512xf32> to vector<8x128xf32>
    %400 = math.tanh %399 : vector<8x128xf32>
    %401 = vector.extract_strided_slice %382 {offsets = [0, 384], sizes = [8, 128], strides = [1, 1]} : vector<8x512xf32> to vector<8x128xf32>
    %cst_129 = arith.constant 5.000000e-01 : f32
    %402 = vector.broadcast %cst_129 : f32 to vector<8x128xf32>
    %403 = arith.mulf %402, %401 : vector<8x128xf32>
    %404 = math.tanh %403 : vector<8x128xf32>
    %cst_130 = arith.constant 5.000000e-01 : f32
    %405 = vector.broadcast %cst_130 : f32 to vector<8x128xf32>
    %406 = arith.mulf %405, %404 : vector<8x128xf32>
    %cst_131 = arith.constant 5.000000e-01 : f32
    %407 = vector.broadcast %cst_131 : f32 to vector<8x128xf32>
    %408 = arith.addf %406, %407 : vector<8x128xf32>
    %409 = arith.mulf %398, %338 : vector<8x128xf32>
    %410 = arith.mulf %390, %400 : vector<8x128xf32>
    %411 = arith.addf %409, %410 : vector<8x128xf32>
    %412 = math.tanh %411 : vector<8x128xf32>
    %413 = arith.mulf %408, %412 : vector<8x128xf32>
    %414 = arith.truncf %413 : vector<8x128xf32> to vector<8x128xbf16>
    %cst_132 = arith.constant dense<0.000000e+00> : vector<8x512xf32>
    %415 = tpu.matmul %414, %8, %cst_132 {dimension_numbers = #tpu.dot_dimension_numbers<[1], [0], [0], [1], [0, 0, 1, 1], [], []>} : vector<8x128xbf16>, vector<128x512xbf16>, vector<8x512xf32> -> vector<8x512xf32>
    %416 = vector.broadcast %9 : vector<1x512xf32> to vector<8x512xf32>
    %417 = arith.addf %415, %416 : vector<8x512xf32>
    %418 = arith.truncf %378 : vector<8x128xf32> to vector<8x128xbf16>
    %cst_133 = arith.constant dense<0.000000e+00> : vector<8x512xf32>
    %419 = tpu.matmul %418, %7, %cst_133 {dimension_numbers = #tpu.dot_dimension_numbers<[1], [0], [0], [1], [0, 0, 1, 1], [], []>} : vector<8x128xbf16>, vector<128x512xbf16>, vector<8x512xf32> -> vector<8x512xf32>
    %420 = arith.addf %417, %419 : vector<8x512xf32>
    %421 = vector.extract_strided_slice %420 {offsets = [0, 0], sizes = [8, 128], strides = [1, 1]} : vector<8x512xf32> to vector<8x128xf32>
    %cst_134 = arith.constant 5.000000e-01 : f32
    %422 = vector.broadcast %cst_134 : f32 to vector<8x128xf32>
    %423 = arith.mulf %422, %421 : vector<8x128xf32>
    %424 = math.tanh %423 : vector<8x128xf32>
    %cst_135 = arith.constant 5.000000e-01 : f32
    %425 = vector.broadcast %cst_135 : f32 to vector<8x128xf32>
    %426 = arith.mulf %425, %424 : vector<8x128xf32>
    %cst_136 = arith.constant 5.000000e-01 : f32
    %427 = vector.broadcast %cst_136 : f32 to vector<8x128xf32>
    %428 = arith.addf %426, %427 : vector<8x128xf32>
    %429 = vector.extract_strided_slice %420 {offsets = [0, 128], sizes = [8, 128], strides = [1, 1]} : vector<8x512xf32> to vector<8x128xf32>
    %cst_137 = arith.constant 5.000000e-01 : f32
    %430 = vector.broadcast %cst_137 : f32 to vector<8x128xf32>
    %431 = arith.mulf %430, %429 : vector<8x128xf32>
    %432 = math.tanh %431 : vector<8x128xf32>
    %cst_138 = arith.constant 5.000000e-01 : f32
    %433 = vector.broadcast %cst_138 : f32 to vector<8x128xf32>
    %434 = arith.mulf %433, %432 : vector<8x128xf32>
    %cst_139 = arith.constant 5.000000e-01 : f32
    %435 = vector.broadcast %cst_139 : f32 to vector<8x128xf32>
    %436 = arith.addf %434, %435 : vector<8x128xf32>
    %437 = vector.extract_strided_slice %420 {offsets = [0, 256], sizes = [8, 128], strides = [1, 1]} : vector<8x512xf32> to vector<8x128xf32>
    %438 = math.tanh %437 : vector<8x128xf32>
    %439 = vector.extract_strided_slice %420 {offsets = [0, 384], sizes = [8, 128], strides = [1, 1]} : vector<8x512xf32> to vector<8x128xf32>
    %cst_140 = arith.constant 5.000000e-01 : f32
    %440 = vector.broadcast %cst_140 : f32 to vector<8x128xf32>
    %441 = arith.mulf %440, %439 : vector<8x128xf32>
    %442 = math.tanh %441 : vector<8x128xf32>
    %cst_141 = arith.constant 5.000000e-01 : f32
    %443 = vector.broadcast %cst_141 : f32 to vector<8x128xf32>
    %444 = arith.mulf %443, %442 : vector<8x128xf32>
    %cst_142 = arith.constant 5.000000e-01 : f32
    %445 = vector.broadcast %cst_142 : f32 to vector<8x128xf32>
    %446 = arith.addf %444, %445 : vector<8x128xf32>
    %447 = arith.mulf %436, %376 : vector<8x128xf32>
    %448 = arith.mulf %428, %438 : vector<8x128xf32>
    %449 = arith.addf %447, %448 : vector<8x128xf32>
    %450 = math.tanh %449 : vector<8x128xf32>
    %451 = arith.mulf %446, %450 : vector<8x128xf32>
    %452 = vector.extract_strided_slice %5 {offsets = [48, 0], sizes = [8, 512], strides = [1, 1]} : vector<64x512xf32> to vector<8x512xf32>
    %453 = arith.truncf %413 : vector<8x128xf32> to vector<8x128xbf16>
    %cst_143 = arith.constant dense<0.000000e+00> : vector<8x512xf32>
    %454 = tpu.matmul %453, %6, %cst_143 {dimension_numbers = #tpu.dot_dimension_numbers<[1], [0], [0], [1], [0, 0, 1, 1], [], []>} : vector<8x128xbf16>, vector<128x512xbf16>, vector<8x512xf32> -> vector<8x512xf32>
    %455 = arith.addf %452, %454 : vector<8x512xf32>
    %456 = vector.extract_strided_slice %455 {offsets = [0, 0], sizes = [8, 128], strides = [1, 1]} : vector<8x512xf32> to vector<8x128xf32>
    %cst_144 = arith.constant 5.000000e-01 : f32
    %457 = vector.broadcast %cst_144 : f32 to vector<8x128xf32>
    %458 = arith.mulf %457, %456 : vector<8x128xf32>
    %459 = math.tanh %458 : vector<8x128xf32>
    %cst_145 = arith.constant 5.000000e-01 : f32
    %460 = vector.broadcast %cst_145 : f32 to vector<8x128xf32>
    %461 = arith.mulf %460, %459 : vector<8x128xf32>
    %cst_146 = arith.constant 5.000000e-01 : f32
    %462 = vector.broadcast %cst_146 : f32 to vector<8x128xf32>
    %463 = arith.addf %461, %462 : vector<8x128xf32>
    %464 = vector.extract_strided_slice %455 {offsets = [0, 128], sizes = [8, 128], strides = [1, 1]} : vector<8x512xf32> to vector<8x128xf32>
    %cst_147 = arith.constant 5.000000e-01 : f32
    %465 = vector.broadcast %cst_147 : f32 to vector<8x128xf32>
    %466 = arith.mulf %465, %464 : vector<8x128xf32>
    %467 = math.tanh %466 : vector<8x128xf32>
    %cst_148 = arith.constant 5.000000e-01 : f32
    %468 = vector.broadcast %cst_148 : f32 to vector<8x128xf32>
    %469 = arith.mulf %468, %467 : vector<8x128xf32>
    %cst_149 = arith.constant 5.000000e-01 : f32
    %470 = vector.broadcast %cst_149 : f32 to vector<8x128xf32>
    %471 = arith.addf %469, %470 : vector<8x128xf32>
    %472 = vector.extract_strided_slice %455 {offsets = [0, 256], sizes = [8, 128], strides = [1, 1]} : vector<8x512xf32> to vector<8x128xf32>
    %473 = math.tanh %472 : vector<8x128xf32>
    %474 = vector.extract_strided_slice %455 {offsets = [0, 384], sizes = [8, 128], strides = [1, 1]} : vector<8x512xf32> to vector<8x128xf32>
    %cst_150 = arith.constant 5.000000e-01 : f32
    %475 = vector.broadcast %cst_150 : f32 to vector<8x128xf32>
    %476 = arith.mulf %475, %474 : vector<8x128xf32>
    %477 = math.tanh %476 : vector<8x128xf32>
    %cst_151 = arith.constant 5.000000e-01 : f32
    %478 = vector.broadcast %cst_151 : f32 to vector<8x128xf32>
    %479 = arith.mulf %478, %477 : vector<8x128xf32>
    %cst_152 = arith.constant 5.000000e-01 : f32
    %480 = vector.broadcast %cst_152 : f32 to vector<8x128xf32>
    %481 = arith.addf %479, %480 : vector<8x128xf32>
    %482 = arith.mulf %471, %411 : vector<8x128xf32>
    %483 = arith.mulf %463, %473 : vector<8x128xf32>
    %484 = arith.addf %482, %483 : vector<8x128xf32>
    %485 = math.tanh %484 : vector<8x128xf32>
    %486 = arith.mulf %481, %485 : vector<8x128xf32>
    %487 = arith.truncf %486 : vector<8x128xf32> to vector<8x128xbf16>
    %cst_153 = arith.constant dense<0.000000e+00> : vector<8x512xf32>
    %488 = tpu.matmul %487, %8, %cst_153 {dimension_numbers = #tpu.dot_dimension_numbers<[1], [0], [0], [1], [0, 0, 1, 1], [], []>} : vector<8x128xbf16>, vector<128x512xbf16>, vector<8x512xf32> -> vector<8x512xf32>
    %489 = vector.broadcast %9 : vector<1x512xf32> to vector<8x512xf32>
    %490 = arith.addf %488, %489 : vector<8x512xf32>
    %491 = arith.truncf %451 : vector<8x128xf32> to vector<8x128xbf16>
    %cst_154 = arith.constant dense<0.000000e+00> : vector<8x512xf32>
    %492 = tpu.matmul %491, %7, %cst_154 {dimension_numbers = #tpu.dot_dimension_numbers<[1], [0], [0], [1], [0, 0, 1, 1], [], []>} : vector<8x128xbf16>, vector<128x512xbf16>, vector<8x512xf32> -> vector<8x512xf32>
    %493 = arith.addf %490, %492 : vector<8x512xf32>
    %494 = vector.extract_strided_slice %493 {offsets = [0, 0], sizes = [8, 128], strides = [1, 1]} : vector<8x512xf32> to vector<8x128xf32>
    %cst_155 = arith.constant 5.000000e-01 : f32
    %495 = vector.broadcast %cst_155 : f32 to vector<8x128xf32>
    %496 = arith.mulf %495, %494 : vector<8x128xf32>
    %497 = math.tanh %496 : vector<8x128xf32>
    %cst_156 = arith.constant 5.000000e-01 : f32
    %498 = vector.broadcast %cst_156 : f32 to vector<8x128xf32>
    %499 = arith.mulf %498, %497 : vector<8x128xf32>
    %cst_157 = arith.constant 5.000000e-01 : f32
    %500 = vector.broadcast %cst_157 : f32 to vector<8x128xf32>
    %501 = arith.addf %499, %500 : vector<8x128xf32>
    %502 = vector.extract_strided_slice %493 {offsets = [0, 128], sizes = [8, 128], strides = [1, 1]} : vector<8x512xf32> to vector<8x128xf32>
    %cst_158 = arith.constant 5.000000e-01 : f32
    %503 = vector.broadcast %cst_158 : f32 to vector<8x128xf32>
    %504 = arith.mulf %503, %502 : vector<8x128xf32>
    %505 = math.tanh %504 : vector<8x128xf32>
    %cst_159 = arith.constant 5.000000e-01 : f32
    %506 = vector.broadcast %cst_159 : f32 to vector<8x128xf32>
    %507 = arith.mulf %506, %505 : vector<8x128xf32>
    %cst_160 = arith.constant 5.000000e-01 : f32
    %508 = vector.broadcast %cst_160 : f32 to vector<8x128xf32>
    %509 = arith.addf %507, %508 : vector<8x128xf32>
    %510 = vector.extract_strided_slice %493 {offsets = [0, 256], sizes = [8, 128], strides = [1, 1]} : vector<8x512xf32> to vector<8x128xf32>
    %511 = math.tanh %510 : vector<8x128xf32>
    %512 = vector.extract_strided_slice %493 {offsets = [0, 384], sizes = [8, 128], strides = [1, 1]} : vector<8x512xf32> to vector<8x128xf32>
    %cst_161 = arith.constant 5.000000e-01 : f32
    %513 = vector.broadcast %cst_161 : f32 to vector<8x128xf32>
    %514 = arith.mulf %513, %512 : vector<8x128xf32>
    %515 = math.tanh %514 : vector<8x128xf32>
    %cst_162 = arith.constant 5.000000e-01 : f32
    %516 = vector.broadcast %cst_162 : f32 to vector<8x128xf32>
    %517 = arith.mulf %516, %515 : vector<8x128xf32>
    %cst_163 = arith.constant 5.000000e-01 : f32
    %518 = vector.broadcast %cst_163 : f32 to vector<8x128xf32>
    %519 = arith.addf %517, %518 : vector<8x128xf32>
    %520 = arith.mulf %509, %449 : vector<8x128xf32>
    %521 = arith.mulf %501, %511 : vector<8x128xf32>
    %522 = arith.addf %520, %521 : vector<8x128xf32>
    %523 = math.tanh %522 : vector<8x128xf32>
    %524 = arith.mulf %519, %523 : vector<8x128xf32>
    %525 = vector.extract_strided_slice %5 {offsets = [56, 0], sizes = [8, 512], strides = [1, 1]} : vector<64x512xf32> to vector<8x512xf32>
    %526 = arith.truncf %486 : vector<8x128xf32> to vector<8x128xbf16>
    %cst_164 = arith.constant dense<0.000000e+00> : vector<8x512xf32>
    %527 = tpu.matmul %526, %6, %cst_164 {dimension_numbers = #tpu.dot_dimension_numbers<[1], [0], [0], [1], [0, 0, 1, 1], [], []>} : vector<8x128xbf16>, vector<128x512xbf16>, vector<8x512xf32> -> vector<8x512xf32>
    %528 = arith.addf %525, %527 : vector<8x512xf32>
    %529 = vector.extract_strided_slice %528 {offsets = [0, 0], sizes = [8, 128], strides = [1, 1]} : vector<8x512xf32> to vector<8x128xf32>
    %cst_165 = arith.constant 5.000000e-01 : f32
    %530 = vector.broadcast %cst_165 : f32 to vector<8x128xf32>
    %531 = arith.mulf %530, %529 : vector<8x128xf32>
    %532 = math.tanh %531 : vector<8x128xf32>
    %cst_166 = arith.constant 5.000000e-01 : f32
    %533 = vector.broadcast %cst_166 : f32 to vector<8x128xf32>
    %534 = arith.mulf %533, %532 : vector<8x128xf32>
    %cst_167 = arith.constant 5.000000e-01 : f32
    %535 = vector.broadcast %cst_167 : f32 to vector<8x128xf32>
    %536 = arith.addf %534, %535 : vector<8x128xf32>
    %537 = vector.extract_strided_slice %528 {offsets = [0, 128], sizes = [8, 128], strides = [1, 1]} : vector<8x512xf32> to vector<8x128xf32>
    %cst_168 = arith.constant 5.000000e-01 : f32
    %538 = vector.broadcast %cst_168 : f32 to vector<8x128xf32>
    %539 = arith.mulf %538, %537 : vector<8x128xf32>
    %540 = math.tanh %539 : vector<8x128xf32>
    %cst_169 = arith.constant 5.000000e-01 : f32
    %541 = vector.broadcast %cst_169 : f32 to vector<8x128xf32>
    %542 = arith.mulf %541, %540 : vector<8x128xf32>
    %cst_170 = arith.constant 5.000000e-01 : f32
    %543 = vector.broadcast %cst_170 : f32 to vector<8x128xf32>
    %544 = arith.addf %542, %543 : vector<8x128xf32>
    %545 = vector.extract_strided_slice %528 {offsets = [0, 256], sizes = [8, 128], strides = [1, 1]} : vector<8x512xf32> to vector<8x128xf32>
    %546 = math.tanh %545 : vector<8x128xf32>
    %547 = vector.extract_strided_slice %528 {offsets = [0, 384], sizes = [8, 128], strides = [1, 1]} : vector<8x512xf32> to vector<8x128xf32>
    %cst_171 = arith.constant 5.000000e-01 : f32
    %548 = vector.broadcast %cst_171 : f32 to vector<8x128xf32>
    %549 = arith.mulf %548, %547 : vector<8x128xf32>
    %550 = math.tanh %549 : vector<8x128xf32>
    %cst_172 = arith.constant 5.000000e-01 : f32
    %551 = vector.broadcast %cst_172 : f32 to vector<8x128xf32>
    %552 = arith.mulf %551, %550 : vector<8x128xf32>
    %cst_173 = arith.constant 5.000000e-01 : f32
    %553 = vector.broadcast %cst_173 : f32 to vector<8x128xf32>
    %554 = arith.addf %552, %553 : vector<8x128xf32>
    %555 = arith.mulf %544, %484 : vector<8x128xf32>
    %556 = arith.mulf %536, %546 : vector<8x128xf32>
    %557 = arith.addf %555, %556 : vector<8x128xf32>
    %558 = math.tanh %557 : vector<8x128xf32>
    %559 = arith.mulf %554, %558 : vector<8x128xf32>
    %560 = arith.truncf %559 : vector<8x128xf32> to vector<8x128xbf16>
    %cst_174 = arith.constant dense<0.000000e+00> : vector<8x512xf32>
    %561 = tpu.matmul %560, %8, %cst_174 {dimension_numbers = #tpu.dot_dimension_numbers<[1], [0], [0], [1], [0, 0, 1, 1], [], []>} : vector<8x128xbf16>, vector<128x512xbf16>, vector<8x512xf32> -> vector<8x512xf32>
    %562 = vector.broadcast %9 : vector<1x512xf32> to vector<8x512xf32>
    %563 = arith.addf %561, %562 : vector<8x512xf32>
    %564 = arith.truncf %524 : vector<8x128xf32> to vector<8x128xbf16>
    %cst_175 = arith.constant dense<0.000000e+00> : vector<8x512xf32>
    %565 = tpu.matmul %564, %7, %cst_175 {dimension_numbers = #tpu.dot_dimension_numbers<[1], [0], [0], [1], [0, 0, 1, 1], [], []>} : vector<8x128xbf16>, vector<128x512xbf16>, vector<8x512xf32> -> vector<8x512xf32>
    %566 = arith.addf %563, %565 : vector<8x512xf32>
    %567 = vector.extract_strided_slice %566 {offsets = [0, 0], sizes = [8, 128], strides = [1, 1]} : vector<8x512xf32> to vector<8x128xf32>
    %cst_176 = arith.constant 5.000000e-01 : f32
    %568 = vector.broadcast %cst_176 : f32 to vector<8x128xf32>
    %569 = arith.mulf %568, %567 : vector<8x128xf32>
    %570 = math.tanh %569 : vector<8x128xf32>
    %cst_177 = arith.constant 5.000000e-01 : f32
    %571 = vector.broadcast %cst_177 : f32 to vector<8x128xf32>
    %572 = arith.mulf %571, %570 : vector<8x128xf32>
    %cst_178 = arith.constant 5.000000e-01 : f32
    %573 = vector.broadcast %cst_178 : f32 to vector<8x128xf32>
    %574 = arith.addf %572, %573 : vector<8x128xf32>
    %575 = vector.extract_strided_slice %566 {offsets = [0, 128], sizes = [8, 128], strides = [1, 1]} : vector<8x512xf32> to vector<8x128xf32>
    %cst_179 = arith.constant 5.000000e-01 : f32
    %576 = vector.broadcast %cst_179 : f32 to vector<8x128xf32>
    %577 = arith.mulf %576, %575 : vector<8x128xf32>
    %578 = math.tanh %577 : vector<8x128xf32>
    %cst_180 = arith.constant 5.000000e-01 : f32
    %579 = vector.broadcast %cst_180 : f32 to vector<8x128xf32>
    %580 = arith.mulf %579, %578 : vector<8x128xf32>
    %cst_181 = arith.constant 5.000000e-01 : f32
    %581 = vector.broadcast %cst_181 : f32 to vector<8x128xf32>
    %582 = arith.addf %580, %581 : vector<8x128xf32>
    %583 = vector.extract_strided_slice %566 {offsets = [0, 256], sizes = [8, 128], strides = [1, 1]} : vector<8x512xf32> to vector<8x128xf32>
    %584 = math.tanh %583 : vector<8x128xf32>
    %585 = vector.extract_strided_slice %566 {offsets = [0, 384], sizes = [8, 128], strides = [1, 1]} : vector<8x512xf32> to vector<8x128xf32>
    %cst_182 = arith.constant 5.000000e-01 : f32
    %586 = vector.broadcast %cst_182 : f32 to vector<8x128xf32>
    %587 = arith.mulf %586, %585 : vector<8x128xf32>
    %588 = math.tanh %587 : vector<8x128xf32>
    %cst_183 = arith.constant 5.000000e-01 : f32
    %589 = vector.broadcast %cst_183 : f32 to vector<8x128xf32>
    %590 = arith.mulf %589, %588 : vector<8x128xf32>
    %cst_184 = arith.constant 5.000000e-01 : f32
    %591 = vector.broadcast %cst_184 : f32 to vector<8x128xf32>
    %592 = arith.addf %590, %591 : vector<8x128xf32>
    %593 = arith.mulf %582, %522 : vector<8x128xf32>
    %594 = arith.mulf %574, %584 : vector<8x128xf32>
    %595 = arith.addf %593, %594 : vector<8x128xf32>
    %596 = math.tanh %595 : vector<8x128xf32>
    %597 = arith.mulf %592, %596 : vector<8x128xf32>
    %598 = arith.truncf %597 : vector<8x128xf32> to vector<8x128xbf16>
    %c0_185 = arith.constant 0 : index
    %c0_186 = arith.constant 0 : index
    %599 = vector.load %arg7[%c0_185, %c0_186] : memref<128x4xbf16, #tpu.memory_space<vmem>>, vector<128x4xbf16>
    %cst_187 = arith.constant dense<0.000000e+00> : vector<8x4xf32>
    %600 = tpu.matmul %598, %599, %cst_187 {dimension_numbers = #tpu.dot_dimension_numbers<[1], [0], [0], [1], [0, 0, 1, 1], [], []>} : vector<8x128xbf16>, vector<128x4xbf16>, vector<8x4xf32> -> vector<8x4xf32>
    %c0_188 = arith.constant 0 : index
    %c0_189 = arith.constant 0 : index
    %601 = vector.load %arg8[%c0_188, %c0_189] : memref<1x4xf32, #tpu.memory_space<vmem>>, vector<1x4xf32>
    %602 = vector.broadcast %601 : vector<1x4xf32> to vector<8x4xf32>
    %603 = arith.addf %600, %602 : vector<8x4xf32>
    %c0_190 = arith.constant 0 : index
    %c0_191 = arith.constant 0 : index
    %604 = vector.load %arg9[%c0_190, %c0_191] : memref<8x4xf32, #tpu.memory_space<vmem>>, vector<8x4xf32>
    tpu.vector_store %arg9[%c0_190, %c0_191], %603 {strides = array<i32>} : memref<8x4xf32, #tpu.memory_space<vmem>>, vector<8x4xf32>,
    return
  }
}

</mosaic_0001>

<llo_original>
// kernel: lstm_model_forward.1
$region0: #{lstm_model_forward.1}
  #allocation0 [shape = 'u32[]', space=smem, size = 0x4, offset = 0x4, fixed_abs, tag = 'smem constant byte address 0x4 - core index']
  #allocation1 [shape = 'u32[72,128]{1,0:T(1,128)}', space=vmem, size = 0x9000, scoped, tag = 'internal scratch']
  %s0 = inlined_call_operand.vmem [shape: bf16[64,16], index: 0, kind: input, shape index: {}]
  %s1 = inlined_call_operand.vmem [shape: bf16[16,512], index: 1, kind: input, shape index: {}]
  %s2 = inlined_call_operand.hbm [shape: bf16[128,512], index: 2, kind: input, shape index: {}]
  %s3 = inlined_call_operand.vmem [shape: f32[1,512], index: 3, kind: input, shape index: {}]
  %s4 = inlined_call_operand.hbm [shape: bf16[128,512], index: 4, kind: input, shape index: {}]
  %s5 = inlined_call_operand.hbm [shape: bf16[128,512], index: 5, kind: input, shape index: {}]
  %s6 = inlined_call_operand.vmem [shape: f32[1,512], index: 6, kind: input, shape index: {}]
  %s7 = inlined_call_operand.vmem [shape: bf16[128,4], index: 7, kind: input, shape index: {}]
  %s8 = inlined_call_operand.vmem [shape: f32[1,4], index: 8, kind: input, shape index: {}]
  %s9 = inlined_call_operand.vmem [shape: f32[8,4], index: 9, kind: output, shape index: {}]
  %s10 = sld [smem:[#allocation0]]
  $region58: #{lstm_model_forward.1} parent=0
    _
  %s12 = ssub.s32 1, %s10
  %s13 = scalar_select 0, %s12, %s10
  $region1: #{lstm_model_forward.1} parent=0
    #allocation2 [shape = 'u8[131072]{0}', space=vmem, size = 0x20000, scoped, tag = 'input window, operand 2, single buffered']
    #allocation3 [shape = 's32[1]{0}', space=sflag, size = 0x4, scoped, tag = 'scoped memory for lstm_model_forward.1']
    #allocation4 [shape = 'u8[131072]{0}', space=vmem, size = 0x20000, scoped, tag = 'input window, operand 4, single buffered']
    #allocation5 [shape = 's32[1]{0}', space=sflag, size = 0x4, scoped, tag = 'scoped memory for lstm_model_forward.1']
    #allocation6 [shape = 'u8[131072]{0}', space=vmem, size = 0x20000, scoped, tag = 'input window, operand 5, single buffered']
    %14 = vsyncpa [#allocation3], 0
    %15 = vsyncpa [#allocation5], 0
    // Predicated region
    $region2: #{lstm_model_forward.1} parent=1 // pred_check
      _
    $region3: #{lstm_model_forward.1} parent=1 // pred_check_branch
      %17 = sbr.rel (0) target = $region5
    $region4: #{lstm_model_forward.1} parent=1 // pred_region
      _
    $region5: #{lstm_model_forward.1} parent=1 // pred_fallthru
      _
    // Predicated region
    $region6: #{lstm_model_forward.1} parent=1 // pred_check
      _
    $region7: #{lstm_model_forward.1} parent=1 // pred_check_branch
      %19 = sbr.rel (0) target = $region9
    $region8: #{lstm_model_forward.1} parent=1 // pred_region
      _
    $region9: #{lstm_model_forward.1} parent=1 // pred_fallthru
      _
    // Predicated region
    $region10: #{lstm_model_forward.1} parent=1 // pred_check
      _
    $region11: #{lstm_model_forward.1} parent=1 // pred_check_branch
      %21 = sbr.rel (0) target = $region13
    $region12: #{lstm_model_forward.1} parent=1 // pred_region
      %23 = vsyncadd [#allocation3], 0
      %s24 = sshll.u32 %s2, 4
      %s25 = int_to_ptr.hbm [resolvable:$true] %s24
      %s26 = sshll.u32 [#allocation2], 4
      %s27 = int_to_ptr.vmem [resolvable:$true] %s26
      %32 = dma.hbm_to_vmem [thread:$0]  %s25, 4096, %s27, [#allocation3], 256, 256, 16
    $region13: #{lstm_model_forward.1} parent=1 // pred_fallthru
      _
    // Predicated region
    $region14: #{lstm_model_forward.1} parent=1 // pred_check
      _
    $region15: #{lstm_model_forward.1} parent=1 // pred_check_branch
      %34 = sbr.rel (0) target = $region17
    $region16: #{lstm_model_forward.1} parent=1 // pred_region
      _
    $region17: #{lstm_model_forward.1} parent=1 // pred_fallthru
      _
    // Predicated region
    $region18: #{lstm_model_forward.1} parent=1 // pred_check
      _
    $region19: #{lstm_model_forward.1} parent=1 // pred_check_branch
      %36 = sbr.rel (0) target = $region21
    $region20: #{lstm_model_forward.1} parent=1 // pred_region
      %38 = vsyncadd [#allocation5], 0
      %s39 = sshll.u32 %s4, 4
      %s40 = int_to_ptr.hbm [resolvable:$true] %s39
      %s41 = sshll.u32 [#allocation4], 4
      %s42 = int_to_ptr.vmem [resolvable:$true] %s41
      %47 = dma.hbm_to_vmem [thread:$0]  %s40, 4096, %s42, [#allocation5], 256, 256, 16
    $region21: #{lstm_model_forward.1} parent=1 // pred_fallthru
      _
    // Predicated region
    $region22: #{lstm_model_forward.1} parent=1 // pred_check
      _
    $region23: #{lstm_model_forward.1} parent=1 // pred_check_branch
      %49 = sbr.rel (0) target = $region25
    $region24: #{lstm_model_forward.1} parent=1 // pred_region
      %51 = vsyncadd [#allocation5], 0
      %s52 = sshll.u32 %s5, 4
      %s53 = int_to_ptr.hbm [resolvable:$true] %s52
      %s54 = sshll.u32 [#allocation6], 4
      %s55 = int_to_ptr.vmem [resolvable:$true] %s54
      %60 = dma.hbm_to_vmem [thread:$0]  %s53, 4096, %s55, [#allocation5], 256, 256, 16
    $region25: #{lstm_model_forward.1} parent=1 // pred_fallthru
      _
    // Predicated region
    $region26: #{lstm_model_forward.1} parent=1 // pred_check
      _
    $region27: #{lstm_model_forward.1} parent=1 // pred_check_branch
      %62 = sbr.rel (0) target = $region29
    $region28: #{lstm_model_forward.1} parent=1 // pred_region
      _
    $region29: #{lstm_model_forward.1} parent=1 // pred_fallthru
      _
    // Predicated region
    $region30: #{lstm_model_forward.1} parent=1 // pred_check
      _
    $region31: #{lstm_model_forward.1} parent=1 // pred_check_branch
      %64 = sbr.rel (0) target = $region33
    $region32: #{lstm_model_forward.1} parent=1 // pred_region
      _
    $region33: #{lstm_model_forward.1} parent=1 // pred_fallthru
      _
    // Predicated region
    $region34: #{lstm_model_forward.1} parent=1 // pred_check
      _
    $region35: #{lstm_model_forward.1} parent=1 // pred_check_branch
      %66 = sbr.rel (0) target = $region37
    $region36: #{lstm_model_forward.1} parent=1 // pred_region
      _
    $region37: #{lstm_model_forward.1} parent=1 // pred_fallthru
      _
    // Predicated region
    $region38: #{lstm_model_forward.1} parent=1 // pred_check
      _
    $region39: #{lstm_model_forward.1} parent=1 // pred_check_branch
      %68 = sbr.rel (0) target = $region41
    $region40: #{lstm_model_forward.1} parent=1 // pred_region
      %70 = dma.done [#allocation3], 4096
    $region41: #{lstm_model_forward.1} parent=1 // pred_fallthru
      _
    // Predicated region
    $region42: #{lstm_model_forward.1} parent=1 // pred_check
      _
    $region43: #{lstm_model_forward.1} parent=1 // pred_check_branch
      %72 = sbr.rel (0) target = $region45
    $region44: #{lstm_model_forward.1} parent=1 // pred_region
      %74 = dma.done [#allocation5], 4096
    $region45: #{lstm_model_forward.1} parent=1 // pred_fallthru
      _
    // Predicated region
    $region46: #{lstm_model_forward.1} parent=1 // pred_check
      _
    $region47: #{lstm_model_forward.1} parent=1 // pred_check_branch
      %76 = sbr.rel (0) target = $region49
    $region48: #{lstm_model_forward.1} parent=1 // pred_region
      %78 = dma.done [#allocation5], 4096
    $region49: #{lstm_model_forward.1} parent=1 // pred_fallthru
      _
    %v80 = vld [vmem:[%s0] sm:$0xf]
    %v81 = vld [vmem:[%s0 + $0x4] sm:$0xf]
    %v82 = vld [vmem:[%s0 + $0x8] sm:$0xf]
    %v83 = vld [vmem:[%s0 + $0xc] sm:$0xf]
    %v84 = vld [vmem:[%s0 + $0x10] sm:$0xf]
    %v85 = vld [vmem:[%s0 + $0x14] sm:$0xf]
    %v86 = vld [vmem:[%s0 + $0x18] sm:$0xf]
    %v87 = vld [vmem:[%s0 + $0x1c] sm:$0xf]
    %v88 = vld [vmem:[%s1] sm:$0xff]
    %v89 = vld [vmem:[%s1 + $0x8] sm:$0xff]
    %v90 = vld [vmem:[%s1 + $0x10] sm:$0xff]
    %v91 = vld [vmem:[%s1 + $0x18] sm:$0xff]
    %v92 = vld [vmem:[%s3] sm:$0xf]
    %v94 = vperm.slane %v92, 0
    %v95 = vperm.slane %v92, 1
    %v96 = vperm.slane %v92, 2
    %v97 = vperm.slane %v92, 3
    %v110 = vunpack.c.l.b16 %v80
    %v111 = vunpack.c.l.b16 %v81
    %v112 = vunpack.c.l.b16 %v82
    %v113 = vunpack.c.l.b16 %v83
    %v114 = vunpack.c.l.b16 %v84
    %v115 = vunpack.c.l.b16 %v85
    %v116 = vunpack.c.l.b16 %v86
    %v117 = vunpack.c.l.b16 %v87
    %v118 = vpack.c.b16 %v111, %v110
    %v119 = vpack.c.b16 %v113, %v112
    %v120 = vpack.c.b16 %v115, %v114
    %v121 = vpack.c.b16 %v117, %v116
    %v126 = vunpack.c.l.b16 %v88
    %v127 = vunpack.c.h.b16 %v88
    %v128 = vunpack.c.l.b16 %v89
    %v129 = vunpack.c.h.b16 %v89
    %v130 = vunpack.c.l.b16 %v90
    %v131 = vunpack.c.h.b16 %v90
    %v132 = vunpack.c.l.b16 %v91
    %v133 = vunpack.c.h.b16 %v91
    %v134 = vpack.c.b16 %v130, %v126
    %v135 = vpack.c.b16 %v131, %v127
    %v136 = vpack.c.b16 %v132, %v128
    %v137 = vpack.c.b16 %v133, %v129
    %vm142 = vcmask 130048
    %v144 = vsel %vm142, %v118, 0
    %v147 = vsel %vm142, %v119, 0
    %v150 = vsel %vm142, %v120, 0
    %v153 = vsel %vm142, %v121, 0
    %155 = vmatpush.bf16.msra.mxu0 0
    %156 = vmatpush.bf16.msra.mxu0 0
    %157 = vmatpush.bf16.msra.mxu0 0
    %158 = vmatpush.bf16.msra.mxu0 0
    %159 = vmatpush.bf16.msra.mxu0 0
    %160 = vmatpush.bf16.msra.mxu0 0
    %161 = vmatpush.bf16.msra.mxu0 0
    %162 = vmatpush.bf16.msra.mxu0 %v134
    %163 = vmatmul.bf16.gmra.mxu0 %v144
    %v164 = vpop.f32.mrf.mxu0
    %v165 = vadd.f32 %v94, %v164
    %v166 = vpop.f32.mrf.mxu0
    %v167 = vadd.f32 %v94, %v166
    %168 = vmatmul.bf16.gmra.mxu0 %v147
    %v169 = vpop.f32.mrf.mxu0
    %v170 = vadd.f32 %v94, %v169
    %v171 = vpop.f32.mrf.mxu0
    %v172 = vadd.f32 %v94, %v171
    %173 = vmatmul.bf16.gmra.mxu0 %v150
    %v174 = vpop.f32.mrf.mxu0
    %v175 = vadd.f32 %v94, %v174
    %v176 = vpop.f32.mrf.mxu0
    %v177 = vadd.f32 %v94, %v176
    %178 = vmatmul.bf16.gmra.mxu0 %v153
    %v179 = vpop.f32.mrf.mxu0
    %v180 = vadd.f32 %v94, %v179
    %v181 = vpop.f32.mrf.mxu0
    %v182 = vadd.f32 %v94, %v181
    %183 = vdwg.mxu0
    %184 = vmatpush.bf16.msra.mxu0 0
    %185 = vmatpush.bf16.msra.mxu0 0
    %186 = vmatpush.bf16.msra.mxu0 0
    %187 = vmatpush.bf16.msra.mxu0 0
    %188 = vmatpush.bf16.msra.mxu0 0
    %189 = vmatpush.bf16.msra.mxu0 0
    %190 = vmatpush.bf16.msra.mxu0 0
    %191 = vmatpush.bf16.msra.mxu0 %v135
    %192 = vmatmul.bf16.gmra.mxu0 %v144
    %v193 = vpop.f32.mrf.mxu0
    %v194 = vadd.f32 %v95, %v193
    %v195 = vpop.f32.mrf.mxu0
    %v196 = vadd.f32 %v95, %v195
    %197 = vmatmul.bf16.gmra.mxu0 %v147
    %v198 = vpop.f32.mrf.mxu0
    %v199 = vadd.f32 %v95, %v198
    %v200 = vpop.f32.mrf.mxu0
    %v201 = vadd.f32 %v95, %v200
    %202 = vmatmul.bf16.gmra.mxu0 %v150
    %v203 = vpop.f32.mrf.mxu0
    %v204 = vadd.f32 %v95, %v203
    %v205 = vpop.f32.mrf.mxu0
    %v206 = vadd.f32 %v95, %v205
    %207 = vmatmul.bf16.gmra.mxu0 %v153
    %v208 = vpop.f32.mrf.mxu0
    %v209 = vadd.f32 %v95, %v208
    %v210 = vpop.f32.mrf.mxu0
    %v211 = vadd.f32 %v95, %v210
    %212 = vdwg.mxu0
    %213 = vmatpush.bf16.msra.mxu0 0
    %214 = vmatpush.bf16.msra.mxu0 0
    %215 = vmatpush.bf16.msra.mxu0 0
    %216 = vmatpush.bf16.msra.mxu0 0
    %217 = vmatpush.bf16.msra.mxu0 0
    %218 = vmatpush.bf16.msra.mxu0 0
    %219 = vmatpush.bf16.msra.mxu0 0
    %220 = vmatpush.bf16.msra.mxu0 %v136
    %221 = vmatmul.bf16.gmra.mxu0 %v144
    %v222 = vpop.f32.mrf.mxu0
    %v223 = vadd.f32 %v96, %v222
    %v224 = vpop.f32.mrf.mxu0
    %v225 = vadd.f32 %v96, %v224
    %226 = vmatmul.bf16.gmra.mxu0 %v147
    %v227 = vpop.f32.mrf.mxu0
    %v228 = vadd.f32 %v96, %v227
    %v229 = vpop.f32.mrf.mxu0
    %v230 = vadd.f32 %v96, %v229
    %231 = vmatmul.bf16.gmra.mxu0 %v150
    %v232 = vpop.f32.mrf.mxu0
    %v233 = vadd.f32 %v96, %v232
    %v234 = vpop.f32.mrf.mxu0
    %v235 = vadd.f32 %v96, %v234
    %236 = vmatmul.bf16.gmra.mxu0 %v153
    %v237 = vpop.f32.mrf.mxu0
    %v238 = vadd.f32 %v96, %v237
    %v239 = vpop.f32.mrf.mxu0
    %v240 = vadd.f32 %v96, %v239
    %241 = vdwg.mxu0
    %242 = vmatpush.bf16.msra.mxu0 0
    %243 = vmatpush.bf16.msra.mxu0 0
    %244 = vmatpush.bf16.msra.mxu0 0
    %245 = vmatpush.bf16.msra.mxu0 0
    %246 = vmatpush.bf16.msra.mxu0 0
    %247 = vmatpush.bf16.msra.mxu0 0
    %248 = vmatpush.bf16.msra.mxu0 0
    %249 = vmatpush.bf16.msra.mxu0 %v137
    %250 = vmatmul.bf16.gmra.mxu0 %v144
    %v251 = vpop.f32.mrf.mxu0
    %v252 = vadd.f32 %v97, %v251
    %v253 = vpop.f32.mrf.mxu0
    %v254 = vadd.f32 %v97, %v253
    %255 = vmatmul.bf16.gmra.mxu0 %v147
    %v256 = vpop.f32.mrf.mxu0
    %v257 = vadd.f32 %v97, %v256
    %v258 = vpop.f32.mrf.mxu0
    %v259 = vadd.f32 %v97, %v258
    %260 = vmatmul.bf16.gmra.mxu0 %v150
    %v261 = vpop.f32.mrf.mxu0
    %v262 = vadd.f32 %v97, %v261
    %v263 = vpop.f32.mrf.mxu0
    %v264 = vadd.f32 %v97, %v263
    %265 = vmatmul.bf16.gmra.mxu0 %v153
    %v266 = vpop.f32.mrf.mxu0
    %v267 = vadd.f32 %v97, %v266
    %v268 = vpop.f32.mrf.mxu0
    %v269 = vadd.f32 %v97, %v268
    %270 = vdwg.mxu0
    %v271 = vld [vmem:[#allocation2] sm:$0xff]
    %v272 = vld [vmem:[#allocation2 + $0x8] sm:$0xff]
    %v273 = vld [vmem:[#allocation2 + $0x10] sm:$0xff]
    %v274 = vld [vmem:[#allocation2 + $0x18] sm:$0xff]
    %v275 = vld [vmem:[#allocation2 + $0x20] sm:$0xff]
    %v276 = vld [vmem:[#allocation2 + $0x28] sm:$0xff]
    %v277 = vld [vmem:[#allocation2 + $0x30] sm:$0xff]
    %v278 = vld [vmem:[#allocation2 + $0x38] sm:$0xff]
    %v279 = vld [vmem:[#allocation2 + $0x40] sm:$0xff]
    %v280 = vld [vmem:[#allocation2 + $0x48] sm:$0xff]
    %v281 = vld [vmem:[#allocation2 + $0x50] sm:$0xff]
    %v282 = vld [vmem:[#allocation2 + $0x58] sm:$0xff]
    %v283 = vld [vmem:[#allocation2 + $0x60] sm:$0xff]
    %v284 = vld [vmem:[#allocation2 + $0x68] sm:$0xff]
    %v285 = vld [vmem:[#allocation2 + $0x70] sm:$0xff]
    %v286 = vld [vmem:[#allocation2 + $0x78] sm:$0xff]
    %v287 = vld [vmem:[#allocation2 + $0x80] sm:$0xff]
    %v288 = vld [vmem:[#allocation2 + $0x88] sm:$0xff]
    %v289 = vld [vmem:[#allocation2 + $0x90] sm:$0xff]
    %v290 = vld [vmem:[#allocation2 + $0x98] sm:$0xff]
    %v291 = vld [vmem:[#allocation2 + $0xa0] sm:$0xff]
    %v292 = vld [vmem:[#allocation2 + $0xa8] sm:$0xff]
    %v293 = vld [vmem:[#allocation2 + $0xb0] sm:$0xff]
    %v294 = vld [vmem:[#allocation2 + $0xb8] sm:$0xff]
    %v295 = vld [vmem:[#allocation2 + $0xc0] sm:$0xff]
    %v296 = vld [vmem:[#allocation2 + $0xc8] sm:$0xff]
    %v297 = vld [vmem:[#allocation2 + $0xd0] sm:$0xff]
    %v298 = vld [vmem:[#allocation2 + $0xd8] sm:$0xff]
    %v299 = vld [vmem:[#allocation2 + $0xe0] sm:$0xff]
    %v300 = vld [vmem:[#allocation2 + $0xe8] sm:$0xff]
    %v301 = vld [vmem:[#allocation2 + $0xf0] sm:$0xff]
    %v302 = vld [vmem:[#allocation2 + $0xf8] sm:$0xff]
    %v303 = vld [vmem:[#allocation6] sm:$0xff]
    %v304 = vld [vmem:[#allocation6 + $0x8] sm:$0xff]
    %v305 = vld [vmem:[#allocation6 + $0x10] sm:$0xff]
    %v306 = vld [vmem:[#allocation6 + $0x18] sm:$0xff]
    %v307 = vld [vmem:[#allocation6 + $0x20] sm:$0xff]
    %v308 = vld [vmem:[#allocation6 + $0x28] sm:$0xff]
    %v309 = vld [vmem:[#allocation6 + $0x30] sm:$0xff]
    %v310 = vld [vmem:[#allocation6 + $0x38] sm:$0xff]
    %v311 = vld [vmem:[#allocation6 + $0x40] sm:$0xff]
    %v312 = vld [vmem:[#allocation6 + $0x48] sm:$0xff]
    %v313 = vld [vmem:[#allocation6 + $0x50] sm:$0xff]
    %v314 = vld [vmem:[#allocation6 + $0x58] sm:$0xff]
    %v315 = vld [vmem:[#allocation6 + $0x60] sm:$0xff]
    %v316 = vld [vmem:[#allocation6 + $0x68] sm:$0xff]
    %v317 = vld [vmem:[#allocation6 + $0x70] sm:$0xff]
    %v318 = vld [vmem:[#allocation6 + $0x78] sm:$0xff]
    %v319 = vld [vmem:[#allocation6 + $0x80] sm:$0xff]
    %v320 = vld [vmem:[#allocation6 + $0x88] sm:$0xff]
    %v321 = vld [vmem:[#allocation6 + $0x90] sm:$0xff]
    %v322 = vld [vmem:[#allocation6 + $0x98] sm:$0xff]
    %v323 = vld [vmem:[#allocation6 + $0xa0] sm:$0xff]
    %v324 = vld [vmem:[#allocation6 + $0xa8] sm:$0xff]
    %v325 = vld [vmem:[#allocation6 + $0xb0] sm:$0xff]
    %v326 = vld [vmem:[#allocation6 + $0xb8] sm:$0xff]
    %v327 = vld [vmem:[#allocation6 + $0xc0] sm:$0xff]
    %v328 = vld [vmem:[#allocation6 + $0xc8] sm:$0xff]
    %v329 = vld [vmem:[#allocation6 + $0xd0] sm:$0xff]
    %v330 = vld [vmem:[#allocation6 + $0xd8] sm:$0xff]
    %v331 = vld [vmem:[#allocation6 + $0xe0] sm:$0xff]
    %v332 = vld [vmem:[#allocation6 + $0xe8] sm:$0xff]
    %v333 = vld [vmem:[#allocation6 + $0xf0] sm:$0xff]
    %v334 = vld [vmem:[#allocation6 + $0xf8] sm:$0xff]
    %v335 = vld [vmem:[#allocation4] sm:$0xff]
    %v336 = vld [vmem:[#allocation4 + $0x8] sm:$0xff]
    %v337 = vld [vmem:[#allocation4 + $0x10] sm:$0xff]
    %v338 = vld [vmem:[#allocation4 + $0x18] sm:$0xff]
    %v339 = vld [vmem:[#allocation4 + $0x20] sm:$0xff]
    %v340 = vld [vmem:[#allocation4 + $0x28] sm:$0xff]
    %v341 = vld [vmem:[#allocation4 + $0x30] sm:$0xff]
    %v342 = vld [vmem:[#allocation4 + $0x38] sm:$0xff]
    %v343 = vld [vmem:[#allocation4 + $0x40] sm:$0xff]
    %v344 = vld [vmem:[#allocation4 + $0x48] sm:$0xff]
    %v345 = vld [vmem:[#allocation4 + $0x50] sm:$0xff]
    %v346 = vld [vmem:[#allocation4 + $0x58] sm:$0xff]
    %v347 = vld [vmem:[#allocation4 + $0x60] sm:$0xff]
    %v348 = vld [vmem:[#allocation4 + $0x68] sm:$0xff]
    %v349 = vld [vmem:[#allocation4 + $0x70] sm:$0xff]
    %v350 = vld [vmem:[#allocation4 + $0x78] sm:$0xff]
    %v351 = vld [vmem:[#allocation4 + $0x80] sm:$0xff]
    %v352 = vld [vmem:[#allocation4 + $0x88] sm:$0xff]
    %v353 = vld [vmem:[#allocation4 + $0x90] sm:$0xff]
    %v354 = vld [vmem:[#allocation4 + $0x98] sm:$0xff]
    %v355 = vld [vmem:[#allocation4 + $0xa0] sm:$0xff]
    %v356 = vld [vmem:[#allocation4 + $0xa8] sm:$0xff]
    %v357 = vld [vmem:[#allocation4 + $0xb0] sm:$0xff]
    %v358 = vld [vmem:[#allocation4 + $0xb8] sm:$0xff]
    %v359 = vld [vmem:[#allocation4 + $0xc0] sm:$0xff]
    %v360 = vld [vmem:[#allocation4 + $0xc8] sm:$0xff]
    %v361 = vld [vmem:[#allocation4 + $0xd0] sm:$0xff]
    %v362 = vld [vmem:[#allocation4 + $0xd8] sm:$0xff]
    %v363 = vld [vmem:[#allocation4 + $0xe0] sm:$0xff]
    %v364 = vld [vmem:[#allocation4 + $0xe8] sm:$0xff]
    %v365 = vld [vmem:[#allocation4 + $0xf0] sm:$0xff]
    %v366 = vld [vmem:[#allocation4 + $0xf8] sm:$0xff]
    %v367 = vld [vmem:[%s6] sm:$0xf]
    %v400 = vunpack.c.l.b16 %v271
    %v401 = vunpack.c.h.b16 %v271
    %v402 = vunpack.c.l.b16 %v272
    %v403 = vunpack.c.h.b16 %v272
    %v404 = vunpack.c.l.b16 %v273
    %v405 = vunpack.c.h.b16 %v273
    %v406 = vunpack.c.l.b16 %v274
    %v407 = vunpack.c.h.b16 %v274
    %v408 = vunpack.c.l.b16 %v275
    %v409 = vunpack.c.h.b16 %v275
    %v410 = vunpack.c.l.b16 %v276
    %v411 = vunpack.c.h.b16 %v276
    %v412 = vunpack.c.l.b16 %v277
    %v413 = vunpack.c.h.b16 %v277
    %v414 = vunpack.c.l.b16 %v278
    %v415 = vunpack.c.h.b16 %v278
    %v416 = vunpack.c.l.b16 %v279
    %v417 = vunpack.c.h.b16 %v279
    %v418 = vunpack.c.l.b16 %v280
    %v419 = vunpack.c.h.b16 %v280
    %v420 = vunpack.c.l.b16 %v281
    %v421 = vunpack.c.h.b16 %v281
    %v422 = vunpack.c.l.b16 %v282
    %v423 = vunpack.c.h.b16 %v282
    %v424 = vunpack.c.l.b16 %v283
    %v425 = vunpack.c.h.b16 %v283
    %v426 = vunpack.c.l.b16 %v284
    %v427 = vunpack.c.h.b16 %v284
    %v428 = vunpack.c.l.b16 %v285
    %v429 = vunpack.c.h.b16 %v285
    %v430 = vunpack.c.l.b16 %v286
    %v431 = vunpack.c.h.b16 %v286
    %v432 = vunpack.c.l.b16 %v287
    %v433 = vunpack.c.h.b16 %v287
    %v434 = vunpack.c.l.b16 %v288
    %v435 = vunpack.c.h.b16 %v288
    %v436 = vunpack.c.l.b16 %v289
    %v437 = vunpack.c.h.b16 %v289
    %v438 = vunpack.c.l.b16 %v290
    %v439 = vunpack.c.h.b16 %v290
    %v440 = vunpack.c.l.b16 %v291
    %v441 = vunpack.c.h.b16 %v291
    %v442 = vunpack.c.l.b16 %v292
    %v443 = vunpack.c.h.b16 %v292
    %v444 = vunpack.c.l.b16 %v293
    %v445 = vunpack.c.h.b16 %v293
    %v446 = vunpack.c.l.b16 %v294
    %v447 = vunpack.c.h.b16 %v294
    %v448 = vunpack.c.l.b16 %v295
    %v449 = vunpack.c.h.b16 %v295
    %v450 = vunpack.c.l.b16 %v296
    %v451 = vunpack.c.h.b16 %v296
    %v452 = vunpack.c.l.b16 %v297
    %v453 = vunpack.c.h.b16 %v297
    %v454 = vunpack.c.l.b16 %v298
    %v455 = vunpack.c.h.b16 %v298
    %v456 = vunpack.c.l.b16 %v299
    %v457 = vunpack.c.h.b16 %v299
    %v458 = vunpack.c.l.b16 %v300
    %v459 = vunpack.c.h.b16 %v300
    %v460 = vunpack.c.l.b16 %v301
    %v461 = vunpack.c.h.b16 %v301
    %v462 = vunpack.c.l.b16 %v302
    %v463 = vunpack.c.h.b16 %v302
    %v464 = vpack.c.b16 %v404, %v400
    %v465 = vpack.c.b16 %v405, %v401
    %v466 = vpack.c.b16 %v406, %v402
    %v467 = vpack.c.b16 %v407, %v403
    %v468 = vpack.c.b16 %v412, %v408
    %v469 = vpack.c.b16 %v413, %v409
    %v470 = vpack.c.b16 %v414, %v410
    %v471 = vpack.c.b16 %v415, %v411
    %v472 = vpack.c.b16 %v420, %v416
    %v473 = vpack.c.b16 %v421, %v417
    %v474 = vpack.c.b16 %v422, %v418
    %v475 = vpack.c.b16 %v423, %v419
    %v476 = vpack.c.b16 %v428, %v424
    %v477 = vpack.c.b16 %v429, %v425
    %v478 = vpack.c.b16 %v430, %v426
    %v479 = vpack.c.b16 %v431, %v427
    %v480 = vpack.c.b16 %v436, %v432
    %v481 = vpack.c.b16 %v437, %v433
    %v482 = vpack.c.b16 %v438, %v434
    %v483 = vpack.c.b16 %v439, %v435
    %v484 = vpack.c.b16 %v444, %v440
    %v485 = vpack.c.b16 %v445, %v441
    %v486 = vpack.c.b16 %v446, %v442
    %v487 = vpack.c.b16 %v447, %v443
    %v488 = vpack.c.b16 %v452, %v448
    %v489 = vpack.c.b16 %v453, %v449
    %v490 = vpack.c.b16 %v454, %v450
    %v491 = vpack.c.b16 %v455, %v451
    %v492 = vpack.c.b16 %v460, %v456
    %v493 = vpack.c.b16 %v461, %v457
    %v494 = vpack.c.b16 %v462, %v458
    %v495 = vpack.c.b16 %v463, %v459
    %528 = vmatpush.bf16.msra.mxu0 %v492
    %529 = vmatpush.bf16.msra.mxu0 %v488
    %530 = vmatpush.bf16.msra.mxu0 %v484
    %531 = vmatpush.bf16.msra.mxu0 %v480
    %532 = vmatpush.bf16.msra.mxu0 %v476
    %533 = vmatpush.bf16.msra.mxu0 %v472
    %534 = vmatpush.bf16.msra.mxu0 %v468
    %535 = vmatpush.bf16.msra.mxu0 %v464
    %536 = vmatmul.bf16.gmra.mxu0 0
    %v537 = vpop.f32.mrf.mxu0
    %v538 = vadd.f32 0.0, %v537
    %v539 = vpop.f32.mrf.mxu0
    %540 = vdwg.mxu0
    %541 = vmatpush.bf16.msra.mxu0 %v493
    %542 = vmatpush.bf16.msra.mxu0 %v489
    %543 = vmatpush.bf16.msra.mxu0 %v485
    %544 = vmatpush.bf16.msra.mxu0 %v481
    %545 = vmatpush.bf16.msra.mxu0 %v477
    %546 = vmatpush.bf16.msra.mxu0 %v473
    %547 = vmatpush.bf16.msra.mxu0 %v469
    %548 = vmatpush.bf16.msra.mxu0 %v465
    %549 = vmatmul.bf16.gmra.mxu0 0
    %v550 = vpop.f32.mrf.mxu0
    %v551 = vadd.f32 0.0, %v550
    %v552 = vpop.f32.mrf.mxu0
    %553 = vdwg.mxu0
    %554 = vmatpush.bf16.msra.mxu0 %v494
    %555 = vmatpush.bf16.msra.mxu0 %v490
    %556 = vmatpush.bf16.msra.mxu0 %v486
    %557 = vmatpush.bf16.msra.mxu0 %v482
    %558 = vmatpush.bf16.msra.mxu0 %v478
    %559 = vmatpush.bf16.msra.mxu0 %v474
    %560 = vmatpush.bf16.msra.mxu0 %v470
    %561 = vmatpush.bf16.msra.mxu0 %v466
    %562 = vmatmul.bf16.gmra.mxu0 0
    %v563 = vpop.f32.mrf.mxu0
    %v564 = vadd.f32 0.0, %v563
    %v565 = vpop.f32.mrf.mxu0
    %566 = vdwg.mxu0
    %567 = vmatpush.bf16.msra.mxu0 %v495
    %568 = vmatpush.bf16.msra.mxu0 %v491
    %569 = vmatpush.bf16.msra.mxu0 %v487
    %570 = vmatpush.bf16.msra.mxu0 %v483
    %571 = vmatpush.bf16.msra.mxu0 %v479
    %572 = vmatpush.bf16.msra.mxu0 %v475
    %573 = vmatpush.bf16.msra.mxu0 %v471
    %574 = vmatpush.bf16.msra.mxu0 %v467
    %575 = vmatmul.bf16.gmra.mxu0 0
    %v576 = vpop.f32.mrf.mxu0
    %v577 = vadd.f32 0.0, %v576
    %v578 = vpop.f32.mrf.mxu0
    %579 = vdwg.mxu0
    %v580 = vadd.f32 %v165, %v538
    %v581 = vadd.f32 %v194, %v551
    %v582 = vadd.f32 %v223, %v564
    %v583 = vadd.f32 %v252, %v577
    %v584 = vmul.f32 %v580, 0.5
    %v585 = vtanh.pop %v584
    %v586 = vmul.f32 %v585, 0.5
    %v587 = vadd.f32 %v586, 0.5
    %v588 = vmul.f32 %v581, 0.5
    %v589 = vtanh.pop %v588
    %v590 = vmul.f32 %v589, 0.5
    %v591 = vadd.f32 %v590, 0.5
    %v592 = vtanh.pop %v582
    %v593 = vmul.f32 %v583, 0.5
    %v594 = vtanh.pop %v593
    %v595 = vmul.f32 %v594, 0.5
    %v596 = vadd.f32 %v595, 0.5
    %v597 = vmul.f32 %v591, 0.0
    %v598 = vmul.f32 %v587, %v592
    %v599 = vadd.f32 %v597, %v598
    %v600 = vtanh.pop %v599
    %v601 = vmul.f32 %v596, %v600
    %v602 = vpack.c.bf16 %v601, %v601
    %v604 = vperm.slane %v367, 0
    %v605 = vperm.slane %v367, 1
    %v606 = vperm.slane %v367, 2
    %v607 = vperm.slane %v367, 3
    %v644 = vunpack.c.l.b16 %v335
    %v645 = vunpack.c.h.b16 %v335
    %v646 = vunpack.c.l.b16 %v336
    %v647 = vunpack.c.h.b16 %v336
    %v648 = vunpack.c.l.b16 %v337
    %v649 = vunpack.c.h.b16 %v337
    %v650 = vunpack.c.l.b16 %v338
    %v651 = vunpack.c.h.b16 %v338
    %v652 = vunpack.c.l.b16 %v339
    %v653 = vunpack.c.h.b16 %v339
    %v654 = vunpack.c.l.b16 %v340
    %v655 = vunpack.c.h.b16 %v340
    %v656 = vunpack.c.l.b16 %v341
    %v657 = vunpack.c.h.b16 %v341
    %v658 = vunpack.c.l.b16 %v342
    %v659 = vunpack.c.h.b16 %v342
    %v660 = vunpack.c.l.b16 %v343
    %v661 = vunpack.c.h.b16 %v343
    %v662 = vunpack.c.l.b16 %v344
    %v663 = vunpack.c.h.b16 %v344
    %v664 = vunpack.c.l.b16 %v345
    %v665 = vunpack.c.h.b16 %v345
    %v666 = vunpack.c.l.b16 %v346
    %v667 = vunpack.c.h.b16 %v346
    %v668 = vunpack.c.l.b16 %v347
    %v669 = vunpack.c.h.b16 %v347
    %v670 = vunpack.c.l.b16 %v348
    %v671 = vunpack.c.h.b16 %v348
    %v672 = vunpack.c.l.b16 %v349
    %v673 = vunpack.c.h.b16 %v349
    %v674 = vunpack.c.l.b16 %v350
    %v675 = vunpack.c.h.b16 %v350
    %v676 = vunpack.c.l.b16 %v351
    %v677 = vunpack.c.h.b16 %v351
    %v678 = vunpack.c.l.b16 %v352
    %v679 = vunpack.c.h.b16 %v352
    %v680 = vunpack.c.l.b16 %v353
    %v681 = vunpack.c.h.b16 %v353
    %v682 = vunpack.c.l.b16 %v354
    %v683 = vunpack.c.h.b16 %v354
    %v684 = vunpack.c.l.b16 %v355
    %v685 = vunpack.c.h.b16 %v355
    %v686 = vunpack.c.l.b16 %v356
    %v687 = vunpack.c.h.b16 %v356
    %v688 = vunpack.c.l.b16 %v357
    %v689 = vunpack.c.h.b16 %v357
    %v690 = vunpack.c.l.b16 %v358
    %v691 = vunpack.c.h.b16 %v358
    %v692 = vunpack.c.l.b16 %v359
    %v693 = vunpack.c.h.b16 %v359
    %v694 = vunpack.c.l.b16 %v360
    %v695 = vunpack.c.h.b16 %v360
    %v696 = vunpack.c.l.b16 %v361
    %v697 = vunpack.c.h.b16 %v361
    %v698 = vunpack.c.l.b16 %v362
    %v699 = vunpack.c.h.b16 %v362
    %v700 = vunpack.c.l.b16 %v363
    %v701 = vunpack.c.h.b16 %v363
    %v702 = vunpack.c.l.b16 %v364
    %v703 = vunpack.c.h.b16 %v364
    %v704 = vunpack.c.l.b16 %v365
    %v705 = vunpack.c.h.b16 %v365
    %v706 = vunpack.c.l.b16 %v366
    %v707 = vunpack.c.h.b16 %v366
    %v708 = vpack.c.b16 %v648, %v644
    %v709 = vpack.c.b16 %v649, %v645
    %v710 = vpack.c.b16 %v650, %v646
    %v711 = vpack.c.b16 %v651, %v647
    %v712 = vpack.c.b16 %v656, %v652
    %v713 = vpack.c.b16 %v657, %v653
    %v714 = vpack.c.b16 %v658, %v654
    %v715 = vpack.c.b16 %v659, %v655
    %v716 = vpack.c.b16 %v664, %v660
    %v717 = vpack.c.b16 %v665, %v661
    %v718 = vpack.c.b16 %v666, %v662
    %v719 = vpack.c.b16 %v667, %v663
    %v720 = vpack.c.b16 %v672, %v668
    %v721 = vpack.c.b16 %v673, %v669
    %v722 = vpack.c.b16 %v674, %v670
    %v723 = vpack.c.b16 %v675, %v671
    %v724 = vpack.c.b16 %v680, %v676
    %v725 = vpack.c.b16 %v681, %v677
    %v726 = vpack.c.b16 %v682, %v678
    %v727 = vpack.c.b16 %v683, %v679
    %v728 = vpack.c.b16 %v688, %v684
    %v729 = vpack.c.b16 %v689, %v685
    %v730 = vpack.c.b16 %v690, %v686
    %v731 = vpack.c.b16 %v691, %v687
    %v732 = vpack.c.b16 %v696, %v692
    %v733 = vpack.c.b16 %v697, %v693
    %v734 = vpack.c.b16 %v698, %v694
    %v735 = vpack.c.b16 %v699, %v695
    %v736 = vpack.c.b16 %v704, %v700
    %v737 = vpack.c.b16 %v705, %v701
    %v738 = vpack.c.b16 %v706, %v702
    %v739 = vpack.c.b16 %v707, %v703
    %772 = vmatpush.bf16.msra.mxu0 %v736
    %773 = vmatpush.bf16.msra.mxu0 %v732
    %774 = vmatpush.bf16.msra.mxu0 %v728
    %775 = vmatpush.bf16.msra.mxu0 %v724
    %776 = vmatpush.bf16.msra.mxu0 %v720
    %777 = vmatpush.bf16.msra.mxu0 %v716
    %778 = vmatpush.bf16.msra.mxu0 %v712
    %779 = vmatpush.bf16.msra.mxu0 %v708
    %780 = vmatmul.bf16.gmra.mxu0 %v602
    %v781 = vpop.f32.mrf.mxu0
    %v782 = vadd.f32 %v604, %v781
    %v783 = vpop.f32.mrf.mxu0
    %784 = vdwg.mxu0
    %785 = vmatpush.bf16.msra.mxu0 %v737
    %786 = vmatpush.bf16.msra.mxu0 %v733
    %787 = vmatpush.bf16.msra.mxu0 %v729
    %788 = vmatpush.bf16.msra.mxu0 %v725
    %789 = vmatpush.bf16.msra.mxu0 %v721
    %790 = vmatpush.bf16.msra.mxu0 %v717
    %791 = vmatpush.bf16.msra.mxu0 %v713
    %792 = vmatpush.bf16.msra.mxu0 %v709
    %793 = vmatmul.bf16.gmra.mxu0 %v602
    %v794 = vpop.f32.mrf.mxu0
    %v795 = vadd.f32 %v605, %v794
    %v796 = vpop.f32.mrf.mxu0
    %797 = vdwg.mxu0
    %798 = vmatpush.bf16.msra.mxu0 %v738
    %799 = vmatpush.bf16.msra.mxu0 %v734
    %800 = vmatpush.bf16.msra.mxu0 %v730
    %801 = vmatpush.bf16.msra.mxu0 %v726
    %802 = vmatpush.bf16.msra.mxu0 %v722
    %803 = vmatpush.bf16.msra.mxu0 %v718
    %804 = vmatpush.bf16.msra.mxu0 %v714
    %805 = vmatpush.bf16.msra.mxu0 %v710
    %806 = vmatmul.bf16.gmra.mxu0 %v602
    %v807 = vpop.f32.mrf.mxu0
    %v808 = vadd.f32 %v606, %v807
    %v809 = vpop.f32.mrf.mxu0
    %810 = vdwg.mxu0
    %811 = vmatpush.bf16.msra.mxu0 %v739
    %812 = vmatpush.bf16.msra.mxu0 %v735
    %813 = vmatpush.bf16.msra.mxu0 %v731
    %814 = vmatpush.bf16.msra.mxu0 %v727
    %815 = vmatpush.bf16.msra.mxu0 %v723
    %816 = vmatpush.bf16.msra.mxu0 %v719
    %817 = vmatpush.bf16.msra.mxu0 %v715
    %818 = vmatpush.bf16.msra.mxu0 %v711
    %819 = vmatmul.bf16.gmra.mxu0 %v602
    %v820 = vpop.f32.mrf.mxu0
    %v821 = vadd.f32 %v607, %v820
    %v822 = vpop.f32.mrf.mxu0
    %823 = vdwg.mxu0
    %v856 = vunpack.c.l.b16 %v303
    %v857 = vunpack.c.h.b16 %v303
    %v858 = vunpack.c.l.b16 %v304
    %v859 = vunpack.c.h.b16 %v304
    %v860 = vunpack.c.l.b16 %v305
    %v861 = vunpack.c.h.b16 %v305
    %v862 = vunpack.c.l.b16 %v306
    %v863 = vunpack.c.h.b16 %v306
    %v864 = vunpack.c.l.b16 %v307
    %v865 = vunpack.c.h.b16 %v307
    %v866 = vunpack.c.l.b16 %v308
    %v867 = vunpack.c.h.b16 %v308
    %v868 = vunpack.c.l.b16 %v309
    %v869 = vunpack.c.h.b16 %v309
    %v870 = vunpack.c.l.b16 %v310
    %v871 = vunpack.c.h.b16 %v310
    %v872 = vunpack.c.l.b16 %v311
    %v873 = vunpack.c.h.b16 %v311
    %v874 = vunpack.c.l.b16 %v312
    %v875 = vunpack.c.h.b16 %v312
    %v876 = vunpack.c.l.b16 %v313
    %v877 = vunpack.c.h.b16 %v313
    %v878 = vunpack.c.l.b16 %v314
    %v879 = vunpack.c.h.b16 %v314
    %v880 = vunpack.c.l.b16 %v315
    %v881 = vunpack.c.h.b16 %v315
    %v882 = vunpack.c.l.b16 %v316
    %v883 = vunpack.c.h.b16 %v316
    %v884 = vunpack.c.l.b16 %v317
    %v885 = vunpack.c.h.b16 %v317
    %v886 = vunpack.c.l.b16 %v318
    %v887 = vunpack.c.h.b16 %v318
    %v888 = vunpack.c.l.b16 %v319
    %v889 = vunpack.c.h.b16 %v319
    %v890 = vunpack.c.l.b16 %v320
    %v891 = vunpack.c.h.b16 %v320
    %v892 = vunpack.c.l.b16 %v321
    %v893 = vunpack.c.h.b16 %v321
    %v894 = vunpack.c.l.b16 %v322
    %v895 = vunpack.c.h.b16 %v322
    %v896 = vunpack.c.l.b16 %v323
    %v897 = vunpack.c.h.b16 %v323
    %v898 = vunpack.c.l.b16 %v324
    %v899 = vunpack.c.h.b16 %v324
    %v900 = vunpack.c.l.b16 %v325
    %v901 = vunpack.c.h.b16 %v325
    %v902 = vunpack.c.l.b16 %v326
    %v903 = vunpack.c.h.b16 %v326
    %v904 = vunpack.c.l.b16 %v327
    %v905 = vunpack.c.h.b16 %v327
    %v906 = vunpack.c.l.b16 %v328
    %v907 = vunpack.c.h.b16 %v328
    %v908 = vunpack.c.l.b16 %v329
    %v909 = vunpack.c.h.b16 %v329
    %v910 = vunpack.c.l.b16 %v330
    %v911 = vunpack.c.h.b16 %v330
    %v912 = vunpack.c.l.b16 %v331
    %v913 = vunpack.c.h.b16 %v331
    %v914 = vunpack.c.l.b16 %v332
    %v915 = vunpack.c.h.b16 %v332
    %v916 = vunpack.c.l.b16 %v333
    %v917 = vunpack.c.h.b16 %v333
    %v918 = vunpack.c.l.b16 %v334
    %v919 = vunpack.c.h.b16 %v334
    %v920 = vpack.c.b16 %v860, %v856
    %v921 = vpack.c.b16 %v861, %v857
    %v922 = vpack.c.b16 %v862, %v858
    %v923 = vpack.c.b16 %v863, %v859
    %v924 = vpack.c.b16 %v868, %v864
    %v925 = vpack.c.b16 %v869, %v865
    %v926 = vpack.c.b16 %v870, %v866
    %v927 = vpack.c.b16 %v871, %v867
    %v928 = vpack.c.b16 %v876, %v872
    %v929 = vpack.c.b16 %v877, %v873
    %v930 = vpack.c.b16 %v878, %v874
    %v931 = vpack.c.b16 %v879, %v875
    %v932 = vpack.c.b16 %v884, %v880
    %v933 = vpack.c.b16 %v885, %v881
    %v934 = vpack.c.b16 %v886, %v882
    %v935 = vpack.c.b16 %v887, %v883
    %v936 = vpack.c.b16 %v892, %v888
    %v937 = vpack.c.b16 %v893, %v889
    %v938 = vpack.c.b16 %v894, %v890
    %v939 = vpack.c.b16 %v895, %v891
    %v940 = vpack.c.b16 %v900, %v896
    %v941 = vpack.c.b16 %v901, %v897
    %v942 = vpack.c.b16 %v902, %v898
    %v943 = vpack.c.b16 %v903, %v899
    %v944 = vpack.c.b16 %v908, %v904
    %v945 = vpack.c.b16 %v909, %v905
    %v946 = vpack.c.b16 %v910, %v906
    %v947 = vpack.c.b16 %v911, %v907
    %v948 = vpack.c.b16 %v916, %v912
    %v949 = vpack.c.b16 %v917, %v913
    %v950 = vpack.c.b16 %v918, %v914
    %v951 = vpack.c.b16 %v919, %v915
    %984 = vmatpush.bf16.msra.mxu0 %v948
    %985 = vmatpush.bf16.msra.mxu0 %v944
    %986 = vmatpush.bf16.msra.mxu0 %v940
    %987 = vmatpush.bf16.msra.mxu0 %v936
    %988 = vmatpush.bf16.msra.mxu0 %v932
    %989 = vmatpush.bf16.msra.mxu0 %v928
    %990 = vmatpush.bf16.msra.mxu0 %v924
    %991 = vmatpush.bf16.msra.mxu0 %v920
    %992 = vmatmul.bf16.gmra.mxu0 0
    %v993 = vpop.f32.mrf.mxu0
    %v994 = vadd.f32 0.0, %v993
    %v995 = vpop.f32.mrf.mxu0
    %996 = vdwg.mxu0
    %997 = vmatpush.bf16.msra.mxu0 %v949
    %998 = vmatpush.bf16.msra.mxu0 %v945
    %999 = vmatpush.bf16.msra.mxu0 %v941
    %1000 = vmatpush.bf16.msra.mxu0 %v937
    %1001 = vmatpush.bf16.msra.mxu0 %v933
    %1002 = vmatpush.bf16.msra.mxu0 %v929
    %1003 = vmatpush.bf16.msra.mxu0 %v925
    %1004 = vmatpush.bf16.msra.mxu0 %v921
    %1005 = vmatmul.bf16.gmra.mxu0 0
    %v1006 = vpop.f32.mrf.mxu0
    %v1007 = vadd.f32 0.0, %v1006
    %v1008 = vpop.f32.mrf.mxu0
    %1009 = vdwg.mxu0
    %1010 = vmatpush.bf16.msra.mxu0 %v950
    %1011 = vmatpush.bf16.msra.mxu0 %v946
    %1012 = vmatpush.bf16.msra.mxu0 %v942
    %1013 = vmatpush.bf16.msra.mxu0 %v938
    %1014 = vmatpush.bf16.msra.mxu0 %v934
    %1015 = vmatpush.bf16.msra.mxu0 %v930
    %1016 = vmatpush.bf16.msra.mxu0 %v926
    %1017 = vmatpush.bf16.msra.mxu0 %v922
    %1018 = vmatmul.bf16.gmra.mxu0 0
    %v1019 = vpop.f32.mrf.mxu0
    %v1020 = vadd.f32 0.0, %v1019
    %v1021 = vpop.f32.mrf.mxu0
    %1022 = vdwg.mxu0
    %1023 = vmatpush.bf16.msra.mxu0 %v951
    %1024 = vmatpush.bf16.msra.mxu0 %v947
    %1025 = vmatpush.bf16.msra.mxu0 %v943
    %1026 = vmatpush.bf16.msra.mxu0 %v939
    %1027 = vmatpush.bf16.msra.mxu0 %v935
    %1028 = vmatpush.bf16.msra.mxu0 %v931
    %1029 = vmatpush.bf16.msra.mxu0 %v927
    %1030 = vmatpush.bf16.msra.mxu0 %v923
    %1031 = vmatmul.bf16.gmra.mxu0 0
    %v1032 = vpop.f32.mrf.mxu0
    %v1033 = vadd.f32 0.0, %v1032
    %v1034 = vpop.f32.mrf.mxu0
    %1035 = vdwg.mxu0
    %v1036 = vadd.f32 %v782, %v994
    %v1037 = vadd.f32 %v795, %v1007
    %v1038 = vadd.f32 %v808, %v1020
    %v1039 = vadd.f32 %v821, %v1033
    %v1040 = vmul.f32 %v1036, 0.5
    %v1041 = vtanh.pop %v1040
    %v1042 = vmul.f32 %v1041, 0.5
    %v1043 = vadd.f32 %v1042, 0.5
    %v1044 = vmul.f32 %v1037, 0.5
    %v1045 = vtanh.pop %v1044
    %v1046 = vmul.f32 %v1045, 0.5
    %v1047 = vadd.f32 %v1046, 0.5
    %v1048 = vtanh.pop %v1038
    %v1049 = vmul.f32 %v1039, 0.5
    %v1050 = vtanh.pop %v1049
    %v1051 = vmul.f32 %v1050, 0.5
    %v1052 = vadd.f32 %v1051, 0.5
    %v1053 = vmul.f32 %v1047, 0.0
    %v1054 = vmul.f32 %v1043, %v1048
    %v1055 = vadd.f32 %v1053, %v1054
    %v1056 = vtanh.pop %v1055
    %v1057 = vmul.f32 %v1052, %v1056
    %1058 = vmatpush.bf16.msra.mxu0 %v492
    %1059 = vmatpush.bf16.msra.mxu0 %v488
    %1060 = vmatpush.bf16.msra.mxu0 %v484
    %1061 = vmatpush.bf16.msra.mxu0 %v480
    %1062 = vmatpush.bf16.msra.mxu0 %v476
    %1063 = vmatpush.bf16.msra.mxu0 %v472
    %1064 = vmatpush.bf16.msra.mxu0 %v468
    %1065 = vmatpush.bf16.msra.mxu0 %v464
    %1066 = vmatmul.bf16.gmra.mxu0 %v602
    %v1067 = vpop.f32.mrf.mxu0
    %v1068 = vadd.f32 0.0, %v1067
    %v1069 = vpop.f32.mrf.mxu0
    %1070 = vdwg.mxu0
    %1071 = vmatpush.bf16.msra.mxu0 %v493
    %1072 = vmatpush.bf16.msra.mxu0 %v489
    %1073 = vmatpush.bf16.msra.mxu0 %v485
    %1074 = vmatpush.bf16.msra.mxu0 %v481
    %1075 = vmatpush.bf16.msra.mxu0 %v477
    %1076 = vmatpush.bf16.msra.mxu0 %v473
    %1077 = vmatpush.bf16.msra.mxu0 %v469
    %1078 = vmatpush.bf16.msra.mxu0 %v465
    %1079 = vmatmul.bf16.gmra.mxu0 %v602
    %v1080 = vpop.f32.mrf.mxu0
    %v1081 = vadd.f32 0.0, %v1080
    %v1082 = vpop.f32.mrf.mxu0
    %1083 = vdwg.mxu0
    %1084 = vmatpush.bf16.msra.mxu0 %v494
    %1085 = vmatpush.bf16.msra.mxu0 %v490
    %1086 = vmatpush.bf16.msra.mxu0 %v486
    %1087 = vmatpush.bf16.msra.mxu0 %v482
    %1088 = vmatpush.bf16.msra.mxu0 %v478
    %1089 = vmatpush.bf16.msra.mxu0 %v474
    %1090 = vmatpush.bf16.msra.mxu0 %v470
    %1091 = vmatpush.bf16.msra.mxu0 %v466
    %1092 = vmatmul.bf16.gmra.mxu0 %v602
    %v1093 = vpop.f32.mrf.mxu0
    %v1094 = vadd.f32 0.0, %v1093
    %v1095 = vpop.f32.mrf.mxu0
    %1096 = vdwg.mxu0
    %1097 = vmatpush.bf16.msra.mxu0 %v495
    %1098 = vmatpush.bf16.msra.mxu0 %v491
    %1099 = vmatpush.bf16.msra.mxu0 %v487
    %1100 = vmatpush.bf16.msra.mxu0 %v483
    %1101 = vmatpush.bf16.msra.mxu0 %v479
    %1102 = vmatpush.bf16.msra.mxu0 %v475
    %1103 = vmatpush.bf16.msra.mxu0 %v471
    %1104 = vmatpush.bf16.msra.mxu0 %v467
    %1105 = vmatmul.bf16.gmra.mxu0 %v602
    %v1106 = vpop.f32.mrf.mxu0
    %v1107 = vadd.f32 0.0, %v1106
    %v1108 = vpop.f32.mrf.mxu0
    %1109 = vdwg.mxu0
    %v1110 = vadd.f32 %v167, %v1068
    %v1111 = vadd.f32 %v196, %v1081
    %v1112 = vadd.f32 %v225, %v1094
    %v1113 = vadd.f32 %v254, %v1107
    %v1114 = vmul.f32 %v1110, 0.5
    %v1115 = vtanh.pop %v1114
    %v1116 = vmul.f32 %v1115, 0.5
    %v1117 = vadd.f32 %v1116, 0.5
    %v1118 = vmul.f32 %v1111, 0.5
    %v1119 = vtanh.pop %v1118
    %v1120 = vmul.f32 %v1119, 0.5
    %v1121 = vadd.f32 %v1120, 0.5
    %v1122 = vtanh.pop %v1112
    %v1123 = vmul.f32 %v1113, 0.5
    %v1124 = vtanh.pop %v1123
    %v1125 = vmul.f32 %v1124, 0.5
    %v1126 = vadd.f32 %v1125, 0.5
    %v1127 = vmul.f32 %v1121, %v599
    %v1128 = vmul.f32 %v1117, %v1122
    %v1129 = vadd.f32 %v1127, %v1128
    %v1130 = vtanh.pop %v1129
    %v1131 = vmul.f32 %v1126, %v1130
    %v1132 = vpack.c.bf16 %v1131, %v1131
    %1133 = vmatpush.bf16.msra.mxu0 %v736
    %1134 = vmatpush.bf16.msra.mxu0 %v732
    %1135 = vmatpush.bf16.msra.mxu0 %v728
    %1136 = vmatpush.bf16.msra.mxu0 %v724
    %1137 = vmatpush.bf16.msra.mxu0 %v720
    %1138 = vmatpush.bf16.msra.mxu0 %v716
    %1139 = vmatpush.bf16.msra.mxu0 %v712
    %1140 = vmatpush.bf16.msra.mxu0 %v708
    %1141 = vmatmul.bf16.gmra.mxu0 %v1132
    %v1142 = vpop.f32.mrf.mxu0
    %v1143 = vadd.f32 %v604, %v1142
    %v1144 = vpop.f32.mrf.mxu0
    %1145 = vdwg.mxu0
    %1146 = vmatpush.bf16.msra.mxu0 %v737
    %1147 = vmatpush.bf16.msra.mxu0 %v733
    %1148 = vmatpush.bf16.msra.mxu0 %v729
    %1149 = vmatpush.bf16.msra.mxu0 %v725
    %1150 = vmatpush.bf16.msra.mxu0 %v721
    %1151 = vmatpush.bf16.msra.mxu0 %v717
    %1152 = vmatpush.bf16.msra.mxu0 %v713
    %1153 = vmatpush.bf16.msra.mxu0 %v709
    %1154 = vmatmul.bf16.gmra.mxu0 %v1132
    %v1155 = vpop.f32.mrf.mxu0
    %v1156 = vadd.f32 %v605, %v1155
    %v1157 = vpop.f32.mrf.mxu0
    %1158 = vdwg.mxu0
    %1159 = vmatpush.bf16.msra.mxu0 %v738
    %1160 = vmatpush.bf16.msra.mxu0 %v734
    %1161 = vmatpush.bf16.msra.mxu0 %v730
    %1162 = vmatpush.bf16.msra.mxu0 %v726
    %1163 = vmatpush.bf16.msra.mxu0 %v722
    %1164 = vmatpush.bf16.msra.mxu0 %v718
    %1165 = vmatpush.bf16.msra.mxu0 %v714
    %1166 = vmatpush.bf16.msra.mxu0 %v710
    %1167 = vmatmul.bf16.gmra.mxu0 %v1132
    %v1168 = vpop.f32.mrf.mxu0
    %v1169 = vadd.f32 %v606, %v1168
    %v1170 = vpop.f32.mrf.mxu0
    %1171 = vdwg.mxu0
    %1172 = vmatpush.bf16.msra.mxu0 %v739
    %1173 = vmatpush.bf16.msra.mxu0 %v735
    %1174 = vmatpush.bf16.msra.mxu0 %v731
    %1175 = vmatpush.bf16.msra.mxu0 %v727
    %1176 = vmatpush.bf16.msra.mxu0 %v723
    %1177 = vmatpush.bf16.msra.mxu0 %v719
    %1178 = vmatpush.bf16.msra.mxu0 %v715
    %1179 = vmatpush.bf16.msra.mxu0 %v711
    %1180 = vmatmul.bf16.gmra.mxu0 %v1132
    %v1181 = vpop.f32.mrf.mxu0
    %v1182 = vadd.f32 %v607, %v1181
    %v1183 = vpop.f32.mrf.mxu0
    %1184 = vdwg.mxu0
    %v1185 = vpack.c.bf16 %v1057, %v1057
    %1186 = vmatpush.bf16.msra.mxu0 %v948
    %1187 = vmatpush.bf16.msra.mxu0 %v944
    %1188 = vmatpush.bf16.msra.mxu0 %v940
    %1189 = vmatpush.bf16.msra.mxu0 %v936
    %1190 = vmatpush.bf16.msra.mxu0 %v932
    %1191 = vmatpush.bf16.msra.mxu0 %v928
    %1192 = vmatpush.bf16.msra.mxu0 %v924
    %1193 = vmatpush.bf16.msra.mxu0 %v920
    %1194 = vmatmul.bf16.gmra.mxu0 %v1185
    %v1195 = vpop.f32.mrf.mxu0
    %v1196 = vadd.f32 0.0, %v1195
    %v1197 = vpop.f32.mrf.mxu0
    %1198 = vdwg.mxu0
    %1199 = vmatpush.bf16.msra.mxu0 %v949
    %1200 = vmatpush.bf16.msra.mxu0 %v945
    %1201 = vmatpush.bf16.msra.mxu0 %v941
    %1202 = vmatpush.bf16.msra.mxu0 %v937
    %1203 = vmatpush.bf16.msra.mxu0 %v933
    %1204 = vmatpush.bf16.msra.mxu0 %v929
    %1205 = vmatpush.bf16.msra.mxu0 %v925
    %1206 = vmatpush.bf16.msra.mxu0 %v921
    %1207 = vmatmul.bf16.gmra.mxu0 %v1185
    %v1208 = vpop.f32.mrf.mxu0
    %v1209 = vadd.f32 0.0, %v1208
    %v1210 = vpop.f32.mrf.mxu0
    %1211 = vdwg.mxu0
    %1212 = vmatpush.bf16.msra.mxu0 %v950
    %1213 = vmatpush.bf16.msra.mxu0 %v946
    %1214 = vmatpush.bf16.msra.mxu0 %v942
    %1215 = vmatpush.bf16.msra.mxu0 %v938
    %1216 = vmatpush.bf16.msra.mxu0 %v934
    %1217 = vmatpush.bf16.msra.mxu0 %v930
    %1218 = vmatpush.bf16.msra.mxu0 %v926
    %1219 = vmatpush.bf16.msra.mxu0 %v922
    %1220 = vmatmul.bf16.gmra.mxu0 %v1185
    %v1221 = vpop.f32.mrf.mxu0
    %v1222 = vadd.f32 0.0, %v1221
    %v1223 = vpop.f32.mrf.mxu0
    %1224 = vdwg.mxu0
    %1225 = vmatpush.bf16.msra.mxu0 %v951
    %1226 = vmatpush.bf16.msra.mxu0 %v947
    %1227 = vmatpush.bf16.msra.mxu0 %v943
    %1228 = vmatpush.bf16.msra.mxu0 %v939
    %1229 = vmatpush.bf16.msra.mxu0 %v935
    %1230 = vmatpush.bf16.msra.mxu0 %v931
    %1231 = vmatpush.bf16.msra.mxu0 %v927
    %1232 = vmatpush.bf16.msra.mxu0 %v923
    %1233 = vmatmul.bf16.gmra.mxu0 %v1185
    %v1234 = vpop.f32.mrf.mxu0
    %v1235 = vadd.f32 0.0, %v1234
    %v1236 = vpop.f32.mrf.mxu0
    %1237 = vdwg.mxu0
    %v1238 = vadd.f32 %v1143, %v1196
    %v1239 = vadd.f32 %v1156, %v1209
    %v1240 = vadd.f32 %v1169, %v1222
    %v1241 = vadd.f32 %v1182, %v1235
    %v1242 = vmul.f32 %v1238, 0.5
    %v1243 = vtanh.pop %v1242
    %v1244 = vmul.f32 %v1243, 0.5
    %v1245 = vadd.f32 %v1244, 0.5
    %v1246 = vmul.f32 %v1239, 0.5
    %v1247 = vtanh.pop %v1246
    %v1248 = vmul.f32 %v1247, 0.5
    %v1249 = vadd.f32 %v1248, 0.5
    %v1250 = vtanh.pop %v1240
    %v1251 = vmul.f32 %v1241, 0.5
    %v1252 = vtanh.pop %v1251
    %v1253 = vmul.f32 %v1252, 0.5
    %v1254 = vadd.f32 %v1253, 0.5
    %v1255 = vmul.f32 %v1249, %v1055
    %v1256 = vmul.f32 %v1245, %v1250
    %v1257 = vadd.f32 %v1255, %v1256
    %v1258 = vtanh.pop %v1257
    %v1259 = vmul.f32 %v1254, %v1258
    %1260 = vmatpush.bf16.msra.mxu0 %v492
    %1261 = vmatpush.bf16.msra.mxu0 %v488
    %1262 = vmatpush.bf16.msra.mxu0 %v484
    %1263 = vmatpush.bf16.msra.mxu0 %v480
    %1264 = vmatpush.bf16.msra.mxu0 %v476
    %1265 = vmatpush.bf16.msra.mxu0 %v472
    %1266 = vmatpush.bf16.msra.mxu0 %v468
    %1267 = vmatpush.bf16.msra.mxu0 %v464
    %1268 = vmatmul.bf16.gmra.mxu0 %v1132
    %v1269 = vpop.f32.mrf.mxu0
    %v1270 = vadd.f32 0.0, %v1269
    %v1271 = vpop.f32.mrf.mxu0
    %1272 = vdwg.mxu0
    %1273 = vmatpush.bf16.msra.mxu0 %v493
    %1274 = vmatpush.bf16.msra.mxu0 %v489
    %1275 = vmatpush.bf16.msra.mxu0 %v485
    %1276 = vmatpush.bf16.msra.mxu0 %v481
    %1277 = vmatpush.bf16.msra.mxu0 %v477
    %1278 = vmatpush.bf16.msra.mxu0 %v473
    %1279 = vmatpush.bf16.msra.mxu0 %v469
    %1280 = vmatpush.bf16.msra.mxu0 %v465
    %1281 = vmatmul.bf16.gmra.mxu0 %v1132
    %v1282 = vpop.f32.mrf.mxu0
    %v1283 = vadd.f32 0.0, %v1282
    %v1284 = vpop.f32.mrf.mxu0
    %1285 = vdwg.mxu0
    %1286 = vmatpush.bf16.msra.mxu0 %v494
    %1287 = vmatpush.bf16.msra.mxu0 %v490
    %1288 = vmatpush.bf16.msra.mxu0 %v486
    %1289 = vmatpush.bf16.msra.mxu0 %v482
    %1290 = vmatpush.bf16.msra.mxu0 %v478
    %1291 = vmatpush.bf16.msra.mxu0 %v474
    %1292 = vmatpush.bf16.msra.mxu0 %v470
    %1293 = vmatpush.bf16.msra.mxu0 %v466
    %1294 = vmatmul.bf16.gmra.mxu0 %v1132
    %v1295 = vpop.f32.mrf.mxu0
    %v1296 = vadd.f32 0.0, %v1295
    %v1297 = vpop.f32.mrf.mxu0
    %1298 = vdwg.mxu0
    %1299 = vmatpush.bf16.msra.mxu0 %v495
    %1300 = vmatpush.bf16.msra.mxu0 %v491
    %1301 = vmatpush.bf16.msra.mxu0 %v487
    %1302 = vmatpush.bf16.msra.mxu0 %v483
    %1303 = vmatpush.bf16.msra.mxu0 %v479
    %1304 = vmatpush.bf16.msra.mxu0 %v475
    %1305 = vmatpush.bf16.msra.mxu0 %v471
    %1306 = vmatpush.bf16.msra.mxu0 %v467
    %1307 = vmatmul.bf16.gmra.mxu0 %v1132
    %v1308 = vpop.f32.mrf.mxu0
    %v1309 = vadd.f32 0.0, %v1308
    %v1310 = vpop.f32.mrf.mxu0
    %1311 = vdwg.mxu0
    %v1312 = vadd.f32 %v170, %v1270
    %v1313 = vadd.f32 %v199, %v1283
    %v1314 = vadd.f32 %v228, %v1296
    %v1315 = vadd.f32 %v257, %v1309
    %v1316 = vmul.f32 %v1312, 0.5
    %v1317 = vtanh.pop %v1316
    %v1318 = vmul.f32 %v1317, 0.5
    %v1319 = vadd.f32 %v1318, 0.5
    %v1320 = vmul.f32 %v1313, 0.5
    %v1321 = vtanh.pop %v1320
    %v1322 = vmul.f32 %v1321, 0.5
    %v1323 = vadd.f32 %v1322, 0.5
    %v1324 = vtanh.pop %v1314
    %v1325 = vmul.f32 %v1315, 0.5
    %v1326 = vtanh.pop %v1325
    %v1327 = vmul.f32 %v1326, 0.5
    %v1328 = vadd.f32 %v1327, 0.5
    %v1329 = vmul.f32 %v1323, %v1129
    %v1330 = vmul.f32 %v1319, %v1324
    %v1331 = vadd.f32 %v1329, %v1330
    %v1332 = vtanh.pop %v1331
    %v1333 = vmul.f32 %v1328, %v1332
    %v1334 = vpack.c.bf16 %v1333, %v1333
    %1335 = vmatpush.bf16.msra.mxu0 %v736
    %1336 = vmatpush.bf16.msra.mxu0 %v732
    %1337 = vmatpush.bf16.msra.mxu0 %v728
    %1338 = vmatpush.bf16.msra.mxu0 %v724
    %1339 = vmatpush.bf16.msra.mxu0 %v720
    %1340 = vmatpush.bf16.msra.mxu0 %v716
    %1341 = vmatpush.bf16.msra.mxu0 %v712
    %1342 = vmatpush.bf16.msra.mxu0 %v708
    %1343 = vmatmul.bf16.gmra.mxu0 %v1334
    %v1344 = vpop.f32.mrf.mxu0
    %v1345 = vadd.f32 %v604, %v1344
    %v1346 = vpop.f32.mrf.mxu0
    %1347 = vdwg.mxu0
    %1348 = vmatpush.bf16.msra.mxu0 %v737
    %1349 = vmatpush.bf16.msra.mxu0 %v733
    %1350 = vmatpush.bf16.msra.mxu0 %v729
    %1351 = vmatpush.bf16.msra.mxu0 %v725
    %1352 = vmatpush.bf16.msra.mxu0 %v721
    %1353 = vmatpush.bf16.msra.mxu0 %v717
    %1354 = vmatpush.bf16.msra.mxu0 %v713
    %1355 = vmatpush.bf16.msra.mxu0 %v709
    %1356 = vmatmul.bf16.gmra.mxu0 %v1334
    %v1357 = vpop.f32.mrf.mxu0
    %v1358 = vadd.f32 %v605, %v1357
    %v1359 = vpop.f32.mrf.mxu0
    %1360 = vdwg.mxu0
    %1361 = vmatpush.bf16.msra.mxu0 %v738
    %1362 = vmatpush.bf16.msra.mxu0 %v734
    %1363 = vmatpush.bf16.msra.mxu0 %v730
    %1364 = vmatpush.bf16.msra.mxu0 %v726
    %1365 = vmatpush.bf16.msra.mxu0 %v722
    %1366 = vmatpush.bf16.msra.mxu0 %v718
    %1367 = vmatpush.bf16.msra.mxu0 %v714
    %1368 = vmatpush.bf16.msra.mxu0 %v710
    %1369 = vmatmul.bf16.gmra.mxu0 %v1334
    %v1370 = vpop.f32.mrf.mxu0
    %v1371 = vadd.f32 %v606, %v1370
    %v1372 = vpop.f32.mrf.mxu0
    %1373 = vdwg.mxu0
    %1374 = vmatpush.bf16.msra.mxu0 %v739
    %1375 = vmatpush.bf16.msra.mxu0 %v735
    %1376 = vmatpush.bf16.msra.mxu0 %v731
    %1377 = vmatpush.bf16.msra.mxu0 %v727
    %1378 = vmatpush.bf16.msra.mxu0 %v723
    %1379 = vmatpush.bf16.msra.mxu0 %v719
    %1380 = vmatpush.bf16.msra.mxu0 %v715
    %1381 = vmatpush.bf16.msra.mxu0 %v711
    %1382 = vmatmul.bf16.gmra.mxu0 %v1334
    %v1383 = vpop.f32.mrf.mxu0
    %v1384 = vadd.f32 %v607, %v1383
    %v1385 = vpop.f32.mrf.mxu0
    %1386 = vdwg.mxu0
    %v1387 = vpack.c.bf16 %v1259, %v1259
    %1388 = vmatpush.bf16.msra.mxu0 %v948
    %1389 = vmatpush.bf16.msra.mxu0 %v944
    %1390 = vmatpush.bf16.msra.mxu0 %v940
    %1391 = vmatpush.bf16.msra.mxu0 %v936
    %1392 = vmatpush.bf16.msra.mxu0 %v932
    %1393 = vmatpush.bf16.msra.mxu0 %v928
    %1394 = vmatpush.bf16.msra.mxu0 %v924
    %1395 = vmatpush.bf16.msra.mxu0 %v920
    %1396 = vmatmul.bf16.gmra.mxu0 %v1387
    %v1397 = vpop.f32.mrf.mxu0
    %v1398 = vadd.f32 0.0, %v1397
    %v1399 = vpop.f32.mrf.mxu0
    %1400 = vdwg.mxu0
    %1401 = vmatpush.bf16.msra.mxu0 %v949
    %1402 = vmatpush.bf16.msra.mxu0 %v945
    %1403 = vmatpush.bf16.msra.mxu0 %v941
    %1404 = vmatpush.bf16.msra.mxu0 %v937
    %1405 = vmatpush.bf16.msra.mxu0 %v933
    %1406 = vmatpush.bf16.msra.mxu0 %v929
    %1407 = vmatpush.bf16.msra.mxu0 %v925
    %1408 = vmatpush.bf16.msra.mxu0 %v921
    %1409 = vmatmul.bf16.gmra.mxu0 %v1387
    %v1410 = vpop.f32.mrf.mxu0
    %v1411 = vadd.f32 0.0, %v1410
    %v1412 = vpop.f32.mrf.mxu0
    %1413 = vdwg.mxu0
    %1414 = vmatpush.bf16.msra.mxu0 %v950
    %1415 = vmatpush.bf16.msra.mxu0 %v946
    %1416 = vmatpush.bf16.msra.mxu0 %v942
    %1417 = vmatpush.bf16.msra.mxu0 %v938
    %1418 = vmatpush.bf16.msra.mxu0 %v934
    %1419 = vmatpush.bf16.msra.mxu0 %v930
    %1420 = vmatpush.bf16.msra.mxu0 %v926
    %1421 = vmatpush.bf16.msra.mxu0 %v922
    %1422 = vmatmul.bf16.gmra.mxu0 %v1387
    %v1423 = vpop.f32.mrf.mxu0
    %v1424 = vadd.f32 0.0, %v1423
    %v1425 = vpop.f32.mrf.mxu0
    %1426 = vdwg.mxu0
    %1427 = vmatpush.bf16.msra.mxu0 %v951
    %1428 = vmatpush.bf16.msra.mxu0 %v947
    %1429 = vmatpush.bf16.msra.mxu0 %v943
    %1430 = vmatpush.bf16.msra.mxu0 %v939
    %1431 = vmatpush.bf16.msra.mxu0 %v935
    %1432 = vmatpush.bf16.msra.mxu0 %v931
    %1433 = vmatpush.bf16.msra.mxu0 %v927
    %1434 = vmatpush.bf16.msra.mxu0 %v923
    %1435 = vmatmul.bf16.gmra.mxu0 %v1387
    %v1436 = vpop.f32.mrf.mxu0
    %v1437 = vadd.f32 0.0, %v1436
    %v1438 = vpop.f32.mrf.mxu0
    %1439 = vdwg.mxu0
    %v1440 = vadd.f32 %v1345, %v1398
    %v1441 = vadd.f32 %v1358, %v1411
    %v1442 = vadd.f32 %v1371, %v1424
    %v1443 = vadd.f32 %v1384, %v1437
    %v1444 = vmul.f32 %v1440, 0.5
    %v1445 = vtanh.pop %v1444
    %v1446 = vmul.f32 %v1445, 0.5
    %v1447 = vadd.f32 %v1446, 0.5
    %v1448 = vmul.f32 %v1441, 0.5
    %v1449 = vtanh.pop %v1448
    %v1450 = vmul.f32 %v1449, 0.5
    %v1451 = vadd.f32 %v1450, 0.5
    %v1452 = vtanh.pop %v1442
    %v1453 = vmul.f32 %v1443, 0.5
    %v1454 = vtanh.pop %v1453
    %v1455 = vmul.f32 %v1454, 0.5
    %v1456 = vadd.f32 %v1455, 0.5
    %v1457 = vmul.f32 %v1451, %v1257
    %v1458 = vmul.f32 %v1447, %v1452
    %v1459 = vadd.f32 %v1457, %v1458
    %v1460 = vtanh.pop %v1459
    %v1461 = vmul.f32 %v1456, %v1460
    %1462 = vmatpush.bf16.msra.mxu0 %v492
    %1463 = vmatpush.bf16.msra.mxu0 %v488
    %1464 = vmatpush.bf16.msra.mxu0 %v484
    %1465 = vmatpush.bf16.msra.mxu0 %v480
    %1466 = vmatpush.bf16.msra.mxu0 %v476
    %1467 = vmatpush.bf16.msra.mxu0 %v472
    %1468 = vmatpush.bf16.msra.mxu0 %v468
    %1469 = vmatpush.bf16.msra.mxu0 %v464
    %1470 = vmatmul.bf16.gmra.mxu0 %v1334
    %v1471 = vpop.f32.mrf.mxu0
    %v1472 = vadd.f32 0.0, %v1471
    %v1473 = vpop.f32.mrf.mxu0
    %1474 = vdwg.mxu0
    %1475 = vmatpush.bf16.msra.mxu0 %v493
    %1476 = vmatpush.bf16.msra.mxu0 %v489
    %1477 = vmatpush.bf16.msra.mxu0 %v485
    %1478 = vmatpush.bf16.msra.mxu0 %v481
    %1479 = vmatpush.bf16.msra.mxu0 %v477
    %1480 = vmatpush.bf16.msra.mxu0 %v473
    %1481 = vmatpush.bf16.msra.mxu0 %v469
    %1482 = vmatpush.bf16.msra.mxu0 %v465
    %1483 = vmatmul.bf16.gmra.mxu0 %v1334
    %v1484 = vpop.f32.mrf.mxu0
    %v1485 = vadd.f32 0.0, %v1484
    %v1486 = vpop.f32.mrf.mxu0
    %1487 = vdwg.mxu0
    %1488 = vmatpush.bf16.msra.mxu0 %v494
    %1489 = vmatpush.bf16.msra.mxu0 %v490
    %1490 = vmatpush.bf16.msra.mxu0 %v486
    %1491 = vmatpush.bf16.msra.mxu0 %v482
    %1492 = vmatpush.bf16.msra.mxu0 %v478
    %1493 = vmatpush.bf16.msra.mxu0 %v474
    %1494 = vmatpush.bf16.msra.mxu0 %v470
    %1495 = vmatpush.bf16.msra.mxu0 %v466
    %1496 = vmatmul.bf16.gmra.mxu0 %v1334
    %v1497 = vpop.f32.mrf.mxu0
    %v1498 = vadd.f32 0.0, %v1497
    %v1499 = vpop.f32.mrf.mxu0
    %1500 = vdwg.mxu0
    %1501 = vmatpush.bf16.msra.mxu0 %v495
    %1502 = vmatpush.bf16.msra.mxu0 %v491
    %1503 = vmatpush.bf16.msra.mxu0 %v487
    %1504 = vmatpush.bf16.msra.mxu0 %v483
    %1505 = vmatpush.bf16.msra.mxu0 %v479
    %1506 = vmatpush.bf16.msra.mxu0 %v475
    %1507 = vmatpush.bf16.msra.mxu0 %v471
    %1508 = vmatpush.bf16.msra.mxu0 %v467
    %1509 = vmatmul.bf16.gmra.mxu0 %v1334
    %v1510 = vpop.f32.mrf.mxu0
    %v1511 = vadd.f32 0.0, %v1510
    %v1512 = vpop.f32.mrf.mxu0
    %1513 = vdwg.mxu0
    %v1514 = vadd.f32 %v172, %v1472
    %v1515 = vadd.f32 %v201, %v1485
    %v1516 = vadd.f32 %v230, %v1498
    %v1517 = vadd.f32 %v259, %v1511
    %v1518 = vmul.f32 %v1514, 0.5
    %v1519 = vtanh.pop %v1518
    %v1520 = vmul.f32 %v1519, 0.5
    %v1521 = vadd.f32 %v1520, 0.5
    %v1522 = vmul.f32 %v1515, 0.5
    %v1523 = vtanh.pop %v1522
    %v1524 = vmul.f32 %v1523, 0.5
    %v1525 = vadd.f32 %v1524, 0.5
    %v1526 = vtanh.pop %v1516
    %v1527 = vmul.f32 %v1517, 0.5
    %v1528 = vtanh.pop %v1527
    %v1529 = vmul.f32 %v1528, 0.5
    %v1530 = vadd.f32 %v1529, 0.5
    %v1531 = vmul.f32 %v1525, %v1331
    %v1532 = vmul.f32 %v1521, %v1526
    %v1533 = vadd.f32 %v1531, %v1532
    %v1534 = vtanh.pop %v1533
    %v1535 = vmul.f32 %v1530, %v1534
    %v1536 = vpack.c.bf16 %v1535, %v1535
    %1537 = vmatpush.bf16.msra.mxu0 %v736
    %1538 = vmatpush.bf16.msra.mxu0 %v732
    %1539 = vmatpush.bf16.msra.mxu0 %v728
    %1540 = vmatpush.bf16.msra.mxu0 %v724
    %1541 = vmatpush.bf16.msra.mxu0 %v720
    %1542 = vmatpush.bf16.msra.mxu0 %v716
    %1543 = vmatpush.bf16.msra.mxu0 %v712
    %1544 = vmatpush.bf16.msra.mxu0 %v708
    %1545 = vmatmul.bf16.gmra.mxu0 %v1536
    %v1546 = vpop.f32.mrf.mxu0
    %v1547 = vadd.f32 %v604, %v1546
    %v1548 = vpop.f32.mrf.mxu0
    %1549 = vdwg.mxu0
    %1550 = vmatpush.bf16.msra.mxu0 %v737
    %1551 = vmatpush.bf16.msra.mxu0 %v733
    %1552 = vmatpush.bf16.msra.mxu0 %v729
    %1553 = vmatpush.bf16.msra.mxu0 %v725
    %1554 = vmatpush.bf16.msra.mxu0 %v721
    %1555 = vmatpush.bf16.msra.mxu0 %v717
    %1556 = vmatpush.bf16.msra.mxu0 %v713
    %1557 = vmatpush.bf16.msra.mxu0 %v709
    %1558 = vmatmul.bf16.gmra.mxu0 %v1536
    %v1559 = vpop.f32.mrf.mxu0
    %v1560 = vadd.f32 %v605, %v1559
    %v1561 = vpop.f32.mrf.mxu0
    %1562 = vdwg.mxu0
    %1563 = vmatpush.bf16.msra.mxu0 %v738
    %1564 = vmatpush.bf16.msra.mxu0 %v734
    %1565 = vmatpush.bf16.msra.mxu0 %v730
    %1566 = vmatpush.bf16.msra.mxu0 %v726
    %1567 = vmatpush.bf16.msra.mxu0 %v722
    %1568 = vmatpush.bf16.msra.mxu0 %v718
    %1569 = vmatpush.bf16.msra.mxu0 %v714
    %1570 = vmatpush.bf16.msra.mxu0 %v710
    %1571 = vmatmul.bf16.gmra.mxu0 %v1536
    %v1572 = vpop.f32.mrf.mxu0
    %v1573 = vadd.f32 %v606, %v1572
    %v1574 = vpop.f32.mrf.mxu0
    %1575 = vdwg.mxu0
    %1576 = vmatpush.bf16.msra.mxu0 %v739
    %1577 = vmatpush.bf16.msra.mxu0 %v735
    %1578 = vmatpush.bf16.msra.mxu0 %v731
    %1579 = vmatpush.bf16.msra.mxu0 %v727
    %1580 = vmatpush.bf16.msra.mxu0 %v723
    %1581 = vmatpush.bf16.msra.mxu0 %v719
    %1582 = vmatpush.bf16.msra.mxu0 %v715
    %1583 = vmatpush.bf16.msra.mxu0 %v711
    %1584 = vmatmul.bf16.gmra.mxu0 %v1536
    %v1585 = vpop.f32.mrf.mxu0
    %v1586 = vadd.f32 %v607, %v1585
    %v1587 = vpop.f32.mrf.mxu0
    %1588 = vdwg.mxu0
    %v1589 = vpack.c.bf16 %v1461, %v1461
    %1590 = vmatpush.bf16.msra.mxu0 %v948
    %1591 = vmatpush.bf16.msra.mxu0 %v944
    %1592 = vmatpush.bf16.msra.mxu0 %v940
    %1593 = vmatpush.bf16.msra.mxu0 %v936
    %1594 = vmatpush.bf16.msra.mxu0 %v932
    %1595 = vmatpush.bf16.msra.mxu0 %v928
    %1596 = vmatpush.bf16.msra.mxu0 %v924
    %1597 = vmatpush.bf16.msra.mxu0 %v920
    %1598 = vmatmul.bf16.gmra.mxu0 %v1589
    %v1599 = vpop.f32.mrf.mxu0
    %v1600 = vadd.f32 0.0, %v1599
    %v1601 = vpop.f32.mrf.mxu0
    %1602 = vdwg.mxu0
    %1603 = vmatpush.bf16.msra.mxu0 %v949
    %1604 = vmatpush.bf16.msra.mxu0 %v945
    %1605 = vmatpush.bf16.msra.mxu0 %v941
    %1606 = vmatpush.bf16.msra.mxu0 %v937
    %1607 = vmatpush.bf16.msra.mxu0 %v933
    %1608 = vmatpush.bf16.msra.mxu0 %v929
    %1609 = vmatpush.bf16.msra.mxu0 %v925
    %1610 = vmatpush.bf16.msra.mxu0 %v921
    %1611 = vmatmul.bf16.gmra.mxu0 %v1589
    %v1612 = vpop.f32.mrf.mxu0
    %v1613 = vadd.f32 0.0, %v1612
    %v1614 = vpop.f32.mrf.mxu0
    %1615 = vdwg.mxu0
    %1616 = vmatpush.bf16.msra.mxu0 %v950
    %1617 = vmatpush.bf16.msra.mxu0 %v946
    %1618 = vmatpush.bf16.msra.mxu0 %v942
    %1619 = vmatpush.bf16.msra.mxu0 %v938
    %1620 = vmatpush.bf16.msra.mxu0 %v934
    %1621 = vmatpush.bf16.msra.mxu0 %v930
    %1622 = vmatpush.bf16.msra.mxu0 %v926
    %1623 = vmatpush.bf16.msra.mxu0 %v922
    %1624 = vmatmul.bf16.gmra.mxu0 %v1589
    %v1625 = vpop.f32.mrf.mxu0
    %v1626 = vadd.f32 0.0, %v1625
    %v1627 = vpop.f32.mrf.mxu0
    %1628 = vdwg.mxu0
    %1629 = vmatpush.bf16.msra.mxu0 %v951
    %1630 = vmatpush.bf16.msra.mxu0 %v947
    %1631 = vmatpush.bf16.msra.mxu0 %v943
    %1632 = vmatpush.bf16.msra.mxu0 %v939
    %1633 = vmatpush.bf16.msra.mxu0 %v935
    %1634 = vmatpush.bf16.msra.mxu0 %v931
    %1635 = vmatpush.bf16.msra.mxu0 %v927
    %1636 = vmatpush.bf16.msra.mxu0 %v923
    %1637 = vmatmul.bf16.gmra.mxu0 %v1589
    %v1638 = vpop.f32.mrf.mxu0
    %v1639 = vadd.f32 0.0, %v1638
    %v1640 = vpop.f32.mrf.mxu0
    %1641 = vdwg.mxu0
    %v1642 = vadd.f32 %v1547, %v1600
    %v1643 = vadd.f32 %v1560, %v1613
    %v1644 = vadd.f32 %v1573, %v1626
    %v1645 = vadd.f32 %v1586, %v1639
    %v1646 = vmul.f32 %v1642, 0.5
    %v1647 = vtanh.pop %v1646
    %v1648 = vmul.f32 %v1647, 0.5
    %v1649 = vadd.f32 %v1648, 0.5
    %v1650 = vmul.f32 %v1643, 0.5
    %v1651 = vtanh.pop %v1650
    %v1652 = vmul.f32 %v1651, 0.5
    %v1653 = vadd.f32 %v1652, 0.5
    %v1654 = vtanh.pop %v1644
    %v1655 = vmul.f32 %v1645, 0.5
    %v1656 = vtanh.pop %v1655
    %v1657 = vmul.f32 %v1656, 0.5
    %v1658 = vadd.f32 %v1657, 0.5
    %v1659 = vmul.f32 %v1653, %v1459
    %v1660 = vmul.f32 %v1649, %v1654
    %v1661 = vadd.f32 %v1659, %v1660
    %v1662 = vtanh.pop %v1661
    %v1663 = vmul.f32 %v1658, %v1662
    %1664 = vmatpush.bf16.msra.mxu0 %v492
    %1665 = vmatpush.bf16.msra.mxu0 %v488
    %1666 = vmatpush.bf16.msra.mxu0 %v484
    %1667 = vmatpush.bf16.msra.mxu0 %v480
    %1668 = vmatpush.bf16.msra.mxu0 %v476
    %1669 = vmatpush.bf16.msra.mxu0 %v472
    %1670 = vmatpush.bf16.msra.mxu0 %v468
    %1671 = vmatpush.bf16.msra.mxu0 %v464
    %1672 = vmatmul.bf16.gmra.mxu0 %v1536
    %v1673 = vpop.f32.mrf.mxu0
    %v1674 = vadd.f32 0.0, %v1673
    %v1675 = vpop.f32.mrf.mxu0
    %1676 = vdwg.mxu0
    %1677 = vmatpush.bf16.msra.mxu0 %v493
    %1678 = vmatpush.bf16.msra.mxu0 %v489
    %1679 = vmatpush.bf16.msra.mxu0 %v485
    %1680 = vmatpush.bf16.msra.mxu0 %v481
    %1681 = vmatpush.bf16.msra.mxu0 %v477
    %1682 = vmatpush.bf16.msra.mxu0 %v473
    %1683 = vmatpush.bf16.msra.mxu0 %v469
    %1684 = vmatpush.bf16.msra.mxu0 %v465
    %1685 = vmatmul.bf16.gmra.mxu0 %v1536
    %v1686 = vpop.f32.mrf.mxu0
    %v1687 = vadd.f32 0.0, %v1686
    %v1688 = vpop.f32.mrf.mxu0
    %1689 = vdwg.mxu0
    %1690 = vmatpush.bf16.msra.mxu0 %v494
    %1691 = vmatpush.bf16.msra.mxu0 %v490
    %1692 = vmatpush.bf16.msra.mxu0 %v486
    %1693 = vmatpush.bf16.msra.mxu0 %v482
    %1694 = vmatpush.bf16.msra.mxu0 %v478
    %1695 = vmatpush.bf16.msra.mxu0 %v474
    %1696 = vmatpush.bf16.msra.mxu0 %v470
    %1697 = vmatpush.bf16.msra.mxu0 %v466
    %1698 = vmatmul.bf16.gmra.mxu0 %v1536
    %v1699 = vpop.f32.mrf.mxu0
    %v1700 = vadd.f32 0.0, %v1699
    %v1701 = vpop.f32.mrf.mxu0
    %1702 = vdwg.mxu0
    %1703 = vmatpush.bf16.msra.mxu0 %v495
    %1704 = vmatpush.bf16.msra.mxu0 %v491
    %1705 = vmatpush.bf16.msra.mxu0 %v487
    %1706 = vmatpush.bf16.msra.mxu0 %v483
    %1707 = vmatpush.bf16.msra.mxu0 %v479
    %1708 = vmatpush.bf16.msra.mxu0 %v475
    %1709 = vmatpush.bf16.msra.mxu0 %v471
    %1710 = vmatpush.bf16.msra.mxu0 %v467
    %1711 = vmatmul.bf16.gmra.mxu0 %v1536
    %v1712 = vpop.f32.mrf.mxu0
    %v1713 = vadd.f32 0.0, %v1712
    %v1714 = vpop.f32.mrf.mxu0
    %1715 = vdwg.mxu0
    %v1716 = vadd.f32 %v175, %v1674
    %v1717 = vadd.f32 %v204, %v1687
    %v1718 = vadd.f32 %v233, %v1700
    %v1719 = vadd.f32 %v262, %v1713
    %v1720 = vmul.f32 %v1716, 0.5
    %v1721 = vtanh.pop %v1720
    %v1722 = vmul.f32 %v1721, 0.5
    %v1723 = vadd.f32 %v1722, 0.5
    %v1724 = vmul.f32 %v1717, 0.5
    %v1725 = vtanh.pop %v1724
    %v1726 = vmul.f32 %v1725, 0.5
    %v1727 = vadd.f32 %v1726, 0.5
    %v1728 = vtanh.pop %v1718
    %v1729 = vmul.f32 %v1719, 0.5
    %v1730 = vtanh.pop %v1729
    %v1731 = vmul.f32 %v1730, 0.5
    %v1732 = vadd.f32 %v1731, 0.5
    %v1733 = vmul.f32 %v1727, %v1533
    %v1734 = vmul.f32 %v1723, %v1728
    %v1735 = vadd.f32 %v1733, %v1734
    %v1736 = vtanh.pop %v1735
    %v1737 = vmul.f32 %v1732, %v1736
    %v1738 = vpack.c.bf16 %v1737, %v1737
    %1739 = vmatpush.bf16.msra.mxu0 %v736
    %1740 = vmatpush.bf16.msra.mxu0 %v732
    %1741 = vmatpush.bf16.msra.mxu0 %v728
    %1742 = vmatpush.bf16.msra.mxu0 %v724
    %1743 = vmatpush.bf16.msra.mxu0 %v720
    %1744 = vmatpush.bf16.msra.mxu0 %v716
    %1745 = vmatpush.bf16.msra.mxu0 %v712
    %1746 = vmatpush.bf16.msra.mxu0 %v708
    %1747 = vmatmul.bf16.gmra.mxu0 %v1738
    %v1748 = vpop.f32.mrf.mxu0
    %v1749 = vadd.f32 %v604, %v1748
    %v1750 = vpop.f32.mrf.mxu0
    %1751 = vdwg.mxu0
    %1752 = vmatpush.bf16.msra.mxu0 %v737
    %1753 = vmatpush.bf16.msra.mxu0 %v733
    %1754 = vmatpush.bf16.msra.mxu0 %v729
    %1755 = vmatpush.bf16.msra.mxu0 %v725
    %1756 = vmatpush.bf16.msra.mxu0 %v721
    %1757 = vmatpush.bf16.msra.mxu0 %v717
    %1758 = vmatpush.bf16.msra.mxu0 %v713
    %1759 = vmatpush.bf16.msra.mxu0 %v709
    %1760 = vmatmul.bf16.gmra.mxu0 %v1738
    %v1761 = vpop.f32.mrf.mxu0
    %v1762 = vadd.f32 %v605, %v1761
    %v1763 = vpop.f32.mrf.mxu0
    %1764 = vdwg.mxu0
    %1765 = vmatpush.bf16.msra.mxu0 %v738
    %1766 = vmatpush.bf16.msra.mxu0 %v734
    %1767 = vmatpush.bf16.msra.mxu0 %v730
    %1768 = vmatpush.bf16.msra.mxu0 %v726
    %1769 = vmatpush.bf16.msra.mxu0 %v722
    %1770 = vmatpush.bf16.msra.mxu0 %v718
    %1771 = vmatpush.bf16.msra.mxu0 %v714
    %1772 = vmatpush.bf16.msra.mxu0 %v710
    %1773 = vmatmul.bf16.gmra.mxu0 %v1738
    %v1774 = vpop.f32.mrf.mxu0
    %v1775 = vadd.f32 %v606, %v1774
    %v1776 = vpop.f32.mrf.mxu0
    %1777 = vdwg.mxu0
    %1778 = vmatpush.bf16.msra.mxu0 %v739
    %1779 = vmatpush.bf16.msra.mxu0 %v735
    %1780 = vmatpush.bf16.msra.mxu0 %v731
    %1781 = vmatpush.bf16.msra.mxu0 %v727
    %1782 = vmatpush.bf16.msra.mxu0 %v723
    %1783 = vmatpush.bf16.msra.mxu0 %v719
    %1784 = vmatpush.bf16.msra.mxu0 %v715
    %1785 = vmatpush.bf16.msra.mxu0 %v711
    %1786 = vmatmul.bf16.gmra.mxu0 %v1738
    %v1787 = vpop.f32.mrf.mxu0
    %v1788 = vadd.f32 %v607, %v1787
    %v1789 = vpop.f32.mrf.mxu0
    %1790 = vdwg.mxu0
    %v1791 = vpack.c.bf16 %v1663, %v1663
    %1792 = vmatpush.bf16.msra.mxu0 %v948
    %1793 = vmatpush.bf16.msra.mxu0 %v944
    %1794 = vmatpush.bf16.msra.mxu0 %v940
    %1795 = vmatpush.bf16.msra.mxu0 %v936
    %1796 = vmatpush.bf16.msra.mxu0 %v932
    %1797 = vmatpush.bf16.msra.mxu0 %v928
    %1798 = vmatpush.bf16.msra.mxu0 %v924
    %1799 = vmatpush.bf16.msra.mxu0 %v920
    %1800 = vmatmul.bf16.gmra.mxu0 %v1791
    %v1801 = vpop.f32.mrf.mxu0
    %v1802 = vadd.f32 0.0, %v1801
    %v1803 = vpop.f32.mrf.mxu0
    %1804 = vdwg.mxu0
    %1805 = vmatpush.bf16.msra.mxu0 %v949
    %1806 = vmatpush.bf16.msra.mxu0 %v945
    %1807 = vmatpush.bf16.msra.mxu0 %v941
    %1808 = vmatpush.bf16.msra.mxu0 %v937
    %1809 = vmatpush.bf16.msra.mxu0 %v933
    %1810 = vmatpush.bf16.msra.mxu0 %v929
    %1811 = vmatpush.bf16.msra.mxu0 %v925
    %1812 = vmatpush.bf16.msra.mxu0 %v921
    %1813 = vmatmul.bf16.gmra.mxu0 %v1791
    %v1814 = vpop.f32.mrf.mxu0
    %v1815 = vadd.f32 0.0, %v1814
    %v1816 = vpop.f32.mrf.mxu0
    %1817 = vdwg.mxu0
    %1818 = vmatpush.bf16.msra.mxu0 %v950
    %1819 = vmatpush.bf16.msra.mxu0 %v946
    %1820 = vmatpush.bf16.msra.mxu0 %v942
    %1821 = vmatpush.bf16.msra.mxu0 %v938
    %1822 = vmatpush.bf16.msra.mxu0 %v934
    %1823 = vmatpush.bf16.msra.mxu0 %v930
    %1824 = vmatpush.bf16.msra.mxu0 %v926
    %1825 = vmatpush.bf16.msra.mxu0 %v922
    %1826 = vmatmul.bf16.gmra.mxu0 %v1791
    %v1827 = vpop.f32.mrf.mxu0
    %v1828 = vadd.f32 0.0, %v1827
    %v1829 = vpop.f32.mrf.mxu0
    %1830 = vdwg.mxu0
    %1831 = vmatpush.bf16.msra.mxu0 %v951
    %1832 = vmatpush.bf16.msra.mxu0 %v947
    %1833 = vmatpush.bf16.msra.mxu0 %v943
    %1834 = vmatpush.bf16.msra.mxu0 %v939
    %1835 = vmatpush.bf16.msra.mxu0 %v935
    %1836 = vmatpush.bf16.msra.mxu0 %v931
    %1837 = vmatpush.bf16.msra.mxu0 %v927
    %1838 = vmatpush.bf16.msra.mxu0 %v923
    %1839 = vmatmul.bf16.gmra.mxu0 %v1791
    %v1840 = vpop.f32.mrf.mxu0
    %v1841 = vadd.f32 0.0, %v1840
    %v1842 = vpop.f32.mrf.mxu0
    %1843 = vdwg.mxu0
    %v1844 = vadd.f32 %v1749, %v1802
    %v1845 = vadd.f32 %v1762, %v1815
    %v1846 = vadd.f32 %v1775, %v1828
    %v1847 = vadd.f32 %v1788, %v1841
    %v1848 = vmul.f32 %v1844, 0.5
    %v1849 = vtanh.pop %v1848
    %v1850 = vmul.f32 %v1849, 0.5
    %v1851 = vadd.f32 %v1850, 0.5
    %v1852 = vmul.f32 %v1845, 0.5
    %v1853 = vtanh.pop %v1852
    %v1854 = vmul.f32 %v1853, 0.5
    %v1855 = vadd.f32 %v1854, 0.5
    %v1856 = vtanh.pop %v1846
    %v1857 = vmul.f32 %v1847, 0.5
    %v1858 = vtanh.pop %v1857
    %v1859 = vmul.f32 %v1858, 0.5
    %v1860 = vadd.f32 %v1859, 0.5
    %v1861 = vmul.f32 %v1855, %v1661
    %v1862 = vmul.f32 %v1851, %v1856
    %v1863 = vadd.f32 %v1861, %v1862
    %v1864 = vtanh.pop %v1863
    %v1865 = vmul.f32 %v1860, %v1864
    %1866 = vmatpush.bf16.msra.mxu0 %v492
    %1867 = vmatpush.bf16.msra.mxu0 %v488
    %1868 = vmatpush.bf16.msra.mxu0 %v484
    %1869 = vmatpush.bf16.msra.mxu0 %v480
    %1870 = vmatpush.bf16.msra.mxu0 %v476
    %1871 = vmatpush.bf16.msra.mxu0 %v472
    %1872 = vmatpush.bf16.msra.mxu0 %v468
    %1873 = vmatpush.bf16.msra.mxu0 %v464
    %1874 = vmatmul.bf16.gmra.mxu0 %v1738
    %v1875 = vpop.f32.mrf.mxu0
    %v1876 = vadd.f32 0.0, %v1875
    %v1877 = vpop.f32.mrf.mxu0
    %1878 = vdwg.mxu0
    %1879 = vmatpush.bf16.msra.mxu0 %v493
    %1880 = vmatpush.bf16.msra.mxu0 %v489
    %1881 = vmatpush.bf16.msra.mxu0 %v485
    %1882 = vmatpush.bf16.msra.mxu0 %v481
    %1883 = vmatpush.bf16.msra.mxu0 %v477
    %1884 = vmatpush.bf16.msra.mxu0 %v473
    %1885 = vmatpush.bf16.msra.mxu0 %v469
    %1886 = vmatpush.bf16.msra.mxu0 %v465
    %1887 = vmatmul.bf16.gmra.mxu0 %v1738
    %v1888 = vpop.f32.mrf.mxu0
    %v1889 = vadd.f32 0.0, %v1888
    %v1890 = vpop.f32.mrf.mxu0
    %1891 = vdwg.mxu0
    %1892 = vmatpush.bf16.msra.mxu0 %v494
    %1893 = vmatpush.bf16.msra.mxu0 %v490
    %1894 = vmatpush.bf16.msra.mxu0 %v486
    %1895 = vmatpush.bf16.msra.mxu0 %v482
    %1896 = vmatpush.bf16.msra.mxu0 %v478
    %1897 = vmatpush.bf16.msra.mxu0 %v474
    %1898 = vmatpush.bf16.msra.mxu0 %v470
    %1899 = vmatpush.bf16.msra.mxu0 %v466
    %1900 = vmatmul.bf16.gmra.mxu0 %v1738
    %v1901 = vpop.f32.mrf.mxu0
    %v1902 = vadd.f32 0.0, %v1901
    %v1903 = vpop.f32.mrf.mxu0
    %1904 = vdwg.mxu0
    %1905 = vmatpush.bf16.msra.mxu0 %v495
    %1906 = vmatpush.bf16.msra.mxu0 %v491
    %1907 = vmatpush.bf16.msra.mxu0 %v487
    %1908 = vmatpush.bf16.msra.mxu0 %v483
    %1909 = vmatpush.bf16.msra.mxu0 %v479
    %1910 = vmatpush.bf16.msra.mxu0 %v475
    %1911 = vmatpush.bf16.msra.mxu0 %v471
    %1912 = vmatpush.bf16.msra.mxu0 %v467
    %1913 = vmatmul.bf16.gmra.mxu0 %v1738
    %v1914 = vpop.f32.mrf.mxu0
    %v1915 = vadd.f32 0.0, %v1914
    %v1916 = vpop.f32.mrf.mxu0
    %1917 = vdwg.mxu0
    %v1918 = vadd.f32 %v177, %v1876
    %v1919 = vadd.f32 %v206, %v1889
    %v1920 = vadd.f32 %v235, %v1902
    %v1921 = vadd.f32 %v264, %v1915
    %v1922 = vmul.f32 %v1918, 0.5
    %v1923 = vtanh.pop %v1922
    %v1924 = vmul.f32 %v1923, 0.5
    %v1925 = vadd.f32 %v1924, 0.5
    %v1926 = vmul.f32 %v1919, 0.5
    %v1927 = vtanh.pop %v1926
    %v1928 = vmul.f32 %v1927, 0.5
    %v1929 = vadd.f32 %v1928, 0.5
    %v1930 = vtanh.pop %v1920
    %v1931 = vmul.f32 %v1921, 0.5
    %v1932 = vtanh.pop %v1931
    %v1933 = vmul.f32 %v1932, 0.5
    %v1934 = vadd.f32 %v1933, 0.5
    %v1935 = vmul.f32 %v1929, %v1735
    %v1936 = vmul.f32 %v1925, %v1930
    %v1937 = vadd.f32 %v1935, %v1936
    %v1938 = vtanh.pop %v1937
    %v1939 = vmul.f32 %v1934, %v1938
    %v1940 = vpack.c.bf16 %v1939, %v1939
    %1941 = vmatpush.bf16.msra.mxu0 %v736
    %1942 = vmatpush.bf16.msra.mxu0 %v732
    %1943 = vmatpush.bf16.msra.mxu0 %v728
    %1944 = vmatpush.bf16.msra.mxu0 %v724
    %1945 = vmatpush.bf16.msra.mxu0 %v720
    %1946 = vmatpush.bf16.msra.mxu0 %v716
    %1947 = vmatpush.bf16.msra.mxu0 %v712
    %1948 = vmatpush.bf16.msra.mxu0 %v708
    %1949 = vmatmul.bf16.gmra.mxu0 %v1940
    %v1950 = vpop.f32.mrf.mxu0
    %v1951 = vadd.f32 %v604, %v1950
    %v1952 = vpop.f32.mrf.mxu0
    %1953 = vdwg.mxu0
    %1954 = vmatpush.bf16.msra.mxu0 %v737
    %1955 = vmatpush.bf16.msra.mxu0 %v733
    %1956 = vmatpush.bf16.msra.mxu0 %v729
    %1957 = vmatpush.bf16.msra.mxu0 %v725
    %1958 = vmatpush.bf16.msra.mxu0 %v721
    %1959 = vmatpush.bf16.msra.mxu0 %v717
    %1960 = vmatpush.bf16.msra.mxu0 %v713
    %1961 = vmatpush.bf16.msra.mxu0 %v709
    %1962 = vmatmul.bf16.gmra.mxu0 %v1940
    %v1963 = vpop.f32.mrf.mxu0
    %v1964 = vadd.f32 %v605, %v1963
    %v1965 = vpop.f32.mrf.mxu0
    %1966 = vdwg.mxu0
    %1967 = vmatpush.bf16.msra.mxu0 %v738
    %1968 = vmatpush.bf16.msra.mxu0 %v734
    %1969 = vmatpush.bf16.msra.mxu0 %v730
    %1970 = vmatpush.bf16.msra.mxu0 %v726
    %1971 = vmatpush.bf16.msra.mxu0 %v722
    %1972 = vmatpush.bf16.msra.mxu0 %v718
    %1973 = vmatpush.bf16.msra.mxu0 %v714
    %1974 = vmatpush.bf16.msra.mxu0 %v710
    %1975 = vmatmul.bf16.gmra.mxu0 %v1940
    %v1976 = vpop.f32.mrf.mxu0
    %v1977 = vadd.f32 %v606, %v1976
    %v1978 = vpop.f32.mrf.mxu0
    %1979 = vdwg.mxu0
    %1980 = vmatpush.bf16.msra.mxu0 %v739
    %1981 = vmatpush.bf16.msra.mxu0 %v735
    %1982 = vmatpush.bf16.msra.mxu0 %v731
    %1983 = vmatpush.bf16.msra.mxu0 %v727
    %1984 = vmatpush.bf16.msra.mxu0 %v723
    %1985 = vmatpush.bf16.msra.mxu0 %v719
    %1986 = vmatpush.bf16.msra.mxu0 %v715
    %1987 = vmatpush.bf16.msra.mxu0 %v711
    %1988 = vmatmul.bf16.gmra.mxu0 %v1940
    %v1989 = vpop.f32.mrf.mxu0
    %v1990 = vadd.f32 %v607, %v1989
    %v1991 = vpop.f32.mrf.mxu0
    %1992 = vdwg.mxu0
    %v1993 = vpack.c.bf16 %v1865, %v1865
    %1994 = vmatpush.bf16.msra.mxu0 %v948
    %1995 = vmatpush.bf16.msra.mxu0 %v944
    %1996 = vmatpush.bf16.msra.mxu0 %v940
    %1997 = vmatpush.bf16.msra.mxu0 %v936
    %1998 = vmatpush.bf16.msra.mxu0 %v932
    %1999 = vmatpush.bf16.msra.mxu0 %v928
    %2000 = vmatpush.bf16.msra.mxu0 %v924
    %2001 = vmatpush.bf16.msra.mxu0 %v920
    %2002 = vmatmul.bf16.gmra.mxu0 %v1993
    %v2003 = vpop.f32.mrf.mxu0
    %v2004 = vadd.f32 0.0, %v2003
    %v2005 = vpop.f32.mrf.mxu0
    %2006 = vdwg.mxu0
    %2007 = vmatpush.bf16.msra.mxu0 %v949
    %2008 = vmatpush.bf16.msra.mxu0 %v945
    %2009 = vmatpush.bf16.msra.mxu0 %v941
    %2010 = vmatpush.bf16.msra.mxu0 %v937
    %2011 = vmatpush.bf16.msra.mxu0 %v933
    %2012 = vmatpush.bf16.msra.mxu0 %v929
    %2013 = vmatpush.bf16.msra.mxu0 %v925
    %2014 = vmatpush.bf16.msra.mxu0 %v921
    %2015 = vmatmul.bf16.gmra.mxu0 %v1993
    %v2016 = vpop.f32.mrf.mxu0
    %v2017 = vadd.f32 0.0, %v2016
    %v2018 = vpop.f32.mrf.mxu0
    %2019 = vdwg.mxu0
    %2020 = vmatpush.bf16.msra.mxu0 %v950
    %2021 = vmatpush.bf16.msra.mxu0 %v946
    %2022 = vmatpush.bf16.msra.mxu0 %v942
    %2023 = vmatpush.bf16.msra.mxu0 %v938
    %2024 = vmatpush.bf16.msra.mxu0 %v934
    %2025 = vmatpush.bf16.msra.mxu0 %v930
    %2026 = vmatpush.bf16.msra.mxu0 %v926
    %2027 = vmatpush.bf16.msra.mxu0 %v922
    %2028 = vmatmul.bf16.gmra.mxu0 %v1993
    %v2029 = vpop.f32.mrf.mxu0
    %v2030 = vadd.f32 0.0, %v2029
    %v2031 = vpop.f32.mrf.mxu0
    %2032 = vdwg.mxu0
    %2033 = vmatpush.bf16.msra.mxu0 %v951
    %2034 = vmatpush.bf16.msra.mxu0 %v947
    %2035 = vmatpush.bf16.msra.mxu0 %v943
    %2036 = vmatpush.bf16.msra.mxu0 %v939
    %2037 = vmatpush.bf16.msra.mxu0 %v935
    %2038 = vmatpush.bf16.msra.mxu0 %v931
    %2039 = vmatpush.bf16.msra.mxu0 %v927
    %2040 = vmatpush.bf16.msra.mxu0 %v923
    %2041 = vmatmul.bf16.gmra.mxu0 %v1993
    %v2042 = vpop.f32.mrf.mxu0
    %v2043 = vadd.f32 0.0, %v2042
    %v2044 = vpop.f32.mrf.mxu0
    %2045 = vdwg.mxu0
    %v2046 = vadd.f32 %v1951, %v2004
    %v2047 = vadd.f32 %v1964, %v2017
    %v2048 = vadd.f32 %v1977, %v2030
    %v2049 = vadd.f32 %v1990, %v2043
    %v2050 = vmul.f32 %v2046, 0.5
    %v2051 = vtanh.pop %v2050
    %v2052 = vmul.f32 %v2051, 0.5
    %v2053 = vadd.f32 %v2052, 0.5
    %v2054 = vmul.f32 %v2047, 0.5
    %v2055 = vtanh.pop %v2054
    %v2056 = vmul.f32 %v2055, 0.5
    %v2057 = vadd.f32 %v2056, 0.5
    %v2058 = vtanh.pop %v2048
    %v2059 = vmul.f32 %v2049, 0.5
    %v2060 = vtanh.pop %v2059
    %v2061 = vmul.f32 %v2060, 0.5
    %v2062 = vadd.f32 %v2061, 0.5
    %v2063 = vmul.f32 %v2057, %v1863
    %v2064 = vmul.f32 %v2053, %v2058
    %v2065 = vadd.f32 %v2063, %v2064
    %v2066 = vtanh.pop %v2065
    %v2067 = vmul.f32 %v2062, %v2066
    %2068 = vmatpush.bf16.msra.mxu0 %v492
    %2069 = vmatpush.bf16.msra.mxu0 %v488
    %2070 = vmatpush.bf16.msra.mxu0 %v484
    %2071 = vmatpush.bf16.msra.mxu0 %v480
    %2072 = vmatpush.bf16.msra.mxu0 %v476
    %2073 = vmatpush.bf16.msra.mxu0 %v472
    %2074 = vmatpush.bf16.msra.mxu0 %v468
    %2075 = vmatpush.bf16.msra.mxu0 %v464
    %2076 = vmatmul.bf16.gmra.mxu0 %v1940
    %v2077 = vpop.f32.mrf.mxu0
    %v2078 = vadd.f32 0.0, %v2077
    %v2079 = vpop.f32.mrf.mxu0
    %2080 = vdwg.mxu0
    %2081 = vmatpush.bf16.msra.mxu0 %v493
    %2082 = vmatpush.bf16.msra.mxu0 %v489
    %2083 = vmatpush.bf16.msra.mxu0 %v485
    %2084 = vmatpush.bf16.msra.mxu0 %v481
    %2085 = vmatpush.bf16.msra.mxu0 %v477
    %2086 = vmatpush.bf16.msra.mxu0 %v473
    %2087 = vmatpush.bf16.msra.mxu0 %v469
    %2088 = vmatpush.bf16.msra.mxu0 %v465
    %2089 = vmatmul.bf16.gmra.mxu0 %v1940
    %v2090 = vpop.f32.mrf.mxu0
    %v2091 = vadd.f32 0.0, %v2090
    %v2092 = vpop.f32.mrf.mxu0
    %2093 = vdwg.mxu0
    %2094 = vmatpush.bf16.msra.mxu0 %v494
    %2095 = vmatpush.bf16.msra.mxu0 %v490
    %2096 = vmatpush.bf16.msra.mxu0 %v486
    %2097 = vmatpush.bf16.msra.mxu0 %v482
    %2098 = vmatpush.bf16.msra.mxu0 %v478
    %2099 = vmatpush.bf16.msra.mxu0 %v474
    %2100 = vmatpush.bf16.msra.mxu0 %v470
    %2101 = vmatpush.bf16.msra.mxu0 %v466
    %2102 = vmatmul.bf16.gmra.mxu0 %v1940
    %v2103 = vpop.f32.mrf.mxu0
    %v2104 = vadd.f32 0.0, %v2103
    %v2105 = vpop.f32.mrf.mxu0
    %2106 = vdwg.mxu0
    %2107 = vmatpush.bf16.msra.mxu0 %v495
    %2108 = vmatpush.bf16.msra.mxu0 %v491
    %2109 = vmatpush.bf16.msra.mxu0 %v487
    %2110 = vmatpush.bf16.msra.mxu0 %v483
    %2111 = vmatpush.bf16.msra.mxu0 %v479
    %2112 = vmatpush.bf16.msra.mxu0 %v475
    %2113 = vmatpush.bf16.msra.mxu0 %v471
    %2114 = vmatpush.bf16.msra.mxu0 %v467
    %2115 = vmatmul.bf16.gmra.mxu0 %v1940
    %v2116 = vpop.f32.mrf.mxu0
    %v2117 = vadd.f32 0.0, %v2116
    %v2118 = vpop.f32.mrf.mxu0
    %2119 = vdwg.mxu0
    %v2120 = vadd.f32 %v180, %v2078
    %v2121 = vadd.f32 %v209, %v2091
    %v2122 = vadd.f32 %v238, %v2104
    %v2123 = vadd.f32 %v267, %v2117
    %v2124 = vmul.f32 %v2120, 0.5
    %v2125 = vtanh.pop %v2124
    %v2126 = vmul.f32 %v2125, 0.5
    %v2127 = vadd.f32 %v2126, 0.5
    %v2128 = vmul.f32 %v2121, 0.5
    %v2129 = vtanh.pop %v2128
    %v2130 = vmul.f32 %v2129, 0.5
    %v2131 = vadd.f32 %v2130, 0.5
    %v2132 = vtanh.pop %v2122
    %v2133 = vmul.f32 %v2123, 0.5
    %v2134 = vtanh.pop %v2133
    %v2135 = vmul.f32 %v2134, 0.5
    %v2136 = vadd.f32 %v2135, 0.5
    %v2137 = vmul.f32 %v2131, %v1937
    %v2138 = vmul.f32 %v2127, %v2132
    %v2139 = vadd.f32 %v2137, %v2138
    %v2140 = vtanh.pop %v2139
    %v2141 = vmul.f32 %v2136, %v2140
    %v2142 = vpack.c.bf16 %v2141, %v2141
    %2143 = vmatpush.bf16.msra.mxu0 %v736
    %2144 = vmatpush.bf16.msra.mxu0 %v732
    %2145 = vmatpush.bf16.msra.mxu0 %v728
    %2146 = vmatpush.bf16.msra.mxu0 %v724
    %2147 = vmatpush.bf16.msra.mxu0 %v720
    %2148 = vmatpush.bf16.msra.mxu0 %v716
    %2149 = vmatpush.bf16.msra.mxu0 %v712
    %2150 = vmatpush.bf16.msra.mxu0 %v708
    %2151 = vmatmul.bf16.gmra.mxu0 %v2142
    %v2152 = vpop.f32.mrf.mxu0
    %v2153 = vadd.f32 %v604, %v2152
    %v2154 = vpop.f32.mrf.mxu0
    %2155 = vdwg.mxu0
    %2156 = vmatpush.bf16.msra.mxu0 %v737
    %2157 = vmatpush.bf16.msra.mxu0 %v733
    %2158 = vmatpush.bf16.msra.mxu0 %v729
    %2159 = vmatpush.bf16.msra.mxu0 %v725
    %2160 = vmatpush.bf16.msra.mxu0 %v721
    %2161 = vmatpush.bf16.msra.mxu0 %v717
    %2162 = vmatpush.bf16.msra.mxu0 %v713
    %2163 = vmatpush.bf16.msra.mxu0 %v709
    %2164 = vmatmul.bf16.gmra.mxu0 %v2142
    %v2165 = vpop.f32.mrf.mxu0
    %v2166 = vadd.f32 %v605, %v2165
    %v2167 = vpop.f32.mrf.mxu0
    %2168 = vdwg.mxu0
    %2169 = vmatpush.bf16.msra.mxu0 %v738
    %2170 = vmatpush.bf16.msra.mxu0 %v734
    %2171 = vmatpush.bf16.msra.mxu0 %v730
    %2172 = vmatpush.bf16.msra.mxu0 %v726
    %2173 = vmatpush.bf16.msra.mxu0 %v722
    %2174 = vmatpush.bf16.msra.mxu0 %v718
    %2175 = vmatpush.bf16.msra.mxu0 %v714
    %2176 = vmatpush.bf16.msra.mxu0 %v710
    %2177 = vmatmul.bf16.gmra.mxu0 %v2142
    %v2178 = vpop.f32.mrf.mxu0
    %v2179 = vadd.f32 %v606, %v2178
    %v2180 = vpop.f32.mrf.mxu0
    %2181 = vdwg.mxu0
    %2182 = vmatpush.bf16.msra.mxu0 %v739
    %2183 = vmatpush.bf16.msra.mxu0 %v735
    %2184 = vmatpush.bf16.msra.mxu0 %v731
    %2185 = vmatpush.bf16.msra.mxu0 %v727
    %2186 = vmatpush.bf16.msra.mxu0 %v723
    %2187 = vmatpush.bf16.msra.mxu0 %v719
    %2188 = vmatpush.bf16.msra.mxu0 %v715
    %2189 = vmatpush.bf16.msra.mxu0 %v711
    %2190 = vmatmul.bf16.gmra.mxu0 %v2142
    %v2191 = vpop.f32.mrf.mxu0
    %v2192 = vadd.f32 %v607, %v2191
    %v2193 = vpop.f32.mrf.mxu0
    %2194 = vdwg.mxu0
    %v2195 = vpack.c.bf16 %v2067, %v2067
    %2196 = vmatpush.bf16.msra.mxu0 %v948
    %2197 = vmatpush.bf16.msra.mxu0 %v944
    %2198 = vmatpush.bf16.msra.mxu0 %v940
    %2199 = vmatpush.bf16.msra.mxu0 %v936
    %2200 = vmatpush.bf16.msra.mxu0 %v932
    %2201 = vmatpush.bf16.msra.mxu0 %v928
    %2202 = vmatpush.bf16.msra.mxu0 %v924
    %2203 = vmatpush.bf16.msra.mxu0 %v920
    %2204 = vmatmul.bf16.gmra.mxu0 %v2195
    %v2205 = vpop.f32.mrf.mxu0
    %v2206 = vadd.f32 0.0, %v2205
    %v2207 = vpop.f32.mrf.mxu0
    %2208 = vdwg.mxu0
    %2209 = vmatpush.bf16.msra.mxu0 %v949
    %2210 = vmatpush.bf16.msra.mxu0 %v945
    %2211 = vmatpush.bf16.msra.mxu0 %v941
    %2212 = vmatpush.bf16.msra.mxu0 %v937
    %2213 = vmatpush.bf16.msra.mxu0 %v933
    %2214 = vmatpush.bf16.msra.mxu0 %v929
    %2215 = vmatpush.bf16.msra.mxu0 %v925
    %2216 = vmatpush.bf16.msra.mxu0 %v921
    %2217 = vmatmul.bf16.gmra.mxu0 %v2195
    %v2218 = vpop.f32.mrf.mxu0
    %v2219 = vadd.f32 0.0, %v2218
    %v2220 = vpop.f32.mrf.mxu0
    %2221 = vdwg.mxu0
    %2222 = vmatpush.bf16.msra.mxu0 %v950
    %2223 = vmatpush.bf16.msra.mxu0 %v946
    %2224 = vmatpush.bf16.msra.mxu0 %v942
    %2225 = vmatpush.bf16.msra.mxu0 %v938
    %2226 = vmatpush.bf16.msra.mxu0 %v934
    %2227 = vmatpush.bf16.msra.mxu0 %v930
    %2228 = vmatpush.bf16.msra.mxu0 %v926
    %2229 = vmatpush.bf16.msra.mxu0 %v922
    %2230 = vmatmul.bf16.gmra.mxu0 %v2195
    %v2231 = vpop.f32.mrf.mxu0
    %v2232 = vadd.f32 0.0, %v2231
    %v2233 = vpop.f32.mrf.mxu0
    %2234 = vdwg.mxu0
    %2235 = vmatpush.bf16.msra.mxu0 %v951
    %2236 = vmatpush.bf16.msra.mxu0 %v947
    %2237 = vmatpush.bf16.msra.mxu0 %v943
    %2238 = vmatpush.bf16.msra.mxu0 %v939
    %2239 = vmatpush.bf16.msra.mxu0 %v935
    %2240 = vmatpush.bf16.msra.mxu0 %v931
    %2241 = vmatpush.bf16.msra.mxu0 %v927
    %2242 = vmatpush.bf16.msra.mxu0 %v923
    %2243 = vmatmul.bf16.gmra.mxu0 %v2195
    %v2244 = vpop.f32.mrf.mxu0
    %v2245 = vadd.f32 0.0, %v2244
    %v2246 = vpop.f32.mrf.mxu0
    %2247 = vdwg.mxu0
    %v2248 = vadd.f32 %v2153, %v2206
    %v2249 = vadd.f32 %v2166, %v2219
    %v2250 = vadd.f32 %v2179, %v2232
    %v2251 = vadd.f32 %v2192, %v2245
    %v2252 = vmul.f32 %v2248, 0.5
    %v2253 = vtanh.pop %v2252
    %v2254 = vmul.f32 %v2253, 0.5
    %v2255 = vadd.f32 %v2254, 0.5
    %v2256 = vmul.f32 %v2249, 0.5
    %v2257 = vtanh.pop %v2256
    %v2258 = vmul.f32 %v2257, 0.5
    %v2259 = vadd.f32 %v2258, 0.5
    %v2260 = vtanh.pop %v2250
    %v2261 = vmul.f32 %v2251, 0.5
    %v2262 = vtanh.pop %v2261
    %v2263 = vmul.f32 %v2262, 0.5
    %v2264 = vadd.f32 %v2263, 0.5
    %v2265 = vmul.f32 %v2259, %v2065
    %v2266 = vmul.f32 %v2255, %v2260
    %v2267 = vadd.f32 %v2265, %v2266
    %v2268 = vtanh.pop %v2267
    %v2269 = vmul.f32 %v2264, %v2268
    %2270 = vmatpush.bf16.msra.mxu0 %v492
    %2271 = vmatpush.bf16.msra.mxu0 %v488
    %2272 = vmatpush.bf16.msra.mxu0 %v484
    %2273 = vmatpush.bf16.msra.mxu0 %v480
    %2274 = vmatpush.bf16.msra.mxu0 %v476
    %2275 = vmatpush.bf16.msra.mxu0 %v472
    %2276 = vmatpush.bf16.msra.mxu0 %v468
    %2277 = vmatpush.bf16.msra.mxu0 %v464
    %2278 = vmatmul.bf16.gmra.mxu0 %v2142
    %v2279 = vpop.f32.mrf.mxu0
    %v2280 = vadd.f32 0.0, %v2279
    %v2281 = vpop.f32.mrf.mxu0
    %2282 = vdwg.mxu0
    %2283 = vmatpush.bf16.msra.mxu0 %v493
    %2284 = vmatpush.bf16.msra.mxu0 %v489
    %2285 = vmatpush.bf16.msra.mxu0 %v485
    %2286 = vmatpush.bf16.msra.mxu0 %v481
    %2287 = vmatpush.bf16.msra.mxu0 %v477
    %2288 = vmatpush.bf16.msra.mxu0 %v473
    %2289 = vmatpush.bf16.msra.mxu0 %v469
    %2290 = vmatpush.bf16.msra.mxu0 %v465
    %2291 = vmatmul.bf16.gmra.mxu0 %v2142
    %v2292 = vpop.f32.mrf.mxu0
    %v2293 = vadd.f32 0.0, %v2292
    %v2294 = vpop.f32.mrf.mxu0
    %2295 = vdwg.mxu0
    %2296 = vmatpush.bf16.msra.mxu0 %v494
    %2297 = vmatpush.bf16.msra.mxu0 %v490
    %2298 = vmatpush.bf16.msra.mxu0 %v486
    %2299 = vmatpush.bf16.msra.mxu0 %v482
    %2300 = vmatpush.bf16.msra.mxu0 %v478
    %2301 = vmatpush.bf16.msra.mxu0 %v474
    %2302 = vmatpush.bf16.msra.mxu0 %v470
    %2303 = vmatpush.bf16.msra.mxu0 %v466
    %2304 = vmatmul.bf16.gmra.mxu0 %v2142
    %v2305 = vpop.f32.mrf.mxu0
    %v2306 = vadd.f32 0.0, %v2305
    %v2307 = vpop.f32.mrf.mxu0
    %2308 = vdwg.mxu0
    %2309 = vmatpush.bf16.msra.mxu0 %v495
    %2310 = vmatpush.bf16.msra.mxu0 %v491
    %2311 = vmatpush.bf16.msra.mxu0 %v487
    %2312 = vmatpush.bf16.msra.mxu0 %v483
    %2313 = vmatpush.bf16.msra.mxu0 %v479
    %2314 = vmatpush.bf16.msra.mxu0 %v475
    %2315 = vmatpush.bf16.msra.mxu0 %v471
    %2316 = vmatpush.bf16.msra.mxu0 %v467
    %2317 = vmatmul.bf16.gmra.mxu0 %v2142
    %v2318 = vpop.f32.mrf.mxu0
    %v2319 = vadd.f32 0.0, %v2318
    %v2320 = vpop.f32.mrf.mxu0
    %2321 = vdwg.mxu0
    %v2322 = vadd.f32 %v182, %v2280
    %v2323 = vadd.f32 %v211, %v2293
    %v2324 = vadd.f32 %v240, %v2306
    %v2325 = vadd.f32 %v269, %v2319
    %v2326 = vmul.f32 %v2322, 0.5
    %v2327 = vtanh.pop %v2326
    %v2328 = vmul.f32 %v2327, 0.5
    %v2329 = vadd.f32 %v2328, 0.5
    %v2330 = vmul.f32 %v2323, 0.5
    %v2331 = vtanh.pop %v2330
    %v2332 = vmul.f32 %v2331, 0.5
    %v2333 = vadd.f32 %v2332, 0.5
    %v2334 = vtanh.pop %v2324
    %v2335 = vmul.f32 %v2325, 0.5
    %v2336 = vtanh.pop %v2335
    %v2337 = vmul.f32 %v2336, 0.5
    %v2338 = vadd.f32 %v2337, 0.5
    %v2339 = vmul.f32 %v2333, %v2139
    %v2340 = vmul.f32 %v2329, %v2334
    %v2341 = vadd.f32 %v2339, %v2340
    %v2342 = vtanh.pop %v2341
    %v2343 = vmul.f32 %v2338, %v2342
    %v2344 = vpack.c.bf16 %v2343, %v2343
    %2345 = vmatpush.bf16.msra.mxu0 %v736
    %2346 = vmatpush.bf16.msra.mxu0 %v732
    %2347 = vmatpush.bf16.msra.mxu0 %v728
    %2348 = vmatpush.bf16.msra.mxu0 %v724
    %2349 = vmatpush.bf16.msra.mxu0 %v720
    %2350 = vmatpush.bf16.msra.mxu0 %v716
    %2351 = vmatpush.bf16.msra.mxu0 %v712
    %2352 = vmatpush.bf16.msra.mxu0 %v708
    %2353 = vmatmul.bf16.gmra.mxu0 %v2344
    %v2354 = vpop.f32.mrf.mxu0
    %v2355 = vadd.f32 %v604, %v2354
    %v2356 = vpop.f32.mrf.mxu0
    %2357 = vdwg.mxu0
    %2358 = vmatpush.bf16.msra.mxu0 %v737
    %2359 = vmatpush.bf16.msra.mxu0 %v733
    %2360 = vmatpush.bf16.msra.mxu0 %v729
    %2361 = vmatpush.bf16.msra.mxu0 %v725
    %2362 = vmatpush.bf16.msra.mxu0 %v721
    %2363 = vmatpush.bf16.msra.mxu0 %v717
    %2364 = vmatpush.bf16.msra.mxu0 %v713
    %2365 = vmatpush.bf16.msra.mxu0 %v709
    %2366 = vmatmul.bf16.gmra.mxu0 %v2344
    %v2367 = vpop.f32.mrf.mxu0
    %v2368 = vadd.f32 %v605, %v2367
    %v2369 = vpop.f32.mrf.mxu0
    %2370 = vdwg.mxu0
    %2371 = vmatpush.bf16.msra.mxu0 %v738
    %2372 = vmatpush.bf16.msra.mxu0 %v734
    %2373 = vmatpush.bf16.msra.mxu0 %v730
    %2374 = vmatpush.bf16.msra.mxu0 %v726
    %2375 = vmatpush.bf16.msra.mxu0 %v722
    %2376 = vmatpush.bf16.msra.mxu0 %v718
    %2377 = vmatpush.bf16.msra.mxu0 %v714
    %2378 = vmatpush.bf16.msra.mxu0 %v710
    %2379 = vmatmul.bf16.gmra.mxu0 %v2344
    %v2380 = vpop.f32.mrf.mxu0
    %v2381 = vadd.f32 %v606, %v2380
    %v2382 = vpop.f32.mrf.mxu0
    %2383 = vdwg.mxu0
    %2384 = vmatpush.bf16.msra.mxu0 %v739
    %2385 = vmatpush.bf16.msra.mxu0 %v735
    %2386 = vmatpush.bf16.msra.mxu0 %v731
    %2387 = vmatpush.bf16.msra.mxu0 %v727
    %2388 = vmatpush.bf16.msra.mxu0 %v723
    %2389 = vmatpush.bf16.msra.mxu0 %v719
    %2390 = vmatpush.bf16.msra.mxu0 %v715
    %2391 = vmatpush.bf16.msra.mxu0 %v711
    %2392 = vmatmul.bf16.gmra.mxu0 %v2344
    %v2393 = vpop.f32.mrf.mxu0
    %v2394 = vadd.f32 %v607, %v2393
    %v2395 = vpop.f32.mrf.mxu0
    %2396 = vdwg.mxu0
    %v2397 = vpack.c.bf16 %v2269, %v2269
    %2398 = vmatpush.bf16.msra.mxu0 %v948
    %2399 = vmatpush.bf16.msra.mxu0 %v944
    %2400 = vmatpush.bf16.msra.mxu0 %v940
    %2401 = vmatpush.bf16.msra.mxu0 %v936
    %2402 = vmatpush.bf16.msra.mxu0 %v932
    %2403 = vmatpush.bf16.msra.mxu0 %v928
    %2404 = vmatpush.bf16.msra.mxu0 %v924
    %2405 = vmatpush.bf16.msra.mxu0 %v920
    %2406 = vmatmul.bf16.gmra.mxu0 %v2397
    %v2407 = vpop.f32.mrf.mxu0
    %v2408 = vadd.f32 0.0, %v2407
    %v2409 = vpop.f32.mrf.mxu0
    %2410 = vdwg.mxu0
    %2411 = vmatpush.bf16.msra.mxu0 %v949
    %2412 = vmatpush.bf16.msra.mxu0 %v945
    %2413 = vmatpush.bf16.msra.mxu0 %v941
    %2414 = vmatpush.bf16.msra.mxu0 %v937
    %2415 = vmatpush.bf16.msra.mxu0 %v933
    %2416 = vmatpush.bf16.msra.mxu0 %v929
    %2417 = vmatpush.bf16.msra.mxu0 %v925
    %2418 = vmatpush.bf16.msra.mxu0 %v921
    %2419 = vmatmul.bf16.gmra.mxu0 %v2397
    %v2420 = vpop.f32.mrf.mxu0
    %v2421 = vadd.f32 0.0, %v2420
    %v2422 = vpop.f32.mrf.mxu0
    %2423 = vdwg.mxu0
    %2424 = vmatpush.bf16.msra.mxu0 %v950
    %2425 = vmatpush.bf16.msra.mxu0 %v946
    %2426 = vmatpush.bf16.msra.mxu0 %v942
    %2427 = vmatpush.bf16.msra.mxu0 %v938
    %2428 = vmatpush.bf16.msra.mxu0 %v934
    %2429 = vmatpush.bf16.msra.mxu0 %v930
    %2430 = vmatpush.bf16.msra.mxu0 %v926
    %2431 = vmatpush.bf16.msra.mxu0 %v922
    %2432 = vmatmul.bf16.gmra.mxu0 %v2397
    %v2433 = vpop.f32.mrf.mxu0
    %v2434 = vadd.f32 0.0, %v2433
    %v2435 = vpop.f32.mrf.mxu0
    %2436 = vdwg.mxu0
    %2437 = vmatpush.bf16.msra.mxu0 %v951
    %2438 = vmatpush.bf16.msra.mxu0 %v947
    %2439 = vmatpush.bf16.msra.mxu0 %v943
    %2440 = vmatpush.bf16.msra.mxu0 %v939
    %2441 = vmatpush.bf16.msra.mxu0 %v935
    %2442 = vmatpush.bf16.msra.mxu0 %v931
    %2443 = vmatpush.bf16.msra.mxu0 %v927
    %2444 = vmatpush.bf16.msra.mxu0 %v923
    %2445 = vmatmul.bf16.gmra.mxu0 %v2397
    %v2446 = vpop.f32.mrf.mxu0
    %v2447 = vadd.f32 0.0, %v2446
    %v2448 = vpop.f32.mrf.mxu0
    %2449 = vdwg.mxu0
    %v2450 = vadd.f32 %v2355, %v2408
    %v2451 = vadd.f32 %v2368, %v2421
    %v2452 = vadd.f32 %v2381, %v2434
    %v2453 = vadd.f32 %v2394, %v2447
    %v2454 = vmul.f32 %v2450, 0.5
    %v2455 = vtanh.pop %v2454
    %v2456 = vmul.f32 %v2455, 0.5
    %v2457 = vadd.f32 %v2456, 0.5
    %v2458 = vmul.f32 %v2451, 0.5
    %v2459 = vtanh.pop %v2458
    %v2460 = vmul.f32 %v2459, 0.5
    %v2461 = vadd.f32 %v2460, 0.5
    %v2462 = vtanh.pop %v2452
    %v2463 = vmul.f32 %v2453, 0.5
    %v2464 = vtanh.pop %v2463
    %v2465 = vmul.f32 %v2464, 0.5
    %v2466 = vadd.f32 %v2465, 0.5
    %v2467 = vmul.f32 %v2461, %v2267
    %v2468 = vmul.f32 %v2457, %v2462
    %v2469 = vadd.f32 %v2467, %v2468
    %v2470 = vtanh.pop %v2469
    %v2471 = vmul.f32 %v2466, %v2470
    %v2472 = vpack.c.bf16 %v2471, %v2471
    %v2473 = vld [vmem:[%s7] sm:$0xf]
    %v2474 = vld [vmem:[%s7 + $0x4] sm:$0xf]
    %v2475 = vld [vmem:[%s7 + $0x8] sm:$0xf]
    %v2476 = vld [vmem:[%s7 + $0xc] sm:$0xf]
    %v2477 = vld [vmem:[%s7 + $0x10] sm:$0xf]
    %v2478 = vld [vmem:[%s7 + $0x14] sm:$0xf]
    %v2479 = vld [vmem:[%s7 + $0x18] sm:$0xf]
    %v2480 = vld [vmem:[%s7 + $0x1c] sm:$0xf]
    %v2481 = vld [vmem:[%s7 + $0x20] sm:$0xf]
    %v2482 = vld [vmem:[%s7 + $0x24] sm:$0xf]
    %v2483 = vld [vmem:[%s7 + $0x28] sm:$0xf]
    %v2484 = vld [vmem:[%s7 + $0x2c] sm:$0xf]
    %v2485 = vld [vmem:[%s7 + $0x30] sm:$0xf]
    %v2486 = vld [vmem:[%s7 + $0x34] sm:$0xf]
    %v2487 = vld [vmem:[%s7 + $0x38] sm:$0xf]
    %v2488 = vld [vmem:[%s7 + $0x3c] sm:$0xf]
    %v2489 = vld [vmem:[%s8] sm:$0x1]
    %v2491 = vperm.slane %v2489, 0
    %v2509 = vunpack.c.l.b16 %v2473
    %v2510 = vunpack.c.l.b16 %v2474
    %v2511 = vunpack.c.l.b16 %v2475
    %v2512 = vunpack.c.l.b16 %v2476
    %v2513 = vunpack.c.l.b16 %v2477
    %v2514 = vunpack.c.l.b16 %v2478
    %v2515 = vunpack.c.l.b16 %v2479
    %v2516 = vunpack.c.l.b16 %v2480
    %v2517 = vunpack.c.l.b16 %v2481
    %v2518 = vunpack.c.l.b16 %v2482
    %v2519 = vunpack.c.l.b16 %v2483
    %v2520 = vunpack.c.l.b16 %v2484
    %v2521 = vunpack.c.l.b16 %v2485
    %v2522 = vunpack.c.l.b16 %v2486
    %v2523 = vunpack.c.l.b16 %v2487
    %v2524 = vunpack.c.l.b16 %v2488
    %v2525 = vpack.c.b16 %v2510, %v2509
    %v2526 = vpack.c.b16 %v2512, %v2511
    %v2527 = vpack.c.b16 %v2514, %v2513
    %v2528 = vpack.c.b16 %v2516, %v2515
    %v2529 = vpack.c.b16 %v2518, %v2517
    %v2530 = vpack.c.b16 %v2520, %v2519
    %v2531 = vpack.c.b16 %v2522, %v2521
    %v2532 = vpack.c.b16 %v2524, %v2523
    %2541 = vmatpush.bf16.msra.mxu0 %v2532
    %2542 = vmatpush.bf16.msra.mxu0 %v2531
    %2543 = vmatpush.bf16.msra.mxu0 %v2530
    %2544 = vmatpush.bf16.msra.mxu0 %v2529
    %2545 = vmatpush.bf16.msra.mxu0 %v2528
    %2546 = vmatpush.bf16.msra.mxu0 %v2527
    %2547 = vmatpush.bf16.msra.mxu0 %v2526
    %2548 = vmatpush.bf16.msra.mxu0 %v2525
    %2549 = vmatmul.bf16.gmra.mxu0 %v2472
    %v2550 = vpop.f32.mrf.mxu0
    %v2551 = vadd.f32 %v2491, %v2550
    %v2552 = vpop.f32.mrf.mxu0
    %2553 = vdwg.mxu0
    %vm2554 = vcmask 31744
    %2555 = vst.msk [vmem:[%s9] sm:$0xff] %vm2554, %v2551
    // Predicated region
    $region50: #{lstm_model_forward.1} parent=1 // pred_check
      _
    $region51: #{lstm_model_forward.1} parent=1 // pred_check_branch
      %2557 = sbr.rel (0) target = $region53
    $region52: #{lstm_model_forward.1} parent=1 // pred_region
      _
    $region53: #{lstm_model_forward.1} parent=1 // pred_fallthru
      _
    // Predicated region
    $region54: #{lstm_model_forward.1} parent=1 // pred_check
      _
    $region55: #{lstm_model_forward.1} parent=1 // pred_check_branch
      %2559 = sbr.rel (0) target = $region57
    $region56: #{lstm_model_forward.1} parent=1 // pred_region
      _
    $region57: #{lstm_model_forward.1} parent=1 // pred_fallthru
      _
    %2560 = vsyncpa [#allocation3], 1
    %2561 = vsyncpa [#allocation5], 1

</llo_original>
